<compile_context>
chip_gen: v7x
topology: tpu7x:2x2x1
jax: 0.10.0
libtpu: 0.0.40
codegen_flags: <defaults>
</compile_context>

<pallas_src>
import functools

import jax
import jax.numpy as jnp
from jax.experimental import pallas as pl
from jax.experimental.pallas import tpu as pltpu

# ---------------- scaled-down bert-base config -------------------------------
VOCAB = 100
TYPE_VOCAB = 2
MAX_POS = 16
HIDDEN = 32            # stands in for bert_dim=768
N_HEADS = 4
HEAD_DIM = HIDDEN // N_HEADS
INTERMEDIATE = 64      # stands in for 3072
N_LAYERS = 2           # stands in for 12
OUTPUT_DIM = 4
LOGITS_PAD = 128       # lane-dense padded width for the classifier output
LN_EPS = 1e-12


# ================================ kernels ====================================
def _ln_kernel(x_ref, g_ref, b_ref, o_ref, *, eps):
    """Plain LayerNorm over the last axis (embedding LN; f32 math, bf16 store)."""
    x = x_ref[...].astype(jnp.float32)
    mu = jnp.mean(x, axis=-1, keepdims=True)
    var = jnp.mean((x - mu) ** 2, axis=-1, keepdims=True)
    y = (x - mu) * jax.lax.rsqrt(var + eps) * g_ref[...] + b_ref[...]
    o_ref[...] = y.astype(o_ref.dtype)


def _encoder_layer_kernel(x_ref, m_ref,
                          wq_ref, bq_ref, wk_ref, bk_ref, wv_ref, bv_ref,
                          wo_ref, bo_ref, g1_ref, be1_ref,
                          w1_ref, b1_ref, w2_ref, b2_ref, g2_ref, be2_ref,
                          o_ref, *, eps):
    """One full transformer encoder layer for one batch element (grid=(B,)).

    Weights are head-major (leading-axis indexed -> whole-tile operands, no lane
    slicing) and stay resident in VMEM across grid steps (index_map is constant).
    """
    S, H = x_ref.shape[1], x_ref.shape[2]
    n_heads = wq_ref.shape[0]

    x = x_ref[0].astype(jnp.float32)          # (S, H) residual path in f32
    xb = x.astype(jnp.bfloat16)                # MXU operand
    m = m_ref[0]                               # (1, S) additive key mask (broadcast over rows)

    # --- multi-head self-attention; contexts folded into the out-projection ---
    attn = jnp.zeros((S, H), jnp.float32)
    for hd in range(n_heads):
        # 1/sqrt(head_dim) is folded into wq/bq at init (no per-score scale mul).
        q = jnp.dot(xb, wq_ref[hd], preferred_element_type=jnp.float32) + bq_ref[hd]
        k = jnp.dot(xb, wk_ref[hd], preferred_element_type=jnp.float32) + bk_ref[hd]
        v = jnp.dot(xb, wv_ref[hd], preferred_element_type=jnp.float32) + bv_ref[hd]
        # contract last dims directly (no explicit K transpose through the XLU)
        s = jax.lax.dot_general(q.astype(jnp.bfloat16), k.astype(jnp.bfloat16),
                                (((1,), (1,)), ((), ())),
                                preferred_element_type=jnp.float32) + m
        s = s - jnp.max(s, axis=-1, keepdims=True)
        p = jnp.exp(s)
        p = p * pl.reciprocal(jnp.sum(p, axis=-1, keepdims=True), approx=True)
        ctx = jnp.dot(p.astype(jnp.bfloat16), v.astype(jnp.bfloat16),
                      preferred_element_type=jnp.float32)               # (S, d)
        # per-head slice of the output projection: no lane-axis concat needed
        attn = attn + jnp.dot(ctx.astype(jnp.bfloat16), wo_ref[hd],
                              preferred_element_type=jnp.float32)       # (S, H)

    # --- attention out-proj bias + residual + LayerNorm (f32 stats) ---
    z = attn + bo_ref[...] + x
    mu = jnp.mean(z, axis=-1, keepdims=True)
    var = jnp.mean((z - mu) ** 2, axis=-1, keepdims=True)
    h1 = (z - mu) * jax.lax.rsqrt(var + eps) * g1_ref[...] + be1_ref[...]

    # --- FFN up + GELU (f32 elementwise; tanh lowers to the EUP) ---
    inter = jnp.dot(h1.astype(jnp.bfloat16), w1_ref[...],
                    preferred_element_type=jnp.float32) + b1_ref[...]
    # TODO(synk): HF BERT default hidden_act='gelu' is the exact erf GELU; tanh approx here.
    inter = 0.5 * inter * (1.0 + jnp.tanh(0.7978845608028654
                                          * (inter + 0.044715 * inter * inter * inter)))

    # --- FFN down + residual + LayerNorm ---
    ffn = jnp.dot(inter.astype(jnp.bfloat16), w2_ref[...],
                  preferred_element_type=jnp.float32) + b2_ref[...]
    z2 = ffn + h1
    mu2 = jnp.mean(z2, axis=-1, keepdims=True)
    var2 = jnp.mean((z2 - mu2) ** 2, axis=-1, keepdims=True)
    out = (z2 - mu2) * jax.lax.rsqrt(var2 + eps) * g2_ref[...] + be2_ref[...]
    o_ref[0] = out.astype(o_ref.dtype)


def _pooler_head_kernel(cls_ref, wp_ref, bp_ref, wc_ref, bc_ref, o_ref):
    """Fused pooler + Dropout(identity) + ReLU + classifier into a lane-dense padded slab."""
    x = cls_ref[...].astype(jnp.bfloat16)
    pooled = jnp.tanh(jnp.dot(x, wp_ref[...],
                              preferred_element_type=jnp.float32) + bp_ref[...])
    # Dropout(0.3) is identity at inference.
    # TODO(synk): training-mode Dropout would need pltpu.prng_* masking here.
    act = jnp.maximum(pooled, 0.0).astype(jnp.bfloat16)
    o_ref[...] = jnp.dot(act, wc_ref[...],
                         preferred_element_type=jnp.float32) + bc_ref[...]


# ================================ wrappers ===================================
def layernorm(x, gamma, beta):
    M, H = x.shape
    return pl.pallas_call(
        functools.partial(_ln_kernel, eps=LN_EPS),
        out_shape=jax.ShapeDtypeStruct((M, H), jnp.bfloat16),
        grid=(1,),
        in_specs=[
            pl.BlockSpec((M, H), lambda i: (0, 0)),
            pl.BlockSpec((1, H), lambda i: (0, 0)),
            pl.BlockSpec((1, H), lambda i: (0, 0)),
        ],
        out_specs=pl.BlockSpec((M, H), lambda i: (0, 0)),
    )(x, gamma, beta)


def encoder_layer(h, add_mask, lp):
    """h: (B, S, H) bf16; add_mask: (B, 1, S) f32 additive key mask."""
    B, S, H = h.shape
    nh, _, d = lp["wq"].shape
    I = lp["w1"].shape[1]
    return pl.pallas_call(
        functools.partial(_encoder_layer_kernel, eps=LN_EPS),
        out_shape=jax.ShapeDtypeStruct((B, S, H), jnp.bfloat16),
        grid=(B,),
        in_specs=[
            pl.BlockSpec((1, S, H), lambda b: (b, 0, 0)),     # x
            pl.BlockSpec((1, 1, S), lambda b: (b, 0, 0)),     # additive mask
            pl.BlockSpec((nh, H, d), lambda b: (0, 0, 0)),    # wq (scale folded in)
            pl.BlockSpec((nh, 1, d), lambda b: (0, 0, 0)),    # bq
            pl.BlockSpec((nh, H, d), lambda b: (0, 0, 0)),    # wk
            pl.BlockSpec((nh, 1, d), lambda b: (0, 0, 0)),    # bk
            pl.BlockSpec((nh, H, d), lambda b: (0, 0, 0)),    # wv
            pl.BlockSpec((nh, 1, d), lambda b: (0, 0, 0)),    # bv
            pl.BlockSpec((nh, d, H), lambda b: (0, 0, 0)),    # wo (head-major rows)
            pl.BlockSpec((1, H), lambda b: (0, 0)),           # bo
            pl.BlockSpec((1, H), lambda b: (0, 0)),           # attn LN gamma
            pl.BlockSpec((1, H), lambda b: (0, 0)),           # attn LN beta
            pl.BlockSpec((H, I), lambda b: (0, 0)),           # w1
            pl.BlockSpec((1, I), lambda b: (0, 0)),           # b1
            pl.BlockSpec((I, H), lambda b: (0, 0)),           # w2
            pl.BlockSpec((1, H), lambda b: (0, 0)),           # b2
            pl.BlockSpec((1, H), lambda b: (0, 0)),           # ffn LN gamma
            pl.BlockSpec((1, H), lambda b: (0, 0)),           # ffn LN beta
        ],
        out_specs=pl.BlockSpec((1, S, H), lambda b: (b, 0, 0)),
        compiler_params=pltpu.CompilerParams(dimension_semantics=("parallel",)),
    )(h, add_mask,
      lp["wq"], lp["bq"], lp["wk"], lp["bk"], lp["wv"], lp["bv"],
      lp["wo"], lp["bo"], lp["ln1_g"], lp["ln1_b"],
      lp["w1"], lp["b1"], lp["w2"], lp["b2"], lp["ln2_g"], lp["ln2_b"])


def pooler_head(cls, wp, bp, wc_pad, bc_pad):
    B, H = cls.shape
    Np = wc_pad.shape[1]
    out = pl.pallas_call(
        _pooler_head_kernel,
        out_shape=jax.ShapeDtypeStruct((B, Np), jnp.float32),
        grid=(1,),
        in_specs=[
            pl.BlockSpec((B, H), lambda i: (0, 0)),
            pl.BlockSpec((H, H), lambda i: (0, 0)),
            pl.BlockSpec((1, H), lambda i: (0, 0)),
            pl.BlockSpec((H, Np), lambda i: (0, 0)),
            pl.BlockSpec((1, Np), lambda i: (0, 0)),
        ],
        out_specs=pl.BlockSpec((B, Np), lambda i: (0, 0)),
    )(cls, wp, bp, wc_pad, bc_pad)
    return out[:, :OUTPUT_DIM]


# ============================ params & forward ===============================
def init_params(key):
    def nrm(k, shape, dtype=jnp.bfloat16):
        return (0.02 * jax.random.normal(k, shape, dtype=jnp.float32)).astype(dtype)

    keys = jax.random.split(key, 5 + N_LAYERS)
    scale = 1.0 / float(HEAD_DIM) ** 0.5

    cls_w = nrm(keys[4], (HIDDEN, OUTPUT_DIM), jnp.float32)
    cls_w_pad = (jnp.zeros((HIDDEN, LOGITS_PAD), jnp.float32)
                 .at[:, :OUTPUT_DIM].set(cls_w).astype(jnp.bfloat16))
    cls_b_pad = jnp.zeros((1, LOGITS_PAD), jnp.float32)

    params = {
        # embeddings stay f32 (gather glue + LN precision)
        "word_emb": nrm(keys[0], (VOCAB, HIDDEN), jnp.float32),
        "pos_emb": nrm(keys[1], (MAX_POS, HIDDEN), jnp.float32),
        "type_emb": nrm(keys[2], (TYPE_VOCAB, HIDDEN), jnp.float32),
        "emb_ln_g": jnp.ones((1, HIDDEN), jnp.float32),
        "emb_ln_b": jnp.zeros((1, HIDDEN), jnp.float32),
        "pooler_w": nrm(keys[3], (HIDDEN, HIDDEN)),
        "pooler_b": jnp.zeros((1, HIDDEN), jnp.float32),
        "cls_w_pad": cls_w_pad,
        "cls_b_pad": cls_b_pad,
        "layers": [],
    }
    for l in range(N_LAYERS):
        lk = jax.random.split(keys[5 + l], 6)
        wq = nrm(lk[0], (N_HEADS, HIDDEN, HEAD_DIM), jnp.float32)
        params["layers"].append({
            # head-major projections; 1/sqrt(head_dim) folded into wq (and bq)
            "wq": (wq * scale).astype(jnp.bfloat16),
            "bq": jnp.zeros((N_HEADS, 1, HEAD_DIM), jnp.float32),
            "wk": nrm(lk[1], (N_HEADS, HIDDEN, HEAD_DIM)),
            "bk": jnp.zeros((N_HEADS, 1, HEAD_DIM), jnp.float32),
            "wv": nrm(lk[2], (N_HEADS, HIDDEN, HEAD_DIM)),
            "bv": jnp.zeros((N_HEADS, 1, HEAD_DIM), jnp.float32),
            "wo": nrm(lk[3], (N_HEADS, HEAD_DIM, HIDDEN)),
            "bo": jnp.zeros((1, HIDDEN), jnp.float32),
            "ln1_g": jnp.ones((1, HIDDEN), jnp.float32),
            "ln1_b": jnp.zeros((1, HIDDEN), jnp.float32),
            "w1": nrm(lk[4], (HIDDEN, INTERMEDIATE)),
            "b1": jnp.zeros((1, INTERMEDIATE), jnp.float32),
            "w2": nrm(lk[5], (INTERMEDIATE, HIDDEN)),
            "b2": jnp.zeros((1, HIDDEN), jnp.float32),
            "ln2_g": jnp.ones((1, HIDDEN), jnp.float32),
            "ln2_b": jnp.zeros((1, HIDDEN), jnp.float32),
        })
    return params


def bert_class_forward(params, ids, mask, token_type_ids):
    B, S = ids.shape
    # --- embeddings (table lookup is glue; LN is a Pallas kernel, bf16 out) ---
    pos_ids = jnp.arange(S)
    x = (jnp.take(params["word_emb"], ids, axis=0)
         + jnp.take(params["pos_emb"], pos_ids, axis=0)[None, :, :]
         + jnp.take(params["type_emb"], token_type_ids, axis=0))
    h = layernorm(x.reshape(B * S, HIDDEN), params["emb_ln_g"], params["emb_ln_b"])
    h = h.reshape(B, S, HIDDEN)                                        # (B, S, H) bf16

    add_mask = ((1.0 - mask.astype(jnp.float32)) * -10000.0).reshape(B, 1, S)

    # --- transformer encoder: one fused pallas_call per layer, grid=(B,) ---
    for lp in params["layers"]:
        h = encoder_layer(h, add_mask, lp)

    # --- pooler + Dropout(identity) + ReLU + Linear(H, 4), one fused kernel ---
    cls = h[:, 0, :]                                                   # (B, H) bf16
    logits = pooler_head(cls, params["pooler_w"], params["pooler_b"],
                         params["cls_w_pad"], params["cls_b_pad"])
    return logits                                                      # (B, OUTPUT_DIM) f32


if __name__ == "__main__":
    key = jax.random.PRNGKey(0)
    pkey, ikey = jax.random.split(key)
    params = init_params(pkey)

    B, S = 2, 8
    ids = jax.random.randint(ikey, (B, S), 0, VOCAB, dtype=jnp.int32)
    mask = jnp.ones((B, S), dtype=jnp.int32).at[1, 6:].set(0)   # second example padded
    token_type_ids = jnp.zeros((B, S), dtype=jnp.int32)

    fwd = jax.jit(bert_class_forward)
    logits = jax.block_until_ready(fwd(params, ids, mask, token_type_ids))
    assert logits.shape == (B, OUTPUT_DIM) and logits.dtype == jnp.float32
    assert bool(jnp.all(jnp.isfinite(logits)))
    print("KERNEL_OK")
</pallas_src>

<mosaic_0001>
module attributes {stable_mosaic.version = 11 : i64} {
  func.func @_ln_kernel(%arg0: i32, %arg1: memref<16x32xf32, #tpu.memory_space<vmem>>, %arg2: memref<1x32xf32, #tpu.memory_space<vmem>>, %arg3: memref<1x32xf32, #tpu.memory_space<vmem>>, %arg4: memref<16x32xbf16, #tpu.memory_space<vmem>>) attributes {dimension_semantics = [#tpu.dimension_semantics<arbitrary>], iteration_bounds = array<i64: 1>, scalar_prefetch = 0 : i64, scratch_operands = 0 : i64, tpu.core_type = #tpu.core_type<tc>, window_params = [{pipeline_mode = #tpu.pipeline_mode<synchronous>, transform_indices = @transform_0, window_bounds = array<i64: 16, 32>}, {pipeline_mode = #tpu.pipeline_mode<synchronous>, transform_indices = @transform_1, window_bounds = array<i64: 1, 32>}, {pipeline_mode = #tpu.pipeline_mode<synchronous>, transform_indices = @transform_2, window_bounds = array<i64: 1, 32>}, {pipeline_mode = #tpu.pipeline_mode<synchronous>, transform_indices = @transform_3, window_bounds = array<i64: 16, 32>}]} {
    %c0 = arith.constant 0 : index
    %c0_0 = arith.constant 0 : index
    %0 = vector.load %arg1[%c0, %c0_0] : memref<16x32xf32, #tpu.memory_space<vmem>>, vector<16x32xf32>
    %cst = arith.constant dense<0.000000e+00> : vector<16xf32>
    %1 = vector.multi_reduction <add>, %0, %cst [1] : vector<16x32xf32> to vector<16xf32>
    %2 = vector.shape_cast %1 : vector<16xf32> to vector<16x1xf32>
    %cst_1 = arith.constant 3.200000e+01 : f32
    %3 = vector.broadcast %cst_1 : f32 to vector<16x1xf32>
    %4 = arith.divf %2, %3 : vector<16x1xf32>
    %5 = vector.broadcast %4 : vector<16x1xf32> to vector<16x32xf32>
    %6 = arith.subf %0, %5 : vector<16x32xf32>
    %7 = arith.mulf %6, %6 : vector<16x32xf32>
    %cst_2 = arith.constant dense<0.000000e+00> : vector<16xf32>
    %8 = vector.multi_reduction <add>, %7, %cst_2 [1] : vector<16x32xf32> to vector<16xf32>
    %9 = vector.shape_cast %8 : vector<16xf32> to vector<16x1xf32>
    %cst_3 = arith.constant 3.200000e+01 : f32
    %10 = vector.broadcast %cst_3 : f32 to vector<16x1xf32>
    %11 = arith.divf %9, %10 : vector<16x1xf32>
    %12 = vector.broadcast %4 : vector<16x1xf32> to vector<16x32xf32>
    %13 = arith.subf %0, %12 : vector<16x32xf32>
    %cst_4 = arith.constant 9.99999996E-13 : f32
    %14 = vector.broadcast %cst_4 : f32 to vector<16x1xf32>
    %15 = arith.addf %11, %14 : vector<16x1xf32>
    %16 = math.rsqrt %15 : vector<16x1xf32>
    %17 = vector.broadcast %16 : vector<16x1xf32> to vector<16x32xf32>
    %18 = arith.mulf %13, %17 : vector<16x32xf32>
    %c0_5 = arith.constant 0 : index
    %c0_6 = arith.constant 0 : index
    %19 = vector.load %arg2[%c0_5, %c0_6] : memref<1x32xf32, #tpu.memory_space<vmem>>, vector<1x32xf32>
    %20 = vector.broadcast %19 : vector<1x32xf32> to vector<16x32xf32>
    %21 = arith.mulf %18, %20 : vector<16x32xf32>
    %c0_7 = arith.constant 0 : index
    %c0_8 = arith.constant 0 : index
    %22 = vector.load %arg3[%c0_7, %c0_8] : memref<1x32xf32, #tpu.memory_space<vmem>>, vector<1x32xf32>
    %23 = vector.broadcast %22 : vector<1x32xf32> to vector<16x32xf32>
    %24 = arith.addf %21, %23 : vector<16x32xf32>
    %25 = arith.truncf %24 : vector<16x32xf32> to vector<16x32xbf16>
    %c0_9 = arith.constant 0 : index
    %c0_10 = arith.constant 0 : index
    %26 = vector.load %arg4[%c0_9, %c0_10] : memref<16x32xbf16, #tpu.memory_space<vmem>>, vector<16x32xbf16>
    tpu.vector_store %arg4[%c0_9, %c0_10], %25 {strides = array<i32>} : memref<16x32xbf16, #tpu.memory_space<vmem>>, vector<16x32xbf16>,
    return
  }
  func.func @transform_0(%arg0: i32) -> (i32, i32) {
    %c0_i32 = arith.constant 0 : i32
    %c0_i32_0 = arith.constant 0 : i32
    %c0_i32_1 = arith.constant 0 : i32
    return %c0_i32, %c0_i32_0 : i32, i32
  }
  func.func @transform_1(%arg0: i32) -> (i32, i32) {
    %c0_i32 = arith.constant 0 : i32
    %c0_i32_0 = arith.constant 0 : i32
    %c0_i32_1 = arith.constant 0 : i32
    return %c0_i32, %c0_i32_0 : i32, i32
  }
  func.func @transform_2(%arg0: i32) -> (i32, i32) {
    %c0_i32 = arith.constant 0 : i32
    %c0_i32_0 = arith.constant 0 : i32
    %c0_i32_1 = arith.constant 0 : i32
    return %c0_i32, %c0_i32_0 : i32, i32
  }
  func.func @transform_3(%arg0: i32) -> (i32, i32) {
    %c0_i32 = arith.constant 0 : i32
    %c0_i32_0 = arith.constant 0 : i32
    %c0_i32_1 = arith.constant 0 : i32
    return %c0_i32, %c0_i32_0 : i32, i32
  }
}

module attributes {stable_mosaic.version = 11 : i64} {
  func.func @_encoder_layer_kernel(%arg0: i32, %arg1: memref<1x8x32xbf16, #tpu.memory_space<vmem>>, %arg2: memref<1x1x8xf32, #tpu.memory_space<vmem>>, %arg3: memref<4x32x8xbf16, #tpu.memory_space<vmem>>, %arg4: memref<4x1x8xf32, #tpu.memory_space<vmem>>, %arg5: memref<4x32x8xbf16, #tpu.memory_space<vmem>>, %arg6: memref<4x1x8xf32, #tpu.memory_space<vmem>>, %arg7: memref<4x32x8xbf16, #tpu.memory_space<vmem>>, %arg8: memref<4x1x8xf32, #tpu.memory_space<vmem>>, %arg9: memref<4x8x32xbf16, #tpu.memory_space<vmem>>, %arg10: memref<1x32xf32, #tpu.memory_space<vmem>>, %arg11: memref<1x32xf32, #tpu.memory_space<vmem>>, %arg12: memref<1x32xf32, #tpu.memory_space<vmem>>, %arg13: memref<32x64xbf16, #tpu.memory_space<vmem>>, %arg14: memref<1x64xf32, #tpu.memory_space<vmem>>, %arg15: memref<64x32xbf16, #tpu.memory_space<vmem>>, %arg16: memref<1x32xf32, #tpu.memory_space<vmem>>, %arg17: memref<1x32xf32, #tpu.memory_space<vmem>>, %arg18: memref<1x32xf32, #tpu.memory_space<vmem>>, %arg19: memref<1x8x32xbf16, #tpu.memory_space<vmem>>) attributes {dimension_semantics = [#tpu.dimension_semantics<parallel>], iteration_bounds = array<i64: 2>, scalar_prefetch = 0 : i64, scratch_operands = 0 : i64, tpu.core_type = #tpu.core_type<tc>, window_params = [{transform_indices = @transform_0, window_bounds = array<i64: 1, 8, 32>}, {transform_indices = @transform_1, window_bounds = array<i64: 1, 1, 8>}, {pipeline_mode = #tpu.pipeline_mode<synchronous>, transform_indices = @transform_2, window_bounds = array<i64: 4, 32, 8>}, {pipeline_mode = #tpu.pipeline_mode<synchronous>, transform_indices = @transform_3, window_bounds = array<i64: 4, 1, 8>}, {pipeline_mode = #tpu.pipeline_mode<synchronous>, transform_indices = @transform_4, window_bounds = array<i64: 4, 32, 8>}, {pipeline_mode = #tpu.pipeline_mode<synchronous>, transform_indices = @transform_5, window_bounds = array<i64: 4, 1, 8>}, {pipeline_mode = #tpu.pipeline_mode<synchronous>, transform_indices = @transform_6, window_bounds = array<i64: 4, 32, 8>}, {pipeline_mode = #tpu.pipeline_mode<synchronous>, transform_indices = @transform_7, window_bounds = array<i64: 4, 1, 8>}, {pipeline_mode = #tpu.pipeline_mode<synchronous>, transform_indices = @transform_8, window_bounds = array<i64: 4, 8, 32>}, {pipeline_mode = #tpu.pipeline_mode<synchronous>, transform_indices = @transform_9, window_bounds = array<i64: 1, 32>}, {pipeline_mode = #tpu.pipeline_mode<synchronous>, transform_indices = @transform_10, window_bounds = array<i64: 1, 32>}, {pipeline_mode = #tpu.pipeline_mode<synchronous>, transform_indices = @transform_11, window_bounds = array<i64: 1, 32>}, {pipeline_mode = #tpu.pipeline_mode<synchronous>, transform_indices = @transform_12, window_bounds = array<i64: 32, 64>}, {pipeline_mode = #tpu.pipeline_mode<synchronous>, transform_indices = @transform_13, window_bounds = array<i64: 1, 64>}, {pipeline_mode = #tpu.pipeline_mode<synchronous>, transform_indices = @transform_14, window_bounds = array<i64: 64, 32>}, {pipeline_mode = #tpu.pipeline_mode<synchronous>, transform_indices = @transform_15, window_bounds = array<i64: 1, 32>}, {pipeline_mode = #tpu.pipeline_mode<synchronous>, transform_indices = @transform_16, window_bounds = array<i64: 1, 32>}, {pipeline_mode = #tpu.pipeline_mode<synchronous>, transform_indices = @transform_17, window_bounds = array<i64: 1, 32>}, {transform_indices = @transform_18, window_bounds = array<i64: 1, 8, 32>}]} {
    %c0 = arith.constant 0 : index
    %c0_0 = arith.constant 0 : index
    %c0_1 = arith.constant 0 : index
    %0 = vector.load %arg1[%c0, %c0_0, %c0_1] : memref<1x8x32xbf16, #tpu.memory_space<vmem>>, vector<1x8x32xbf16>
    %1 = vector.shape_cast %0 : vector<1x8x32xbf16> to vector<8x32xbf16>
    %2 = arith.extf %1 : vector<8x32xbf16> to vector<8x32xf32>
    %3 = arith.truncf %2 : vector<8x32xf32> to vector<8x32xbf16>
    %c0_2 = arith.constant 0 : index
    %c0_3 = arith.constant 0 : index
    %c0_4 = arith.constant 0 : index
    %4 = vector.load %arg2[%c0_2, %c0_3, %c0_4] : memref<1x1x8xf32, #tpu.memory_space<vmem>>, vector<1x1x8xf32>
    %5 = vector.shape_cast %4 : vector<1x1x8xf32> to vector<1x8xf32>
    %cst = arith.constant 0.000000e+00 : f32
    %6 = vector.broadcast %cst : f32 to vector<8x32xf32>
    %c0_5 = arith.constant 0 : index
    %c0_6 = arith.constant 0 : index
    %c0_7 = arith.constant 0 : index
    %7 = vector.load %arg3[%c0_5, %c0_6, %c0_7] : memref<4x32x8xbf16, #tpu.memory_space<vmem>>, vector<1x32x8xbf16>
    %8 = vector.shape_cast %7 : vector<1x32x8xbf16> to vector<32x8xbf16>
    %cst_8 = arith.constant dense<0.000000e+00> : vector<8x8xf32>
    %9 = tpu.matmul %3, %8, %cst_8 {dimension_numbers = #tpu.dot_dimension_numbers<[1], [0], [0], [1], [0, 0, 1, 1], [], []>} : vector<8x32xbf16>, vector<32x8xbf16>, vector<8x8xf32> -> vector<8x8xf32>
    %c0_9 = arith.constant 0 : index
    %c0_10 = arith.constant 0 : index
    %c0_11 = arith.constant 0 : index
    %10 = vector.load %arg4[%c0_9, %c0_10, %c0_11] : memref<4x1x8xf32, #tpu.memory_space<vmem>>, vector<1x1x8xf32>
    %11 = vector.shape_cast %10 : vector<1x1x8xf32> to vector<1x8xf32>
    %12 = vector.broadcast %11 : vector<1x8xf32> to vector<8x8xf32>
    %13 = arith.addf %9, %12 : vector<8x8xf32>
    %c0_12 = arith.constant 0 : index
    %c0_13 = arith.constant 0 : index
    %c0_14 = arith.constant 0 : index
    %14 = vector.load %arg5[%c0_12, %c0_13, %c0_14] : memref<4x32x8xbf16, #tpu.memory_space<vmem>>, vector<1x32x8xbf16>
    %15 = vector.shape_cast %14 : vector<1x32x8xbf16> to vector<32x8xbf16>
    %cst_15 = arith.constant dense<0.000000e+00> : vector<8x8xf32>
    %16 = tpu.matmul %3, %15, %cst_15 {dimension_numbers = #tpu.dot_dimension_numbers<[1], [0], [0], [1], [0, 0, 1, 1], [], []>} : vector<8x32xbf16>, vector<32x8xbf16>, vector<8x8xf32> -> vector<8x8xf32>
    %c0_16 = arith.constant 0 : index
    %c0_17 = arith.constant 0 : index
    %c0_18 = arith.constant 0 : index
    %17 = vector.load %arg6[%c0_16, %c0_17, %c0_18] : memref<4x1x8xf32, #tpu.memory_space<vmem>>, vector<1x1x8xf32>
    %18 = vector.shape_cast %17 : vector<1x1x8xf32> to vector<1x8xf32>
    %19 = vector.broadcast %18 : vector<1x8xf32> to vector<8x8xf32>
    %20 = arith.addf %16, %19 : vector<8x8xf32>
    %c0_19 = arith.constant 0 : index
    %c0_20 = arith.constant 0 : index
    %c0_21 = arith.constant 0 : index
    %21 = vector.load %arg7[%c0_19, %c0_20, %c0_21] : memref<4x32x8xbf16, #tpu.memory_space<vmem>>, vector<1x32x8xbf16>
    %22 = vector.shape_cast %21 : vector<1x32x8xbf16> to vector<32x8xbf16>
    %cst_22 = arith.constant dense<0.000000e+00> : vector<8x8xf32>
    %23 = tpu.matmul %3, %22, %cst_22 {dimension_numbers = #tpu.dot_dimension_numbers<[1], [0], [0], [1], [0, 0, 1, 1], [], []>} : vector<8x32xbf16>, vector<32x8xbf16>, vector<8x8xf32> -> vector<8x8xf32>
    %c0_23 = arith.constant 0 : index
    %c0_24 = arith.constant 0 : index
    %c0_25 = arith.constant 0 : index
    %24 = vector.load %arg8[%c0_23, %c0_24, %c0_25] : memref<4x1x8xf32, #tpu.memory_space<vmem>>, vector<1x1x8xf32>
    %25 = vector.shape_cast %24 : vector<1x1x8xf32> to vector<1x8xf32>
    %26 = vector.broadcast %25 : vector<1x8xf32> to vector<8x8xf32>
    %27 = arith.addf %23, %26 : vector<8x8xf32>
    %28 = arith.truncf %13 : vector<8x8xf32> to vector<8x8xbf16>
    %29 = arith.truncf %20 : vector<8x8xf32> to vector<8x8xbf16>
    %cst_26 = arith.constant dense<0.000000e+00> : vector<8x8xf32>
    %30 = tpu.matmul %28, %29, %cst_26 {dimension_numbers = #tpu.dot_dimension_numbers<[1], [1], [0], [0], [0, 0, 1, 0], [], []>} : vector<8x8xbf16>, vector<8x8xbf16>, vector<8x8xf32> -> vector<8x8xf32>
    %31 = vector.broadcast %5 : vector<1x8xf32> to vector<8x8xf32>
    %32 = arith.addf %30, %31 : vector<8x8xf32>
    %cst_27 = arith.constant dense<0xFF800000> : vector<8xf32>
    %33 = vector.multi_reduction <maximumf>, %32, %cst_27 [1] : vector<8x8xf32> to vector<8xf32>
    %34 = vector.shape_cast %33 : vector<8xf32> to vector<8x1xf32>
    %35 = vector.broadcast %34 : vector<8x1xf32> to vector<8x8xf32>
    %36 = arith.subf %32, %35 : vector<8x8xf32>
    %37 = math.exp %36 : vector<8x8xf32>
    %cst_28 = arith.constant dense<0.000000e+00> : vector<8xf32>
    %38 = vector.multi_reduction <add>, %37, %cst_28 [1] : vector<8x8xf32> to vector<8xf32>
    %39 = vector.shape_cast %38 : vector<8xf32> to vector<8x1xf32>
    %40 = tpu.reciprocal %39 {approx = true} : vector<8x1xf32> -> vector<8x1xf32>
    %41 = vector.broadcast %40 : vector<8x1xf32> to vector<8x8xf32>
    %42 = arith.mulf %37, %41 : vector<8x8xf32>
    %43 = arith.truncf %42 : vector<8x8xf32> to vector<8x8xbf16>
    %44 = arith.truncf %27 : vector<8x8xf32> to vector<8x8xbf16>
    %cst_29 = arith.constant dense<0.000000e+00> : vector<8x8xf32>
    %45 = tpu.matmul %43, %44, %cst_29 {dimension_numbers = #tpu.dot_dimension_numbers<[1], [0], [0], [1], [0, 0, 1, 1], [], []>} : vector<8x8xbf16>, vector<8x8xbf16>, vector<8x8xf32> -> vector<8x8xf32>
    %46 = arith.truncf %45 : vector<8x8xf32> to vector<8x8xbf16>
    %c0_30 = arith.constant 0 : index
    %c0_31 = arith.constant 0 : index
    %c0_32 = arith.constant 0 : index
    %47 = vector.load %arg9[%c0_30, %c0_31, %c0_32] : memref<4x8x32xbf16, #tpu.memory_space<vmem>>, vector<1x8x32xbf16>
    %48 = vector.shape_cast %47 : vector<1x8x32xbf16> to vector<8x32xbf16>
    %cst_33 = arith.constant dense<0.000000e+00> : vector<8x32xf32>
    %49 = tpu.matmul %46, %48, %cst_33 {dimension_numbers = #tpu.dot_dimension_numbers<[1], [0], [0], [1], [0, 0, 1, 1], [], []>} : vector<8x8xbf16>, vector<8x32xbf16>, vector<8x32xf32> -> vector<8x32xf32>
    %50 = arith.addf %6, %49 : vector<8x32xf32>
    %c1 = arith.constant 1 : index
    %c0_34 = arith.constant 0 : index
    %c0_35 = arith.constant 0 : index
    %51 = vector.load %arg3[%c1, %c0_34, %c0_35] : memref<4x32x8xbf16, #tpu.memory_space<vmem>>, vector<1x32x8xbf16>
    %52 = vector.shape_cast %51 : vector<1x32x8xbf16> to vector<32x8xbf16>
    %cst_36 = arith.constant dense<0.000000e+00> : vector<8x8xf32>
    %53 = tpu.matmul %3, %52, %cst_36 {dimension_numbers = #tpu.dot_dimension_numbers<[1], [0], [0], [1], [0, 0, 1, 1], [], []>} : vector<8x32xbf16>, vector<32x8xbf16>, vector<8x8xf32> -> vector<8x8xf32>
    %c1_37 = arith.constant 1 : index
    %c0_38 = arith.constant 0 : index
    %c0_39 = arith.constant 0 : index
    %54 = vector.load %arg4[%c1_37, %c0_38, %c0_39] : memref<4x1x8xf32, #tpu.memory_space<vmem>>, vector<1x1x8xf32>
    %55 = vector.shape_cast %54 : vector<1x1x8xf32> to vector<1x8xf32>
    %56 = vector.broadcast %55 : vector<1x8xf32> to vector<8x8xf32>
    %57 = arith.addf %53, %56 : vector<8x8xf32>
    %c1_40 = arith.constant 1 : index
    %c0_41 = arith.constant 0 : index
    %c0_42 = arith.constant 0 : index
    %58 = vector.load %arg5[%c1_40, %c0_41, %c0_42] : memref<4x32x8xbf16, #tpu.memory_space<vmem>>, vector<1x32x8xbf16>
    %59 = vector.shape_cast %58 : vector<1x32x8xbf16> to vector<32x8xbf16>
    %cst_43 = arith.constant dense<0.000000e+00> : vector<8x8xf32>
    %60 = tpu.matmul %3, %59, %cst_43 {dimension_numbers = #tpu.dot_dimension_numbers<[1], [0], [0], [1], [0, 0, 1, 1], [], []>} : vector<8x32xbf16>, vector<32x8xbf16>, vector<8x8xf32> -> vector<8x8xf32>
    %c1_44 = arith.constant 1 : index
    %c0_45 = arith.constant 0 : index
    %c0_46 = arith.constant 0 : index
    %61 = vector.load %arg6[%c1_44, %c0_45, %c0_46] : memref<4x1x8xf32, #tpu.memory_space<vmem>>, vector<1x1x8xf32>
    %62 = vector.shape_cast %61 : vector<1x1x8xf32> to vector<1x8xf32>
    %63 = vector.broadcast %62 : vector<1x8xf32> to vector<8x8xf32>
    %64 = arith.addf %60, %63 : vector<8x8xf32>
    %c1_47 = arith.constant 1 : index
    %c0_48 = arith.constant 0 : index
    %c0_49 = arith.constant 0 : index
    %65 = vector.load %arg7[%c1_47, %c0_48, %c0_49] : memref<4x32x8xbf16, #tpu.memory_space<vmem>>, vector<1x32x8xbf16>
    %66 = vector.shape_cast %65 : vector<1x32x8xbf16> to vector<32x8xbf16>
    %cst_50 = arith.constant dense<0.000000e+00> : vector<8x8xf32>
    %67 = tpu.matmul %3, %66, %cst_50 {dimension_numbers = #tpu.dot_dimension_numbers<[1], [0], [0], [1], [0, 0, 1, 1], [], []>} : vector<8x32xbf16>, vector<32x8xbf16>, vector<8x8xf32> -> vector<8x8xf32>
    %c1_51 = arith.constant 1 : index
    %c0_52 = arith.constant 0 : index
    %c0_53 = arith.constant 0 : index
    %68 = vector.load %arg8[%c1_51, %c0_52, %c0_53] : memref<4x1x8xf32, #tpu.memory_space<vmem>>, vector<1x1x8xf32>
    %69 = vector.shape_cast %68 : vector<1x1x8xf32> to vector<1x8xf32>
    %70 = vector.broadcast %69 : vector<1x8xf32> to vector<8x8xf32>
    %71 = arith.addf %67, %70 : vector<8x8xf32>
    %72 = arith.truncf %57 : vector<8x8xf32> to vector<8x8xbf16>
    %73 = arith.truncf %64 : vector<8x8xf32> to vector<8x8xbf16>
    %cst_54 = arith.constant dense<0.000000e+00> : vector<8x8xf32>
    %74 = tpu.matmul %72, %73, %cst_54 {dimension_numbers = #tpu.dot_dimension_numbers<[1], [1], [0], [0], [0, 0, 1, 0], [], []>} : vector<8x8xbf16>, vector<8x8xbf16>, vector<8x8xf32> -> vector<8x8xf32>
    %75 = vector.broadcast %5 : vector<1x8xf32> to vector<8x8xf32>
    %76 = arith.addf %74, %75 : vector<8x8xf32>
    %cst_55 = arith.constant dense<0xFF800000> : vector<8xf32>
    %77 = vector.multi_reduction <maximumf>, %76, %cst_55 [1] : vector<8x8xf32> to vector<8xf32>
    %78 = vector.shape_cast %77 : vector<8xf32> to vector<8x1xf32>
    %79 = vector.broadcast %78 : vector<8x1xf32> to vector<8x8xf32>
    %80 = arith.subf %76, %79 : vector<8x8xf32>
    %81 = math.exp %80 : vector<8x8xf32>
    %cst_56 = arith.constant dense<0.000000e+00> : vector<8xf32>
    %82 = vector.multi_reduction <add>, %81, %cst_56 [1] : vector<8x8xf32> to vector<8xf32>
    %83 = vector.shape_cast %82 : vector<8xf32> to vector<8x1xf32>
    %84 = tpu.reciprocal %83 {approx = true} : vector<8x1xf32> -> vector<8x1xf32>
    %85 = vector.broadcast %84 : vector<8x1xf32> to vector<8x8xf32>
    %86 = arith.mulf %81, %85 : vector<8x8xf32>
    %87 = arith.truncf %86 : vector<8x8xf32> to vector<8x8xbf16>
    %88 = arith.truncf %71 : vector<8x8xf32> to vector<8x8xbf16>
    %cst_57 = arith.constant dense<0.000000e+00> : vector<8x8xf32>
    %89 = tpu.matmul %87, %88, %cst_57 {dimension_numbers = #tpu.dot_dimension_numbers<[1], [0], [0], [1], [0, 0, 1, 1], [], []>} : vector<8x8xbf16>, vector<8x8xbf16>, vector<8x8xf32> -> vector<8x8xf32>
    %90 = arith.truncf %89 : vector<8x8xf32> to vector<8x8xbf16>
    %c1_58 = arith.constant 1 : index
    %c0_59 = arith.constant 0 : index
    %c0_60 = arith.constant 0 : index
    %91 = vector.load %arg9[%c1_58, %c0_59, %c0_60] : memref<4x8x32xbf16, #tpu.memory_space<vmem>>, vector<1x8x32xbf16>
    %92 = vector.shape_cast %91 : vector<1x8x32xbf16> to vector<8x32xbf16>
    %cst_61 = arith.constant dense<0.000000e+00> : vector<8x32xf32>
    %93 = tpu.matmul %90, %92, %cst_61 {dimension_numbers = #tpu.dot_dimension_numbers<[1], [0], [0], [1], [0, 0, 1, 1], [], []>} : vector<8x8xbf16>, vector<8x32xbf16>, vector<8x32xf32> -> vector<8x32xf32>
    %94 = arith.addf %50, %93 : vector<8x32xf32>
    %c2 = arith.constant 2 : index
    %c0_62 = arith.constant 0 : index
    %c0_63 = arith.constant 0 : index
    %95 = vector.load %arg3[%c2, %c0_62, %c0_63] : memref<4x32x8xbf16, #tpu.memory_space<vmem>>, vector<1x32x8xbf16>
    %96 = vector.shape_cast %95 : vector<1x32x8xbf16> to vector<32x8xbf16>
    %cst_64 = arith.constant dense<0.000000e+00> : vector<8x8xf32>
    %97 = tpu.matmul %3, %96, %cst_64 {dimension_numbers = #tpu.dot_dimension_numbers<[1], [0], [0], [1], [0, 0, 1, 1], [], []>} : vector<8x32xbf16>, vector<32x8xbf16>, vector<8x8xf32> -> vector<8x8xf32>
    %c2_65 = arith.constant 2 : index
    %c0_66 = arith.constant 0 : index
    %c0_67 = arith.constant 0 : index
    %98 = vector.load %arg4[%c2_65, %c0_66, %c0_67] : memref<4x1x8xf32, #tpu.memory_space<vmem>>, vector<1x1x8xf32>
    %99 = vector.shape_cast %98 : vector<1x1x8xf32> to vector<1x8xf32>
    %100 = vector.broadcast %99 : vector<1x8xf32> to vector<8x8xf32>
    %101 = arith.addf %97, %100 : vector<8x8xf32>
    %c2_68 = arith.constant 2 : index
    %c0_69 = arith.constant 0 : index
    %c0_70 = arith.constant 0 : index
    %102 = vector.load %arg5[%c2_68, %c0_69, %c0_70] : memref<4x32x8xbf16, #tpu.memory_space<vmem>>, vector<1x32x8xbf16>
    %103 = vector.shape_cast %102 : vector<1x32x8xbf16> to vector<32x8xbf16>
    %cst_71 = arith.constant dense<0.000000e+00> : vector<8x8xf32>
    %104 = tpu.matmul %3, %103, %cst_71 {dimension_numbers = #tpu.dot_dimension_numbers<[1], [0], [0], [1], [0, 0, 1, 1], [], []>} : vector<8x32xbf16>, vector<32x8xbf16>, vector<8x8xf32> -> vector<8x8xf32>
    %c2_72 = arith.constant 2 : index
    %c0_73 = arith.constant 0 : index
    %c0_74 = arith.constant 0 : index
    %105 = vector.load %arg6[%c2_72, %c0_73, %c0_74] : memref<4x1x8xf32, #tpu.memory_space<vmem>>, vector<1x1x8xf32>
    %106 = vector.shape_cast %105 : vector<1x1x8xf32> to vector<1x8xf32>
    %107 = vector.broadcast %106 : vector<1x8xf32> to vector<8x8xf32>
    %108 = arith.addf %104, %107 : vector<8x8xf32>
    %c2_75 = arith.constant 2 : index
    %c0_76 = arith.constant 0 : index
    %c0_77 = arith.constant 0 : index
    %109 = vector.load %arg7[%c2_75, %c0_76, %c0_77] : memref<4x32x8xbf16, #tpu.memory_space<vmem>>, vector<1x32x8xbf16>
    %110 = vector.shape_cast %109 : vector<1x32x8xbf16> to vector<32x8xbf16>
    %cst_78 = arith.constant dense<0.000000e+00> : vector<8x8xf32>
    %111 = tpu.matmul %3, %110, %cst_78 {dimension_numbers = #tpu.dot_dimension_numbers<[1], [0], [0], [1], [0, 0, 1, 1], [], []>} : vector<8x32xbf16>, vector<32x8xbf16>, vector<8x8xf32> -> vector<8x8xf32>
    %c2_79 = arith.constant 2 : index
    %c0_80 = arith.constant 0 : index
    %c0_81 = arith.constant 0 : index
    %112 = vector.load %arg8[%c2_79, %c0_80, %c0_81] : memref<4x1x8xf32, #tpu.memory_space<vmem>>, vector<1x1x8xf32>
    %113 = vector.shape_cast %112 : vector<1x1x8xf32> to vector<1x8xf32>
    %114 = vector.broadcast %113 : vector<1x8xf32> to vector<8x8xf32>
    %115 = arith.addf %111, %114 : vector<8x8xf32>
    %116 = arith.truncf %101 : vector<8x8xf32> to vector<8x8xbf16>
    %117 = arith.truncf %108 : vector<8x8xf32> to vector<8x8xbf16>
    %cst_82 = arith.constant dense<0.000000e+00> : vector<8x8xf32>
    %118 = tpu.matmul %116, %117, %cst_82 {dimension_numbers = #tpu.dot_dimension_numbers<[1], [1], [0], [0], [0, 0, 1, 0], [], []>} : vector<8x8xbf16>, vector<8x8xbf16>, vector<8x8xf32> -> vector<8x8xf32>
    %119 = vector.broadcast %5 : vector<1x8xf32> to vector<8x8xf32>
    %120 = arith.addf %118, %119 : vector<8x8xf32>
    %cst_83 = arith.constant dense<0xFF800000> : vector<8xf32>
    %121 = vector.multi_reduction <maximumf>, %120, %cst_83 [1] : vector<8x8xf32> to vector<8xf32>
    %122 = vector.shape_cast %121 : vector<8xf32> to vector<8x1xf32>
    %123 = vector.broadcast %122 : vector<8x1xf32> to vector<8x8xf32>
    %124 = arith.subf %120, %123 : vector<8x8xf32>
    %125 = math.exp %124 : vector<8x8xf32>
    %cst_84 = arith.constant dense<0.000000e+00> : vector<8xf32>
    %126 = vector.multi_reduction <add>, %125, %cst_84 [1] : vector<8x8xf32> to vector<8xf32>
    %127 = vector.shape_cast %126 : vector<8xf32> to vector<8x1xf32>
    %128 = tpu.reciprocal %127 {approx = true} : vector<8x1xf32> -> vector<8x1xf32>
    %129 = vector.broadcast %128 : vector<8x1xf32> to vector<8x8xf32>
    %130 = arith.mulf %125, %129 : vector<8x8xf32>
    %131 = arith.truncf %130 : vector<8x8xf32> to vector<8x8xbf16>
    %132 = arith.truncf %115 : vector<8x8xf32> to vector<8x8xbf16>
    %cst_85 = arith.constant dense<0.000000e+00> : vector<8x8xf32>
    %133 = tpu.matmul %131, %132, %cst_85 {dimension_numbers = #tpu.dot_dimension_numbers<[1], [0], [0], [1], [0, 0, 1, 1], [], []>} : vector<8x8xbf16>, vector<8x8xbf16>, vector<8x8xf32> -> vector<8x8xf32>
    %134 = arith.truncf %133 : vector<8x8xf32> to vector<8x8xbf16>
    %c2_86 = arith.constant 2 : index
    %c0_87 = arith.constant 0 : index
    %c0_88 = arith.constant 0 : index
    %135 = vector.load %arg9[%c2_86, %c0_87, %c0_88] : memref<4x8x32xbf16, #tpu.memory_space<vmem>>, vector<1x8x32xbf16>
    %136 = vector.shape_cast %135 : vector<1x8x32xbf16> to vector<8x32xbf16>
    %cst_89 = arith.constant dense<0.000000e+00> : vector<8x32xf32>
    %137 = tpu.matmul %134, %136, %cst_89 {dimension_numbers = #tpu.dot_dimension_numbers<[1], [0], [0], [1], [0, 0, 1, 1], [], []>} : vector<8x8xbf16>, vector<8x32xbf16>, vector<8x32xf32> -> vector<8x32xf32>
    %138 = arith.addf %94, %137 : vector<8x32xf32>
    %c3 = arith.constant 3 : index
    %c0_90 = arith.constant 0 : index
    %c0_91 = arith.constant 0 : index
    %139 = vector.load %arg3[%c3, %c0_90, %c0_91] : memref<4x32x8xbf16, #tpu.memory_space<vmem>>, vector<1x32x8xbf16>
    %140 = vector.shape_cast %139 : vector<1x32x8xbf16> to vector<32x8xbf16>
    %cst_92 = arith.constant dense<0.000000e+00> : vector<8x8xf32>
    %141 = tpu.matmul %3, %140, %cst_92 {dimension_numbers = #tpu.dot_dimension_numbers<[1], [0], [0], [1], [0, 0, 1, 1], [], []>} : vector<8x32xbf16>, vector<32x8xbf16>, vector<8x8xf32> -> vector<8x8xf32>
    %c3_93 = arith.constant 3 : index
    %c0_94 = arith.constant 0 : index
    %c0_95 = arith.constant 0 : index
    %142 = vector.load %arg4[%c3_93, %c0_94, %c0_95] : memref<4x1x8xf32, #tpu.memory_space<vmem>>, vector<1x1x8xf32>
    %143 = vector.shape_cast %142 : vector<1x1x8xf32> to vector<1x8xf32>
    %144 = vector.broadcast %143 : vector<1x8xf32> to vector<8x8xf32>
    %145 = arith.addf %141, %144 : vector<8x8xf32>
    %c3_96 = arith.constant 3 : index
    %c0_97 = arith.constant 0 : index
    %c0_98 = arith.constant 0 : index
    %146 = vector.load %arg5[%c3_96, %c0_97, %c0_98] : memref<4x32x8xbf16, #tpu.memory_space<vmem>>, vector<1x32x8xbf16>
    %147 = vector.shape_cast %146 : vector<1x32x8xbf16> to vector<32x8xbf16>
    %cst_99 = arith.constant dense<0.000000e+00> : vector<8x8xf32>
    %148 = tpu.matmul %3, %147, %cst_99 {dimension_numbers = #tpu.dot_dimension_numbers<[1], [0], [0], [1], [0, 0, 1, 1], [], []>} : vector<8x32xbf16>, vector<32x8xbf16>, vector<8x8xf32> -> vector<8x8xf32>
    %c3_100 = arith.constant 3 : index
    %c0_101 = arith.constant 0 : index
    %c0_102 = arith.constant 0 : index
    %149 = vector.load %arg6[%c3_100, %c0_101, %c0_102] : memref<4x1x8xf32, #tpu.memory_space<vmem>>, vector<1x1x8xf32>
    %150 = vector.shape_cast %149 : vector<1x1x8xf32> to vector<1x8xf32>
    %151 = vector.broadcast %150 : vector<1x8xf32> to vector<8x8xf32>
    %152 = arith.addf %148, %151 : vector<8x8xf32>
    %c3_103 = arith.constant 3 : index
    %c0_104 = arith.constant 0 : index
    %c0_105 = arith.constant 0 : index
    %153 = vector.load %arg7[%c3_103, %c0_104, %c0_105] : memref<4x32x8xbf16, #tpu.memory_space<vmem>>, vector<1x32x8xbf16>
    %154 = vector.shape_cast %153 : vector<1x32x8xbf16> to vector<32x8xbf16>
    %cst_106 = arith.constant dense<0.000000e+00> : vector<8x8xf32>
    %155 = tpu.matmul %3, %154, %cst_106 {dimension_numbers = #tpu.dot_dimension_numbers<[1], [0], [0], [1], [0, 0, 1, 1], [], []>} : vector<8x32xbf16>, vector<32x8xbf16>, vector<8x8xf32> -> vector<8x8xf32>
    %c3_107 = arith.constant 3 : index
    %c0_108 = arith.constant 0 : index
    %c0_109 = arith.constant 0 : index
    %156 = vector.load %arg8[%c3_107, %c0_108, %c0_109] : memref<4x1x8xf32, #tpu.memory_space<vmem>>, vector<1x1x8xf32>
    %157 = vector.shape_cast %156 : vector<1x1x8xf32> to vector<1x8xf32>
    %158 = vector.broadcast %157 : vector<1x8xf32> to vector<8x8xf32>
    %159 = arith.addf %155, %158 : vector<8x8xf32>
    %160 = arith.truncf %145 : vector<8x8xf32> to vector<8x8xbf16>
    %161 = arith.truncf %152 : vector<8x8xf32> to vector<8x8xbf16>
    %cst_110 = arith.constant dense<0.000000e+00> : vector<8x8xf32>
    %162 = tpu.matmul %160, %161, %cst_110 {dimension_numbers = #tpu.dot_dimension_numbers<[1], [1], [0], [0], [0, 0, 1, 0], [], []>} : vector<8x8xbf16>, vector<8x8xbf16>, vector<8x8xf32> -> vector<8x8xf32>
    %163 = vector.broadcast %5 : vector<1x8xf32> to vector<8x8xf32>
    %164 = arith.addf %162, %163 : vector<8x8xf32>
    %cst_111 = arith.constant dense<0xFF800000> : vector<8xf32>
    %165 = vector.multi_reduction <maximumf>, %164, %cst_111 [1] : vector<8x8xf32> to vector<8xf32>
    %166 = vector.shape_cast %165 : vector<8xf32> to vector<8x1xf32>
    %167 = vector.broadcast %166 : vector<8x1xf32> to vector<8x8xf32>
    %168 = arith.subf %164, %167 : vector<8x8xf32>
    %169 = math.exp %168 : vector<8x8xf32>
    %cst_112 = arith.constant dense<0.000000e+00> : vector<8xf32>
    %170 = vector.multi_reduction <add>, %169, %cst_112 [1] : vector<8x8xf32> to vector<8xf32>
    %171 = vector.shape_cast %170 : vector<8xf32> to vector<8x1xf32>
    %172 = tpu.reciprocal %171 {approx = true} : vector<8x1xf32> -> vector<8x1xf32>
    %173 = vector.broadcast %172 : vector<8x1xf32> to vector<8x8xf32>
    %174 = arith.mulf %169, %173 : vector<8x8xf32>
    %175 = arith.truncf %174 : vector<8x8xf32> to vector<8x8xbf16>
    %176 = arith.truncf %159 : vector<8x8xf32> to vector<8x8xbf16>
    %cst_113 = arith.constant dense<0.000000e+00> : vector<8x8xf32>
    %177 = tpu.matmul %175, %176, %cst_113 {dimension_numbers = #tpu.dot_dimension_numbers<[1], [0], [0], [1], [0, 0, 1, 1], [], []>} : vector<8x8xbf16>, vector<8x8xbf16>, vector<8x8xf32> -> vector<8x8xf32>
    %178 = arith.truncf %177 : vector<8x8xf32> to vector<8x8xbf16>
    %c3_114 = arith.constant 3 : index
    %c0_115 = arith.constant 0 : index
    %c0_116 = arith.constant 0 : index
    %179 = vector.load %arg9[%c3_114, %c0_115, %c0_116] : memref<4x8x32xbf16, #tpu.memory_space<vmem>>, vector<1x8x32xbf16>
    %180 = vector.shape_cast %179 : vector<1x8x32xbf16> to vector<8x32xbf16>
    %cst_117 = arith.constant dense<0.000000e+00> : vector<8x32xf32>
    %181 = tpu.matmul %178, %180, %cst_117 {dimension_numbers = #tpu.dot_dimension_numbers<[1], [0], [0], [1], [0, 0, 1, 1], [], []>} : vector<8x8xbf16>, vector<8x32xbf16>, vector<8x32xf32> -> vector<8x32xf32>
    %182 = arith.addf %138, %181 : vector<8x32xf32>
    %c0_118 = arith.constant 0 : index
    %c0_119 = arith.constant 0 : index
    %183 = vector.load %arg10[%c0_118, %c0_119] : memref<1x32xf32, #tpu.memory_space<vmem>>, vector<1x32xf32>
    %184 = vector.broadcast %183 : vector<1x32xf32> to vector<8x32xf32>
    %185 = arith.addf %182, %184 : vector<8x32xf32>
    %186 = arith.addf %185, %2 : vector<8x32xf32>
    %cst_120 = arith.constant dense<0.000000e+00> : vector<8xf32>
    %187 = vector.multi_reduction <add>, %186, %cst_120 [1] : vector<8x32xf32> to vector<8xf32>
    %188 = vector.shape_cast %187 : vector<8xf32> to vector<8x1xf32>
    %cst_121 = arith.constant 3.200000e+01 : f32
    %189 = vector.broadcast %cst_121 : f32 to vector<8x1xf32>
    %190 = arith.divf %188, %189 : vector<8x1xf32>
    %191 = vector.broadcast %190 : vector<8x1xf32> to vector<8x32xf32>
    %192 = arith.subf %186, %191 : vector<8x32xf32>
    %193 = arith.mulf %192, %192 : vector<8x32xf32>
    %cst_122 = arith.constant dense<0.000000e+00> : vector<8xf32>
    %194 = vector.multi_reduction <add>, %193, %cst_122 [1] : vector<8x32xf32> to vector<8xf32>
    %195 = vector.shape_cast %194 : vector<8xf32> to vector<8x1xf32>
    %cst_123 = arith.constant 3.200000e+01 : f32
    %196 = vector.broadcast %cst_123 : f32 to vector<8x1xf32>
    %197 = arith.divf %195, %196 : vector<8x1xf32>
    %198 = vector.broadcast %190 : vector<8x1xf32> to vector<8x32xf32>
    %199 = arith.subf %186, %198 : vector<8x32xf32>
    %cst_124 = arith.constant 9.99999996E-13 : f32
    %200 = vector.broadcast %cst_124 : f32 to vector<8x1xf32>
    %201 = arith.addf %197, %200 : vector<8x1xf32>
    %202 = math.rsqrt %201 : vector<8x1xf32>
    %203 = vector.broadcast %202 : vector<8x1xf32> to vector<8x32xf32>
    %204 = arith.mulf %199, %203 : vector<8x32xf32>
    %c0_125 = arith.constant 0 : index
    %c0_126 = arith.constant 0 : index
    %205 = vector.load %arg11[%c0_125, %c0_126] : memref<1x32xf32, #tpu.memory_space<vmem>>, vector<1x32xf32>
    %206 = vector.broadcast %205 : vector<1x32xf32> to vector<8x32xf32>
    %207 = arith.mulf %204, %206 : vector<8x32xf32>
    %c0_127 = arith.constant 0 : index
    %c0_128 = arith.constant 0 : index
    %208 = vector.load %arg12[%c0_127, %c0_128] : memref<1x32xf32, #tpu.memory_space<vmem>>, vector<1x32xf32>
    %209 = vector.broadcast %208 : vector<1x32xf32> to vector<8x32xf32>
    %210 = arith.addf %207, %209 : vector<8x32xf32>
    %211 = arith.truncf %210 : vector<8x32xf32> to vector<8x32xbf16>
    %c0_129 = arith.constant 0 : index
    %c0_130 = arith.constant 0 : index
    %212 = vector.load %arg13[%c0_129, %c0_130] : memref<32x64xbf16, #tpu.memory_space<vmem>>, vector<32x64xbf16>
    %cst_131 = arith.constant dense<0.000000e+00> : vector<8x64xf32>
    %213 = tpu.matmul %211, %212, %cst_131 {dimension_numbers = #tpu.dot_dimension_numbers<[1], [0], [0], [1], [0, 0, 1, 1], [], []>} : vector<8x32xbf16>, vector<32x64xbf16>, vector<8x64xf32> -> vector<8x64xf32>
    %c0_132 = arith.constant 0 : index
    %c0_133 = arith.constant 0 : index
    %214 = vector.load %arg14[%c0_132, %c0_133] : memref<1x64xf32, #tpu.memory_space<vmem>>, vector<1x64xf32>
    %215 = vector.broadcast %214 : vector<1x64xf32> to vector<8x64xf32>
    %216 = arith.addf %213, %215 : vector<8x64xf32>
    %cst_134 = arith.constant 5.000000e-01 : f32
    %217 = vector.broadcast %cst_134 : f32 to vector<8x64xf32>
    %218 = arith.mulf %217, %216 : vector<8x64xf32>
    %cst_135 = arith.constant 4.471500e-02 : f32
    %219 = vector.broadcast %cst_135 : f32 to vector<8x64xf32>
    %220 = arith.mulf %219, %216 : vector<8x64xf32>
    %221 = arith.mulf %220, %216 : vector<8x64xf32>
    %222 = arith.mulf %221, %216 : vector<8x64xf32>
    %223 = arith.addf %216, %222 : vector<8x64xf32>
    %cst_136 = arith.constant 0.797884583 : f32
    %224 = vector.broadcast %cst_136 : f32 to vector<8x64xf32>
    %225 = arith.mulf %224, %223 : vector<8x64xf32>
    %226 = math.tanh %225 : vector<8x64xf32>
    %cst_137 = arith.constant 1.000000e+00 : f32
    %227 = vector.broadcast %cst_137 : f32 to vector<8x64xf32>
    %228 = arith.addf %227, %226 : vector<8x64xf32>
    %229 = arith.mulf %218, %228 : vector<8x64xf32>
    %230 = arith.truncf %229 : vector<8x64xf32> to vector<8x64xbf16>
    %c0_138 = arith.constant 0 : index
    %c0_139 = arith.constant 0 : index
    %231 = vector.load %arg15[%c0_138, %c0_139] : memref<64x32xbf16, #tpu.memory_space<vmem>>, vector<64x32xbf16>
    %cst_140 = arith.constant dense<0.000000e+00> : vector<8x32xf32>
    %232 = tpu.matmul %230, %231, %cst_140 {dimension_numbers = #tpu.dot_dimension_numbers<[1], [0], [0], [1], [0, 0, 1, 1], [], []>} : vector<8x64xbf16>, vector<64x32xbf16>, vector<8x32xf32> -> vector<8x32xf32>
    %c0_141 = arith.constant 0 : index
    %c0_142 = arith.constant 0 : index
    %233 = vector.load %arg16[%c0_141, %c0_142] : memref<1x32xf32, #tpu.memory_space<vmem>>, vector<1x32xf32>
    %234 = vector.broadcast %233 : vector<1x32xf32> to vector<8x32xf32>
    %235 = arith.addf %232, %234 : vector<8x32xf32>
    %236 = arith.addf %235, %210 : vector<8x32xf32>
    %cst_143 = arith.constant dense<0.000000e+00> : vector<8xf32>
    %237 = vector.multi_reduction <add>, %236, %cst_143 [1] : vector<8x32xf32> to vector<8xf32>
    %238 = vector.shape_cast %237 : vector<8xf32> to vector<8x1xf32>
    %cst_144 = arith.constant 3.200000e+01 : f32
    %239 = vector.broadcast %cst_144 : f32 to vector<8x1xf32>
    %240 = arith.divf %238, %239 : vector<8x1xf32>
    %241 = vector.broadcast %240 : vector<8x1xf32> to vector<8x32xf32>
    %242 = arith.subf %236, %241 : vector<8x32xf32>
    %243 = arith.mulf %242, %242 : vector<8x32xf32>
    %cst_145 = arith.constant dense<0.000000e+00> : vector<8xf32>
    %244 = vector.multi_reduction <add>, %243, %cst_145 [1] : vector<8x32xf32> to vector<8xf32>
    %245 = vector.shape_cast %244 : vector<8xf32> to vector<8x1xf32>
    %cst_146 = arith.constant 3.200000e+01 : f32
    %246 = vector.broadcast %cst_146 : f32 to vector<8x1xf32>
    %247 = arith.divf %245, %246 : vector<8x1xf32>
    %248 = vector.broadcast %240 : vector<8x1xf32> to vector<8x32xf32>
    %249 = arith.subf %236, %248 : vector<8x32xf32>
    %cst_147 = arith.constant 9.99999996E-13 : f32
    %250 = vector.broadcast %cst_147 : f32 to vector<8x1xf32>
    %251 = arith.addf %247, %250 : vector<8x1xf32>
    %252 = math.rsqrt %251 : vector<8x1xf32>
    %253 = vector.broadcast %252 : vector<8x1xf32> to vector<8x32xf32>
    %254 = arith.mulf %249, %253 : vector<8x32xf32>
    %c0_148 = arith.constant 0 : index
    %c0_149 = arith.constant 0 : index
    %255 = vector.load %arg17[%c0_148, %c0_149] : memref<1x32xf32, #tpu.memory_space<vmem>>, vector<1x32xf32>
    %256 = vector.broadcast %255 : vector<1x32xf32> to vector<8x32xf32>
    %257 = arith.mulf %254, %256 : vector<8x32xf32>
    %c0_150 = arith.constant 0 : index
    %c0_151 = arith.constant 0 : index
    %258 = vector.load %arg18[%c0_150, %c0_151] : memref<1x32xf32, #tpu.memory_space<vmem>>, vector<1x32xf32>
    %259 = vector.broadcast %258 : vector<1x32xf32> to vector<8x32xf32>
    %260 = arith.addf %257, %259 : vector<8x32xf32>
    %261 = arith.truncf %260 : vector<8x32xf32> to vector<8x32xbf16>
    %c0_152 = arith.constant 0 : index
    %c0_153 = arith.constant 0 : index
    %c0_154 = arith.constant 0 : index
    %262 = vector.load %arg19[%c0_152, %c0_153, %c0_154] : memref<1x8x32xbf16, #tpu.memory_space<vmem>>, vector<1x8x32xbf16>
    %263 = vector.shape_cast %262 : vector<1x8x32xbf16> to vector<8x32xbf16>
    %264 = vector.shape_cast %261 : vector<8x32xbf16> to vector<1x8x32xbf16>
    tpu.vector_store %arg19[%c0_152, %c0_153, %c0_154], %264 {strides = array<i32>} : memref<1x8x32xbf16, #tpu.memory_space<vmem>>, vector<1x8x32xbf16>,
    return
  }
  func.func @transform_0(%arg0: i32) -> (i32, i32, i32) {
    %c0_i32 = arith.constant 0 : i32
    %c0_i32_0 = arith.constant 0 : i32
    %c0_i32_1 = arith.constant 0 : i32
    return %arg0, %c0_i32, %c0_i32_0 : i32, i32, i32
  }
  func.func @transform_1(%arg0: i32) -> (i32, i32, i32) {
    %c0_i32 = arith.constant 0 : i32
    %c0_i32_0 = arith.constant 0 : i32
    %c0_i32_1 = arith.constant 0 : i32
    return %arg0, %c0_i32, %c0_i32_0 : i32, i32, i32
  }
  func.func @transform_2(%arg0: i32) -> (i32, i32, i32) {
    %c0_i32 = arith.constant 0 : i32
    %c0_i32_0 = arith.constant 0 : i32
    %c0_i32_1 = arith.constant 0 : i32
    %c0_i32_2 = arith.constant 0 : i32
    return %c0_i32, %c0_i32_0, %c0_i32_1 : i32, i32, i32
  }
  func.func @transform_3(%arg0: i32) -> (i32, i32, i32) {
    %c0_i32 = arith.constant 0 : i32
    %c0_i32_0 = arith.constant 0 : i32
    %c0_i32_1 = arith.constant 0 : i32
    %c0_i32_2 = arith.constant 0 : i32
    return %c0_i32, %c0_i32_0, %c0_i32_1 : i32, i32, i32
  }
  func.func @transform_4(%arg0: i32) -> (i32, i32, i32) {
    %c0_i32 = arith.constant 0 : i32
    %c0_i32_0 = arith.constant 0 : i32
    %c0_i32_1 = arith.constant 0 : i32
    %c0_i32_2 = arith.constant 0 : i32
    return %c0_i32, %c0_i32_0, %c0_i32_1 : i32, i32, i32
  }
  func.func @transform_5(%arg0: i32) -> (i32, i32, i32) {
    %c0_i32 = arith.constant 0 : i32
    %c0_i32_0 = arith.constant 0 : i32
    %c0_i32_1 = arith.constant 0 : i32
    %c0_i32_2 = arith.constant 0 : i32
    return %c0_i32, %c0_i32_0, %c0_i32_1 : i32, i32, i32
  }
  func.func @transform_6(%arg0: i32) -> (i32, i32, i32) {
    %c0_i32 = arith.constant 0 : i32
    %c0_i32_0 = arith.constant 0 : i32
    %c0_i32_1 = arith.constant 0 : i32
    %c0_i32_2 = arith.constant 0 : i32
    return %c0_i32, %c0_i32_0, %c0_i32_1 : i32, i32, i32
  }
  func.func @transform_7(%arg0: i32) -> (i32, i32, i32) {
    %c0_i32 = arith.constant 0 : i32
    %c0_i32_0 = arith.constant 0 : i32
    %c0_i32_1 = arith.constant 0 : i32
    %c0_i32_2 = arith.constant 0 : i32
    return %c0_i32, %c0_i32_0, %c0_i32_1 : i32, i32, i32
  }
  func.func @transform_8(%arg0: i32) -> (i32, i32, i32) {
    %c0_i32 = arith.constant 0 : i32
    %c0_i32_0 = arith.constant 0 : i32
    %c0_i32_1 = arith.constant 0 : i32
    %c0_i32_2 = arith.constant 0 : i32
    return %c0_i32, %c0_i32_0, %c0_i32_1 : i32, i32, i32
  }
  func.func @transform_9(%arg0: i32) -> (i32, i32) {
    %c0_i32 = arith.constant 0 : i32
    %c0_i32_0 = arith.constant 0 : i32
    %c0_i32_1 = arith.constant 0 : i32
    return %c0_i32, %c0_i32_0 : i32, i32
  }
  func.func @transform_10(%arg0: i32) -> (i32, i32) {
    %c0_i32 = arith.constant 0 : i32
    %c0_i32_0 = arith.constant 0 : i32
    %c0_i32_1 = arith.constant 0 : i32
    return %c0_i32, %c0_i32_0 : i32, i32
  }
  func.func @transform_11(%arg0: i32) -> (i32, i32) {
    %c0_i32 = arith.constant 0 : i32
    %c0_i32_0 = arith.constant 0 : i32
    %c0_i32_1 = arith.constant 0 : i32
    return %c0_i32, %c0_i32_0 : i32, i32
  }
  func.func @transform_12(%arg0: i32) -> (i32, i32) {
    %c0_i32 = arith.constant 0 : i32
    %c0_i32_0 = arith.constant 0 : i32
    %c0_i32_1 = arith.constant 0 : i32
    return %c0_i32, %c0_i32_0 : i32, i32
  }
  func.func @transform_13(%arg0: i32) -> (i32, i32) {
    %c0_i32 = arith.constant 0 : i32
    %c0_i32_0 = arith.constant 0 : i32
    %c0_i32_1 = arith.constant 0 : i32
    return %c0_i32, %c0_i32_0 : i32, i32
  }
  func.func @transform_14(%arg0: i32) -> (i32, i32) {
    %c0_i32 = arith.constant 0 : i32
    %c0_i32_0 = arith.constant 0 : i32
    %c0_i32_1 = arith.constant 0 : i32
    return %c0_i32, %c0_i32_0 : i32, i32
  }
  func.func @transform_15(%arg0: i32) -> (i32, i32) {
    %c0_i32 = arith.constant 0 : i32
    %c0_i32_0 = arith.constant 0 : i32
    %c0_i32_1 = arith.constant 0 : i32
    return %c0_i32, %c0_i32_0 : i32, i32
  }
  func.func @transform_16(%arg0: i32) -> (i32, i32) {
    %c0_i32 = arith.constant 0 : i32
    %c0_i32_0 = arith.constant 0 : i32
    %c0_i32_1 = arith.constant 0 : i32
    return %c0_i32, %c0_i32_0 : i32, i32
  }
  func.func @transform_17(%arg0: i32) -> (i32, i32) {
    %c0_i32 = arith.constant 0 : i32
    %c0_i32_0 = arith.constant 0 : i32
    %c0_i32_1 = arith.constant 0 : i32
    return %c0_i32, %c0_i32_0 : i32, i32
  }
  func.func @transform_18(%arg0: i32) -> (i32, i32, i32) {
    %c0_i32 = arith.constant 0 : i32
    %c0_i32_0 = arith.constant 0 : i32
    %c0_i32_1 = arith.constant 0 : i32
    return %arg0, %c0_i32, %c0_i32_0 : i32, i32, i32
  }
}

module attributes {stable_mosaic.version = 11 : i64} {
  func.func @_pooler_head_kernel(%arg0: i32, %arg1: memref<2x32xbf16, #tpu.memory_space<vmem>>, %arg2: memref<32x32xbf16, #tpu.memory_space<vmem>>, %arg3: memref<1x32xf32, #tpu.memory_space<vmem>>, %arg4: memref<32x128xbf16, #tpu.memory_space<vmem>>, %arg5: memref<1x128xf32, #tpu.memory_space<vmem>>, %arg6: memref<2x128xf32, #tpu.memory_space<vmem>>) attributes {dimension_semantics = [#tpu.dimension_semantics<arbitrary>], iteration_bounds = array<i64: 1>, scalar_prefetch = 0 : i64, scratch_operands = 0 : i64, tpu.core_type = #tpu.core_type<tc>, window_params = [{pipeline_mode = #tpu.pipeline_mode<synchronous>, transform_indices = @transform_0, window_bounds = array<i64: 2, 32>}, {pipeline_mode = #tpu.pipeline_mode<synchronous>, transform_indices = @transform_1, window_bounds = array<i64: 32, 32>}, {pipeline_mode = #tpu.pipeline_mode<synchronous>, transform_indices = @transform_2, window_bounds = array<i64: 1, 32>}, {pipeline_mode = #tpu.pipeline_mode<synchronous>, transform_indices = @transform_3, window_bounds = array<i64: 32, 128>}, {pipeline_mode = #tpu.pipeline_mode<synchronous>, transform_indices = @transform_4, window_bounds = array<i64: 1, 128>}, {pipeline_mode = #tpu.pipeline_mode<synchronous>, transform_indices = @transform_5, window_bounds = array<i64: 2, 128>}]} {
    %c0 = arith.constant 0 : index
    %c0_0 = arith.constant 0 : index
    %0 = vector.load %arg1[%c0, %c0_0] : memref<2x32xbf16, #tpu.memory_space<vmem>>, vector<2x32xbf16>
    %c0_1 = arith.constant 0 : index
    %c0_2 = arith.constant 0 : index
    %1 = vector.load %arg2[%c0_1, %c0_2] : memref<32x32xbf16, #tpu.memory_space<vmem>>, vector<32x32xbf16>
    %cst = arith.constant dense<0.000000e+00> : vector<2x32xf32>
    %2 = tpu.matmul %0, %1, %cst {dimension_numbers = #tpu.dot_dimension_numbers<[1], [0], [0], [1], [0, 0, 1, 1], [], []>} : vector<2x32xbf16>, vector<32x32xbf16>, vector<2x32xf32> -> vector<2x32xf32>
    %c0_3 = arith.constant 0 : index
    %c0_4 = arith.constant 0 : index
    %3 = vector.load %arg3[%c0_3, %c0_4] : memref<1x32xf32, #tpu.memory_space<vmem>>, vector<1x32xf32>
    %4 = vector.broadcast %3 : vector<1x32xf32> to vector<2x32xf32>
    %5 = arith.addf %2, %4 : vector<2x32xf32>
    %6 = math.tanh %5 : vector<2x32xf32>
    %cst_5 = arith.constant 0.000000e+00 : f32
    %7 = vector.broadcast %cst_5 : f32 to vector<2x32xf32>
    %8 = arith.maximumf %6, %7 : vector<2x32xf32>
    %9 = arith.truncf %8 : vector<2x32xf32> to vector<2x32xbf16>
    %c0_6 = arith.constant 0 : index
    %c0_7 = arith.constant 0 : index
    %10 = vector.load %arg4[%c0_6, %c0_7] : memref<32x128xbf16, #tpu.memory_space<vmem>>, vector<32x128xbf16>
    %cst_8 = arith.constant dense<0.000000e+00> : vector<2x128xf32>
    %11 = tpu.matmul %9, %10, %cst_8 {dimension_numbers = #tpu.dot_dimension_numbers<[1], [0], [0], [1], [0, 0, 1, 1], [], []>} : vector<2x32xbf16>, vector<32x128xbf16>, vector<2x128xf32> -> vector<2x128xf32>
    %c0_9 = arith.constant 0 : index
    %c0_10 = arith.constant 0 : index
    %12 = vector.load %arg5[%c0_9, %c0_10] : memref<1x128xf32, #tpu.memory_space<vmem>>, vector<1x128xf32>
    %13 = vector.broadcast %12 : vector<1x128xf32> to vector<2x128xf32>
    %14 = arith.addf %11, %13 : vector<2x128xf32>
    %c0_11 = arith.constant 0 : index
    %c0_12 = arith.constant 0 : index
    %15 = vector.load %arg6[%c0_11, %c0_12] : memref<2x128xf32, #tpu.memory_space<vmem>>, vector<2x128xf32>
    tpu.vector_store %arg6[%c0_11, %c0_12], %14 {strides = array<i32>} : memref<2x128xf32, #tpu.memory_space<vmem>>, vector<2x128xf32>,
    return
  }
  func.func @transform_0(%arg0: i32) -> (i32, i32) {
    %c0_i32 = arith.constant 0 : i32
    %c0_i32_0 = arith.constant 0 : i32
    %c0_i32_1 = arith.constant 0 : i32
    return %c0_i32, %c0_i32_0 : i32, i32
  }
  func.func @transform_1(%arg0: i32) -> (i32, i32) {
    %c0_i32 = arith.constant 0 : i32
    %c0_i32_0 = arith.constant 0 : i32
    %c0_i32_1 = arith.constant 0 : i32
    return %c0_i32, %c0_i32_0 : i32, i32
  }
  func.func @transform_2(%arg0: i32) -> (i32, i32) {
    %c0_i32 = arith.constant 0 : i32
    %c0_i32_0 = arith.constant 0 : i32
    %c0_i32_1 = arith.constant 0 : i32
    return %c0_i32, %c0_i32_0 : i32, i32
  }
  func.func @transform_3(%arg0: i32) -> (i32, i32) {
    %c0_i32 = arith.constant 0 : i32
    %c0_i32_0 = arith.constant 0 : i32
    %c0_i32_1 = arith.constant 0 : i32
    return %c0_i32, %c0_i32_0 : i32, i32
  }
  func.func @transform_4(%arg0: i32) -> (i32, i32) {
    %c0_i32 = arith.constant 0 : i32
    %c0_i32_0 = arith.constant 0 : i32
    %c0_i32_1 = arith.constant 0 : i32
    return %c0_i32, %c0_i32_0 : i32, i32
  }
  func.func @transform_5(%arg0: i32) -> (i32, i32) {
    %c0_i32 = arith.constant 0 : i32
    %c0_i32_0 = arith.constant 0 : i32
    %c0_i32_1 = arith.constant 0 : i32
    return %c0_i32, %c0_i32_0 : i32, i32
  }
}

</mosaic_0001>

<llo_original>
// kernel: bert_class_forward.4
$region0: #{bert_class_forward.4}
  #allocation0 [shape = 'u32[]', space=smem, size = 0x4, offset = 0x4, fixed_abs, tag = 'smem constant byte address 0x4 - core index']
  #allocation1 [shape = 'u32[144,128]{1,0:T(1,128)}', space=vmem, size = 0x12000, scoped, tag = 'internal scratch']
  %s0 = inlined_call_operand.vmem [shape: f32[16,32], index: 0, kind: input, shape index: {}]
  %s1 = inlined_call_operand.vmem [shape: f32[1,32], index: 1, kind: input, shape index: {}]
  %s2 = inlined_call_operand.vmem [shape: f32[1,32], index: 2, kind: input, shape index: {}]
  %s3 = inlined_call_operand.vmem [shape: bf16[16,32], index: 3, kind: output, shape index: {}]
  %s4 = sld [smem:[#allocation0]]
  $region22: #{bert_class_forward.4} parent=0
    _
  %s6 = ssub.s32 1, %s4
  %s7 = scalar_select 0, %s6, %s4
  // Predicated region
  $region2: #{bert_class_forward.4} parent=0 // pred_check
    _
  $region3: #{bert_class_forward.4} parent=0 // pred_check_branch
    %9 = sbr.rel (0) target = $region5
  $region4: #{bert_class_forward.4} parent=0 // pred_region
    _
  $region5: #{bert_class_forward.4} parent=0 // pred_fallthru
    _
  // Predicated region
  $region6: #{bert_class_forward.4} parent=0 // pred_check
    _
  $region7: #{bert_class_forward.4} parent=0 // pred_check_branch
    %11 = sbr.rel (0) target = $region9
  $region8: #{bert_class_forward.4} parent=0 // pred_region
    _
  $region9: #{bert_class_forward.4} parent=0 // pred_fallthru
    _
  // Predicated region
  $region10: #{bert_class_forward.4} parent=0 // pred_check
    _
  $region11: #{bert_class_forward.4} parent=0 // pred_check_branch
    %13 = sbr.rel (0) target = $region13
  $region12: #{bert_class_forward.4} parent=0 // pred_region
    _
  $region13: #{bert_class_forward.4} parent=0 // pred_fallthru
    _
  %v14 = vld [vmem:[%s0] sm:$0xff]
  %v15 = vld [vmem:[%s0 + $0x8] sm:$0xff]
  %vm16 = vcmask 261120
  %v17 = vsel %vm16, %v14, 0.0
  %18 = vadd.xlane.f32.xlu0 %v17
  %v19 = vpop.xlane.xlu0 %18
  %v20 = vsel %vm16, %v15, 0.0
  %21 = vadd.xlane.f32.xlu0 %v20
  %v22 = vpop.xlane.xlu0 %21
  %v23 = vrcp.pop 32.0
  %v24 = vmul.f32 %v19, %v23
  %v25 = vmul.f32 %v22, %v23
  %v26 = vsub.f32 %v14, %v24
  %v27 = vsub.f32 %v15, %v25
  %v28 = vmul.f32 %v26, %v26
  %v29 = vmul.f32 %v27, %v27
  %v30 = vsel %vm16, %v28, 0.0
  %31 = vadd.xlane.f32.xlu0 %v30
  %v32 = vpop.xlane.xlu0 %31
  %v33 = vsel %vm16, %v29, 0.0
  %34 = vadd.xlane.f32.xlu0 %v33
  %v35 = vpop.xlane.xlu0 %34
  %v36 = vmul.f32 %v32, %v23
  %v37 = vmul.f32 %v35, %v23
  %v38 = vadd.f32 %v36, 1e-12
  %v39 = vadd.f32 %v37, 1e-12
  %v40 = vrsqrt.pop %v38
  %v41 = vrsqrt.pop %v39
  %v42 = vmul.f32 %v26, %v40
  %v43 = vmul.f32 %v27, %v41
  %v44 = vld [vmem:[%s1] sm:$0x1]
  %v46 = vlaneseq
  %v47 = vshrl.u32 %v46, 7
  %v48 = vsub.s32 0, %v47
  %v49 = vrot.slane %v44, %v48
  %v51 = vmul.f32 %v42, %v49
  %v52 = vmul.f32 %v43, %v49
  %v53 = vld [vmem:[%s2] sm:$0x1]
  %v55 = vlaneseq
  %v56 = vshrl.u32 %v55, 7
  %v57 = vsub.s32 0, %v56
  %v58 = vrot.slane %v53, %v57
  %v60 = vadd.f32 %v51, %v58
  %v61 = vadd.f32 %v52, %v58
  %v62 = vpack.c.bf16 %v61, %v60
  %v64 = vunpack.c.l.b16 %v62
  %v65 = vunpack.c.h.b16 %v62
  %v66 = vpack.c.b16 %v64, %v64
  %v67 = vpack.c.b16 %v65, %v65
  %vm70 = vcmask 257024
  %71 = vst.msk [vmem:[%s3] sm:$0xf] %vm70, %v66
  %72 = vst.msk [vmem:[%s3 + $0x4] sm:$0xf] %vm70, %v67
  // Predicated region
  $region14: #{bert_class_forward.4} parent=0 // pred_check
    _
  $region15: #{bert_class_forward.4} parent=0 // pred_check_branch
    %74 = sbr.rel (0) target = $region17
  $region16: #{bert_class_forward.4} parent=0 // pred_region
    _
  $region17: #{bert_class_forward.4} parent=0 // pred_fallthru
    _
  // Predicated region
  $region18: #{bert_class_forward.4} parent=0 // pred_check
    _
  $region19: #{bert_class_forward.4} parent=0 // pred_check_branch
    %76 = sbr.rel (0) target = $region21
  $region20: #{bert_class_forward.4} parent=0 // pred_region
    _
  $region21: #{bert_class_forward.4} parent=0 // pred_fallthru
    _

// kernel: bert_class_forward.7
$region0: #{bert_class_forward.7}
  #allocation0 [shape = 'u32[]', space=smem, size = 0x4, offset = 0x4, fixed_abs, tag = 'smem constant byte address 0x4 - core index']
  #allocation1 [shape = 'u32[144,128]{1,0:T(1,128)}', space=vmem, size = 0x12000, scoped, tag = 'internal scratch']
  %s0 = inlined_call_operand.vmem [shape: bf16[2,32], index: 0, kind: input, shape index: {}]
  %s1 = inlined_call_operand.vmem [shape: bf16[32,32], index: 1, kind: input, shape index: {}]
  %s2 = inlined_call_operand.vmem [shape: f32[1,32], index: 2, kind: input, shape index: {}]
  %s3 = inlined_call_operand.vmem [shape: bf16[32,128], index: 3, kind: input, shape index: {}]
  %s4 = inlined_call_operand.vmem [shape: f32[1,128], index: 4, kind: input, shape index: {}]
  %s5 = inlined_call_operand.hbm [shape: f32[2,128], index: 5, kind: output, shape index: {}]
  %s6 = sld [smem:[#allocation0]]
  $region30: #{bert_class_forward.7} parent=0
    _
  %s8 = ssub.s32 1, %s6
  %s9 = scalar_select 0, %s8, %s6
  $region1: #{bert_class_forward.7} parent=0
    #allocation2 [shape = 'u8[1024]{0}', space=vmem, size = 0x400, scoped, tag = 'output window, operand 0, single buffered']
    #allocation3 [shape = 's32[1]{0}', space=sflag, size = 0x4, scoped, tag = 'scoped memory for bert_class_forward.7']
    %10 = vsyncpa [#allocation3], 0
    // Predicated region
    $region2: #{bert_class_forward.7} parent=1 // pred_check
      _
    $region3: #{bert_class_forward.7} parent=1 // pred_check_branch
      %12 = sbr.rel (0) target = $region5
    $region4: #{bert_class_forward.7} parent=1 // pred_region
      _
    $region5: #{bert_class_forward.7} parent=1 // pred_fallthru
      _
    // Predicated region
    $region6: #{bert_class_forward.7} parent=1 // pred_check
      _
    $region7: #{bert_class_forward.7} parent=1 // pred_check_branch
      %14 = sbr.rel (0) target = $region9
    $region8: #{bert_class_forward.7} parent=1 // pred_region
      _
    $region9: #{bert_class_forward.7} parent=1 // pred_fallthru
      _
    // Predicated region
    $region10: #{bert_class_forward.7} parent=1 // pred_check
      _
    $region11: #{bert_class_forward.7} parent=1 // pred_check_branch
      %16 = sbr.rel (0) target = $region13
    $region12: #{bert_class_forward.7} parent=1 // pred_region
      _
    $region13: #{bert_class_forward.7} parent=1 // pred_fallthru
      _
    // Predicated region
    $region14: #{bert_class_forward.7} parent=1 // pred_check
      _
    $region15: #{bert_class_forward.7} parent=1 // pred_check_branch
      %18 = sbr.rel (0) target = $region17
    $region16: #{bert_class_forward.7} parent=1 // pred_region
      _
    $region17: #{bert_class_forward.7} parent=1 // pred_fallthru
      _
    // Predicated region
    $region18: #{bert_class_forward.7} parent=1 // pred_check
      _
    $region19: #{bert_class_forward.7} parent=1 // pred_check_branch
      %20 = sbr.rel (0) target = $region21
    $region20: #{bert_class_forward.7} parent=1 // pred_region
      _
    $region21: #{bert_class_forward.7} parent=1 // pred_fallthru
      _
    %v22 = vld [vmem:[%s0] sm:$0x1]
    %v23 = vld [vmem:[%s1] sm:$0xf]
    %v24 = vld [vmem:[%s1 + $0x4] sm:$0xf]
    %v25 = vld [vmem:[%s1 + $0x8] sm:$0xf]
    %v26 = vld [vmem:[%s1 + $0xc] sm:$0xf]
    %v27 = vld [vmem:[%s2] sm:$0x1]
    %v29 = vlaneseq
    %v30 = vshrl.u32 %v29, 7
    %v31 = vsub.s32 0, %v30
    %v32 = vrot.slane %v27, %v31
    %v38 = vunpack.c.l.b16 %v23
    %v39 = vunpack.c.l.b16 %v24
    %v40 = vunpack.c.l.b16 %v25
    %v41 = vunpack.c.l.b16 %v26
    %v42 = vpack.c.b16 %v39, %v38
    %v43 = vpack.c.b16 %v41, %v40
    %vm46 = vcmask 261120
    %v48 = vsel %vm46, %v22, 0
    %50 = vmatprep.subr.bf16.mxu0 0
    %51 = vmatpush1.bf16.msra.mxu0 %v42
    %52 = vmatprep.subr.bf16.mxu0 0
    %53 = vmatpush1.bf16.msra.mxu0 %v43
    %54 = vmatprep.subr.bf16.mxu0 0
    %55 = vmatpush1.bf16.msra.mxu0 0
    %56 = vmatprep.subr.bf16.mxu0 0
    %57 = vmatpush1.bf16.msra.mxu0 0
    %58 = vmatprep.subr.bf16.mxu0 0
    %59 = vmatpush1.bf16.msra.mxu0 0
    %60 = vmatprep.subr.bf16.mxu0 0
    %61 = vmatpush1.bf16.msra.mxu0 0
    %62 = vmatprep.subr.bf16.mxu0 0
    %63 = vmatpush1.bf16.msra.mxu0 0
    %64 = vmatprep.subr.bf16.mxu0 0
    %65 = vmatpush1.bf16.msra.mxu0 0
    %66 = vmatprep.subr.bf16.mxu0 0
    %67 = vmatpush1.bf16.msra.mxu0 0
    %68 = vmatprep.subr.bf16.mxu0 0
    %69 = vmatpush1.bf16.msra.mxu0 0
    %70 = vmatprep.subr.bf16.mxu0 0
    %71 = vmatpush1.bf16.msra.mxu0 0
    %72 = vmatprep.subr.bf16.mxu0 0
    %73 = vmatpush1.bf16.msra.mxu0 0
    %74 = vmatprep.subr.bf16.mxu0 0
    %75 = vmatpush1.bf16.msra.mxu0 0
    %76 = vmatprep.subr.bf16.mxu0 0
    %77 = vmatpush1.bf16.msra.mxu0 0
    %78 = vmatprep.subr.bf16.mxu0 0
    %79 = vmatpush1.bf16.msra.mxu0 0
    %80 = vmatprep.subr.bf16.mxu0 0
    %81 = vmatpush1.bf16.msra.mxu0 0
    %82 = vmatprep.mubr.bf16.mxu0 0
    %83 = vmatmul.mubr.bf16.gmra.mrb[0].mxu0 %v48
    %v84 = vpop.f32.mrb[0].mxu0
    %v85 = vadd.f32 %v32, %v84
    %v86 = vpop.f32.mrb[0].mxu0
    %v87 = vpop.f32.mrb[0].mxu0
    %v88 = vpop.f32.mrb[0].mxu0
    %89 = vdwg.mxu0
    %v90 = vtanh.pop %v85
    %v91 = vmax.f32 %v90, 0.0
    %v92 = vpack.c.bf16 %v91, %v91
    %v93 = vld [vmem:[%s3] sm:$0xf]
    %v94 = vld [vmem:[%s3 + $0x4] sm:$0xf]
    %v95 = vld [vmem:[%s3 + $0x8] sm:$0xf]
    %v96 = vld [vmem:[%s3 + $0xc] sm:$0xf]
    %v97 = vld [vmem:[%s4] sm:$0x1]
    %v99 = vlaneseq
    %v100 = vshrl.u32 %v99, 7
    %v101 = vsub.s32 0, %v100
    %v102 = vrot.slane %v97, %v101
    %v108 = vunpack.c.l.b16 %v93
    %v109 = vunpack.c.l.b16 %v94
    %v110 = vunpack.c.l.b16 %v95
    %v111 = vunpack.c.l.b16 %v96
    %v112 = vpack.c.b16 %v109, %v108
    %v113 = vpack.c.b16 %v111, %v110
    %v117 = vsel %vm46, %v92, 0
    %119 = vmatprep.subr.bf16.mxu0 0
    %120 = vmatpush1.bf16.msra.mxu0 %v112
    %121 = vmatprep.subr.bf16.mxu0 0
    %122 = vmatpush1.bf16.msra.mxu0 %v113
    %123 = vmatprep.subr.bf16.mxu0 0
    %124 = vmatpush1.bf16.msra.mxu0 0
    %125 = vmatprep.subr.bf16.mxu0 0
    %126 = vmatpush1.bf16.msra.mxu0 0
    %127 = vmatprep.subr.bf16.mxu0 0
    %128 = vmatpush1.bf16.msra.mxu0 0
    %129 = vmatprep.subr.bf16.mxu0 0
    %130 = vmatpush1.bf16.msra.mxu0 0
    %131 = vmatprep.subr.bf16.mxu0 0
    %132 = vmatpush1.bf16.msra.mxu0 0
    %133 = vmatprep.subr.bf16.mxu0 0
    %134 = vmatpush1.bf16.msra.mxu0 0
    %135 = vmatprep.subr.bf16.mxu0 0
    %136 = vmatpush1.bf16.msra.mxu0 0
    %137 = vmatprep.subr.bf16.mxu0 0
    %138 = vmatpush1.bf16.msra.mxu0 0
    %139 = vmatprep.subr.bf16.mxu0 0
    %140 = vmatpush1.bf16.msra.mxu0 0
    %141 = vmatprep.subr.bf16.mxu0 0
    %142 = vmatpush1.bf16.msra.mxu0 0
    %143 = vmatprep.subr.bf16.mxu0 0
    %144 = vmatpush1.bf16.msra.mxu0 0
    %145 = vmatprep.subr.bf16.mxu0 0
    %146 = vmatpush1.bf16.msra.mxu0 0
    %147 = vmatprep.subr.bf16.mxu0 0
    %148 = vmatpush1.bf16.msra.mxu0 0
    %149 = vmatprep.subr.bf16.mxu0 0
    %150 = vmatpush1.bf16.msra.mxu0 0
    %151 = vmatprep.mubr.bf16.mxu0 0
    %152 = vmatmul.mubr.bf16.gmra.mrb[0].mxu0 %v117
    %v153 = vpop.f32.mrb[0].mxu0
    %v154 = vadd.f32 %v102, %v153
    %v155 = vpop.f32.mrb[0].mxu0
    %v156 = vpop.f32.mrb[0].mxu0
    %v157 = vpop.f32.mrb[0].mxu0
    %158 = vdwg.mxu0
    %159 = vst [vmem:[#allocation2] sm:$0x3] %v154
    // Predicated region
    $region22: #{bert_class_forward.7} parent=1 // pred_check
      _
    $region23: #{bert_class_forward.7} parent=1 // pred_check_branch
      %161 = sbr.rel (0) target = $region25
    $region24: #{bert_class_forward.7} parent=1 // pred_region
      %s163 = ssub.s32 32, 32
      %164 = vsyncadd [#allocation3], %s163
      %s166 = sshll.u32 [#allocation2], 4
      %s167 = int_to_ptr.vmem [resolvable:$true] %s166
      %169 = dma.vmem_to_hbm [thread:$0]  %s167, 32, %s5, [#allocation3]
    $region25: #{bert_class_forward.7} parent=1 // pred_fallthru
      _
    // Predicated region
    $region26: #{bert_class_forward.7} parent=1 // pred_check
      _
    $region27: #{bert_class_forward.7} parent=1 // pred_check_branch
      %171 = sbr.rel (0) target = $region29
    $region28: #{bert_class_forward.7} parent=1 // pred_region
      %172 = dma.done [#allocation3], 32
    $region29: #{bert_class_forward.7} parent=1 // pred_fallthru
      _
    %173 = vsyncpa [#allocation3], 1

// kernel: bert_class_forward.5
$region0: #{bert_class_forward.5}
  #allocation0 [shape = 'u32[]', space=smem, size = 0x4, offset = 0x4, fixed_abs, tag = 'smem constant byte address 0x4 - core index']
  #allocation1 [shape = 'u32[144,128]{1,0:T(1,128)}', space=vmem, size = 0x12000, scoped, tag = 'internal scratch']
  %s0 = inlined_call_operand.vmem [shape: bf16[2,8,32], index: 0, kind: input, shape index: {}]
  %s1 = inlined_call_operand.vmem [shape: f32[2,1,8], index: 1, kind: input, shape index: {}]
  %s2 = inlined_call_operand.vmem [shape: bf16[4,32,8], index: 2, kind: input, shape index: {}]
  %s3 = inlined_call_operand.vmem [shape: f32[4,1,8], index: 3, kind: input, shape index: {}]
  %s4 = inlined_call_operand.vmem [shape: bf16[4,32,8], index: 4, kind: input, shape index: {}]
  %s5 = inlined_call_operand.vmem [shape: f32[4,1,8], index: 5, kind: input, shape index: {}]
  %s6 = inlined_call_operand.vmem [shape: bf16[4,32,8], index: 6, kind: input, shape index: {}]
  %s7 = inlined_call_operand.vmem [shape: f32[4,1,8], index: 7, kind: input, shape index: {}]
  %s8 = inlined_call_operand.vmem [shape: bf16[4,8,32], index: 8, kind: input, shape index: {}]
  %s9 = inlined_call_operand.vmem [shape: f32[1,32], index: 9, kind: input, shape index: {}]
  %s10 = inlined_call_operand.vmem [shape: f32[1,32], index: 10, kind: input, shape index: {}]
  %s11 = inlined_call_operand.vmem [shape: f32[1,32], index: 11, kind: input, shape index: {}]
  %s12 = inlined_call_operand.vmem [shape: bf16[32,64], index: 12, kind: input, shape index: {}]
  %s13 = inlined_call_operand.vmem [shape: f32[1,64], index: 13, kind: input, shape index: {}]
  %s14 = inlined_call_operand.vmem [shape: bf16[64,32], index: 14, kind: input, shape index: {}]
  %s15 = inlined_call_operand.vmem [shape: f32[1,32], index: 15, kind: input, shape index: {}]
  %s16 = inlined_call_operand.vmem [shape: f32[1,32], index: 16, kind: input, shape index: {}]
  %s17 = inlined_call_operand.vmem [shape: f32[1,32], index: 17, kind: input, shape index: {}]
  %s18 = inlined_call_operand.vmem [shape: bf16[2,8,32], index: 18, kind: output, shape index: {}]
  %s19 = sld [smem:[#allocation0]]
  $region105: #{bert_class_forward.5} parent=0
    _
  %s21 = ssub.s32 1, %s19
  %s22 = scalar_select 0, %s21, %s19
  loop: start=0, step=1, limit=4
  $region2: #{bert_class_forward.5} parent=0 // loop_pre_header
    _
  $region3: #{bert_class_forward.5} parent=0 // loop_header
    %s24 = sphi 0, %s28
    %p25 = scmp.ge.s32.totalorder %s24, 4
    %s34 = sphi 0, %s36
    %s37 = sphi 0, %s34
    %s38 = sphi 0, %s37
    %s54 = sphi 0, %s38
    %s60 = sphi 0, %s62
    %s63 = sphi 0, %s60
    %s64 = sphi 0, %s63
    %s80 = sphi 0, %s64
    %s84 = sphi 0, %s84
    %s86 = sphi 0, %s84
    %s87 = sphi 0, %s86
    %s101 = sphi 0, %s87
    %s105 = sphi 0, %s105
    %s107 = sphi 0, %s105
    %s108 = sphi 0, %s107
    %s122 = sphi 0, %s108
    %s126 = sphi 0, %s126
    %s128 = sphi 0, %s126
    %s129 = sphi 0, %s128
    %s143 = sphi 0, %s129
    %s147 = sphi 0, %s147
    %s149 = sphi 0, %s147
    %s150 = sphi 0, %s149
    %s164 = sphi 0, %s150
    %s168 = sphi 0, %s168
    %s170 = sphi 0, %s168
    %s171 = sphi 0, %s170
    %s185 = sphi 0, %s171
    %s189 = sphi 0, %s189
    %s191 = sphi 0, %s189
    %s192 = sphi 0, %s191
    %s206 = sphi 0, %s192
    %s210 = sphi 0, %s210
    %s212 = sphi 0, %s210
    %s213 = sphi 0, %s212
    %s227 = sphi 0, %s213
    %s231 = sphi 0, %s231
    %s233 = sphi 0, %s231
    %s234 = sphi 0, %s233
    %s248 = sphi 0, %s234
    %s252 = sphi 0, %s252
    %s254 = sphi 0, %s252
    %s255 = sphi 0, %s254
    %s269 = sphi 0, %s255
    %s273 = sphi 0, %s273
    %s275 = sphi 0, %s273
    %s276 = sphi 0, %s275
    %s290 = sphi 0, %s276
    %s294 = sphi 0, %s294
    %s296 = sphi 0, %s294
    %s297 = sphi 0, %s296
    %s311 = sphi 0, %s297
    %s315 = sphi 0, %s315
    %s317 = sphi 0, %s315
    %s318 = sphi 0, %s317
    %s332 = sphi 0, %s318
    %s336 = sphi 0, %s336
    %s338 = sphi 0, %s336
    %s339 = sphi 0, %s338
    %s353 = sphi 0, %s339
    %s357 = sphi 0, %s357
    %s359 = sphi 0, %s357
    %s360 = sphi 0, %s359
    %s374 = sphi 0, %s360
    %s378 = sphi 0, %s378
    %s380 = sphi 0, %s378
    %s381 = sphi 0, %s380
    %s395 = sphi 0, %s381
    %s399 = sphi 0, %s399
    %s401 = sphi 0, %s399
    %s402 = sphi 0, %s401
    %s416 = sphi 0, %s402
    %s422 = sphi 0, %s424
    %s425 = sphi 0, %s422
    %s426 = sphi 0, %s425
    %s442 = sphi 0, %s426
  $region4: #{bert_class_forward.5} parent=0 // loop_header_branch
    %27 = sbr.rel (%p25) target = $region8
  $region5: #{bert_class_forward.5} parent=0 // loop_body
    %s29 = ssub.s32 %s24, 1
    %s30 = ssub.s32 %s24, 2
    %s31 = sadd.s32 %s24, 1
    %s32 = ssub.s32 %s24, %s31
    %p33 = scmp.eq.s32.totalorder %s32, 0
    %s35 = sadd.s32 %s34, 1
    %s36 = scalar_select %p33, %s34, %s35
    %p39 = pneg %p33
    %p40 = scmp.eq.s32.totalorder %s24, 1
    %p41 = por %p39, %p40
    %p42 = scmp.ne.s32.totalorder %s34, %s37
    %p43 = scmp.eq.s32.totalorder %s24, 0
    %p44 = por %p42, %p43
    %p45 = scmp.ne.s32.totalorder %s34, %s37
    %p46 = scmp.eq.s32.totalorder %s29, 1
    %p47 = por %p45, %p46
    %p48 = scmp.ne.s32.totalorder %s37, %s38
    %p49 = scmp.eq.s32.totalorder %s29, 0
    %p50 = por %p48, %p49
    %p51 = scmp.ne.s32.totalorder %s37, %s38
    %p52 = scmp.eq.s32.totalorder %s30, 1
    %p53 = por %p51, %p52
    %p55 = scmp.ne.s32.totalorder %s38, %s54
    %p56 = scmp.eq.s32.totalorder %s30, 0
    %p57 = por %p55, %p56
    %s58 = ssub.s32 %s24, %s31
    %p59 = scmp.eq.s32.totalorder %s58, 0
    %s61 = sadd.s32 %s60, 1
    %s62 = scalar_select %p59, %s60, %s61
    %p65 = pneg %p59
    %p66 = scmp.eq.s32.totalorder %s24, 1
    %p67 = por %p65, %p66
    %p68 = scmp.ne.s32.totalorder %s60, %s63
    %p69 = scmp.eq.s32.totalorder %s24, 0
    %p70 = por %p68, %p69
    %p71 = scmp.ne.s32.totalorder %s60, %s63
    %p72 = scmp.eq.s32.totalorder %s29, 1
    %p73 = por %p71, %p72
    %p74 = scmp.ne.s32.totalorder %s63, %s64
    %p75 = scmp.eq.s32.totalorder %s29, 0
    %p76 = por %p74, %p75
    %p77 = scmp.ne.s32.totalorder %s63, %s64
    %p78 = scmp.eq.s32.totalorder %s30, 1
    %p79 = por %p77, %p78
    %p81 = scmp.ne.s32.totalorder %s64, %s80
    %p82 = scmp.eq.s32.totalorder %s30, 0
    %p83 = por %p81, %p82
    %s85 = sadd.s32 %s84, 1
    %p88 = scmp.eq.s32.totalorder %s24, 1
    %p89 = scmp.ne.s32.totalorder %s84, %s86
    %p90 = scmp.eq.s32.totalorder %s24, 0
    %p91 = por %p89, %p90
    %p92 = scmp.ne.s32.totalorder %s84, %s86
    %p93 = scmp.eq.s32.totalorder %s29, 1
    %p94 = por %p92, %p93
    %p95 = scmp.ne.s32.totalorder %s86, %s87
    %p96 = scmp.eq.s32.totalorder %s29, 0
    %p97 = por %p95, %p96
    %p98 = scmp.ne.s32.totalorder %s86, %s87
    %p99 = scmp.eq.s32.totalorder %s30, 1
    %p100 = por %p98, %p99
    %p102 = scmp.ne.s32.totalorder %s87, %s101
    %p103 = scmp.eq.s32.totalorder %s30, 0
    %p104 = por %p102, %p103
    %s106 = sadd.s32 %s105, 1
    %p109 = scmp.eq.s32.totalorder %s24, 1
    %p110 = scmp.ne.s32.totalorder %s105, %s107
    %p111 = scmp.eq.s32.totalorder %s24, 0
    %p112 = por %p110, %p111
    %p113 = scmp.ne.s32.totalorder %s105, %s107
    %p114 = scmp.eq.s32.totalorder %s29, 1
    %p115 = por %p113, %p114
    %p116 = scmp.ne.s32.totalorder %s107, %s108
    %p117 = scmp.eq.s32.totalorder %s29, 0
    %p118 = por %p116, %p117
    %p119 = scmp.ne.s32.totalorder %s107, %s108
    %p120 = scmp.eq.s32.totalorder %s30, 1
    %p121 = por %p119, %p120
    %p123 = scmp.ne.s32.totalorder %s108, %s122
    %p124 = scmp.eq.s32.totalorder %s30, 0
    %p125 = por %p123, %p124
    %s127 = sadd.s32 %s126, 1
    %p130 = scmp.eq.s32.totalorder %s24, 1
    %p131 = scmp.ne.s32.totalorder %s126, %s128
    %p132 = scmp.eq.s32.totalorder %s24, 0
    %p133 = por %p131, %p132
    %p134 = scmp.ne.s32.totalorder %s126, %s128
    %p135 = scmp.eq.s32.totalorder %s29, 1
    %p136 = por %p134, %p135
    %p137 = scmp.ne.s32.totalorder %s128, %s129
    %p138 = scmp.eq.s32.totalorder %s29, 0
    %p139 = por %p137, %p138
    %p140 = scmp.ne.s32.totalorder %s128, %s129
    %p141 = scmp.eq.s32.totalorder %s30, 1
    %p142 = por %p140, %p141
    %p144 = scmp.ne.s32.totalorder %s129, %s143
    %p145 = scmp.eq.s32.totalorder %s30, 0
    %p146 = por %p144, %p145
    %s148 = sadd.s32 %s147, 1
    %p151 = scmp.eq.s32.totalorder %s24, 1
    %p152 = scmp.ne.s32.totalorder %s147, %s149
    %p153 = scmp.eq.s32.totalorder %s24, 0
    %p154 = por %p152, %p153
    %p155 = scmp.ne.s32.totalorder %s147, %s149
    %p156 = scmp.eq.s32.totalorder %s29, 1
    %p157 = por %p155, %p156
    %p158 = scmp.ne.s32.totalorder %s149, %s150
    %p159 = scmp.eq.s32.totalorder %s29, 0
    %p160 = por %p158, %p159
    %p161 = scmp.ne.s32.totalorder %s149, %s150
    %p162 = scmp.eq.s32.totalorder %s30, 1
    %p163 = por %p161, %p162
    %p165 = scmp.ne.s32.totalorder %s150, %s164
    %p166 = scmp.eq.s32.totalorder %s30, 0
    %p167 = por %p165, %p166
    %s169 = sadd.s32 %s168, 1
    %p172 = scmp.eq.s32.totalorder %s24, 1
    %p173 = scmp.ne.s32.totalorder %s168, %s170
    %p174 = scmp.eq.s32.totalorder %s24, 0
    %p175 = por %p173, %p174
    %p176 = scmp.ne.s32.totalorder %s168, %s170
    %p177 = scmp.eq.s32.totalorder %s29, 1
    %p178 = por %p176, %p177
    %p179 = scmp.ne.s32.totalorder %s170, %s171
    %p180 = scmp.eq.s32.totalorder %s29, 0
    %p181 = por %p179, %p180
    %p182 = scmp.ne.s32.totalorder %s170, %s171
    %p183 = scmp.eq.s32.totalorder %s30, 1
    %p184 = por %p182, %p183
    %p186 = scmp.ne.s32.totalorder %s171, %s185
    %p187 = scmp.eq.s32.totalorder %s30, 0
    %p188 = por %p186, %p187
    %s190 = sadd.s32 %s189, 1
    %p193 = scmp.eq.s32.totalorder %s24, 1
    %p194 = scmp.ne.s32.totalorder %s189, %s191
    %p195 = scmp.eq.s32.totalorder %s24, 0
    %p196 = por %p194, %p195
    %p197 = scmp.ne.s32.totalorder %s189, %s191
    %p198 = scmp.eq.s32.totalorder %s29, 1
    %p199 = por %p197, %p198
    %p200 = scmp.ne.s32.totalorder %s191, %s192
    %p201 = scmp.eq.s32.totalorder %s29, 0
    %p202 = por %p200, %p201
    %p203 = scmp.ne.s32.totalorder %s191, %s192
    %p204 = scmp.eq.s32.totalorder %s30, 1
    %p205 = por %p203, %p204
    %p207 = scmp.ne.s32.totalorder %s192, %s206
    %p208 = scmp.eq.s32.totalorder %s30, 0
    %p209 = por %p207, %p208
    %s211 = sadd.s32 %s210, 1
    %p214 = scmp.eq.s32.totalorder %s24, 1
    %p215 = scmp.ne.s32.totalorder %s210, %s212
    %p216 = scmp.eq.s32.totalorder %s24, 0
    %p217 = por %p215, %p216
    %p218 = scmp.ne.s32.totalorder %s210, %s212
    %p219 = scmp.eq.s32.totalorder %s29, 1
    %p220 = por %p218, %p219
    %p221 = scmp.ne.s32.totalorder %s212, %s213
    %p222 = scmp.eq.s32.totalorder %s29, 0
    %p223 = por %p221, %p222
    %p224 = scmp.ne.s32.totalorder %s212, %s213
    %p225 = scmp.eq.s32.totalorder %s30, 1
    %p226 = por %p224, %p225
    %p228 = scmp.ne.s32.totalorder %s213, %s227
    %p229 = scmp.eq.s32.totalorder %s30, 0
    %p230 = por %p228, %p229
    %s232 = sadd.s32 %s231, 1
    %p235 = scmp.eq.s32.totalorder %s24, 1
    %p236 = scmp.ne.s32.totalorder %s231, %s233
    %p237 = scmp.eq.s32.totalorder %s24, 0
    %p238 = por %p236, %p237
    %p239 = scmp.ne.s32.totalorder %s231, %s233
    %p240 = scmp.eq.s32.totalorder %s29, 1
    %p241 = por %p239, %p240
    %p242 = scmp.ne.s32.totalorder %s233, %s234
    %p243 = scmp.eq.s32.totalorder %s29, 0
    %p244 = por %p242, %p243
    %p245 = scmp.ne.s32.totalorder %s233, %s234
    %p246 = scmp.eq.s32.totalorder %s30, 1
    %p247 = por %p245, %p246
    %p249 = scmp.ne.s32.totalorder %s234, %s248
    %p250 = scmp.eq.s32.totalorder %s30, 0
    %p251 = por %p249, %p250
    %s253 = sadd.s32 %s252, 1
    %p256 = scmp.eq.s32.totalorder %s24, 1
    %p257 = scmp.ne.s32.totalorder %s252, %s254
    %p258 = scmp.eq.s32.totalorder %s24, 0
    %p259 = por %p257, %p258
    %p260 = scmp.ne.s32.totalorder %s252, %s254
    %p261 = scmp.eq.s32.totalorder %s29, 1
    %p262 = por %p260, %p261
    %p263 = scmp.ne.s32.totalorder %s254, %s255
    %p264 = scmp.eq.s32.totalorder %s29, 0
    %p265 = por %p263, %p264
    %p266 = scmp.ne.s32.totalorder %s254, %s255
    %p267 = scmp.eq.s32.totalorder %s30, 1
    %p268 = por %p266, %p267
    %p270 = scmp.ne.s32.totalorder %s255, %s269
    %p271 = scmp.eq.s32.totalorder %s30, 0
    %p272 = por %p270, %p271
    %s274 = sadd.s32 %s273, 1
    %p277 = scmp.eq.s32.totalorder %s24, 1
    %p278 = scmp.ne.s32.totalorder %s273, %s275
    %p279 = scmp.eq.s32.totalorder %s24, 0
    %p280 = por %p278, %p279
    %p281 = scmp.ne.s32.totalorder %s273, %s275
    %p282 = scmp.eq.s32.totalorder %s29, 1
    %p283 = por %p281, %p282
    %p284 = scmp.ne.s32.totalorder %s275, %s276
    %p285 = scmp.eq.s32.totalorder %s29, 0
    %p286 = por %p284, %p285
    %p287 = scmp.ne.s32.totalorder %s275, %s276
    %p288 = scmp.eq.s32.totalorder %s30, 1
    %p289 = por %p287, %p288
    %p291 = scmp.ne.s32.totalorder %s276, %s290
    %p292 = scmp.eq.s32.totalorder %s30, 0
    %p293 = por %p291, %p292
    %s295 = sadd.s32 %s294, 1
    %p298 = scmp.eq.s32.totalorder %s24, 1
    %p299 = scmp.ne.s32.totalorder %s294, %s296
    %p300 = scmp.eq.s32.totalorder %s24, 0
    %p301 = por %p299, %p300
    %p302 = scmp.ne.s32.totalorder %s294, %s296
    %p303 = scmp.eq.s32.totalorder %s29, 1
    %p304 = por %p302, %p303
    %p305 = scmp.ne.s32.totalorder %s296, %s297
    %p306 = scmp.eq.s32.totalorder %s29, 0
    %p307 = por %p305, %p306
    %p308 = scmp.ne.s32.totalorder %s296, %s297
    %p309 = scmp.eq.s32.totalorder %s30, 1
    %p310 = por %p308, %p309
    %p312 = scmp.ne.s32.totalorder %s297, %s311
    %p313 = scmp.eq.s32.totalorder %s30, 0
    %p314 = por %p312, %p313
    %s316 = sadd.s32 %s315, 1
    %p319 = scmp.eq.s32.totalorder %s24, 1
    %p320 = scmp.ne.s32.totalorder %s315, %s317
    %p321 = scmp.eq.s32.totalorder %s24, 0
    %p322 = por %p320, %p321
    %p323 = scmp.ne.s32.totalorder %s315, %s317
    %p324 = scmp.eq.s32.totalorder %s29, 1
    %p325 = por %p323, %p324
    %p326 = scmp.ne.s32.totalorder %s317, %s318
    %p327 = scmp.eq.s32.totalorder %s29, 0
    %p328 = por %p326, %p327
    %p329 = scmp.ne.s32.totalorder %s317, %s318
    %p330 = scmp.eq.s32.totalorder %s30, 1
    %p331 = por %p329, %p330
    %p333 = scmp.ne.s32.totalorder %s318, %s332
    %p334 = scmp.eq.s32.totalorder %s30, 0
    %p335 = por %p333, %p334
    %s337 = sadd.s32 %s336, 1
    %p340 = scmp.eq.s32.totalorder %s24, 1
    %p341 = scmp.ne.s32.totalorder %s336, %s338
    %p342 = scmp.eq.s32.totalorder %s24, 0
    %p343 = por %p341, %p342
    %p344 = scmp.ne.s32.totalorder %s336, %s338
    %p345 = scmp.eq.s32.totalorder %s29, 1
    %p346 = por %p344, %p345
    %p347 = scmp.ne.s32.totalorder %s338, %s339
    %p348 = scmp.eq.s32.totalorder %s29, 0
    %p349 = por %p347, %p348
    %p350 = scmp.ne.s32.totalorder %s338, %s339
    %p351 = scmp.eq.s32.totalorder %s30, 1
    %p352 = por %p350, %p351
    %p354 = scmp.ne.s32.totalorder %s339, %s353
    %p355 = scmp.eq.s32.totalorder %s30, 0
    %p356 = por %p354, %p355
    %s358 = sadd.s32 %s357, 1
    %p361 = scmp.eq.s32.totalorder %s24, 1
    %p362 = scmp.ne.s32.totalorder %s357, %s359
    %p363 = scmp.eq.s32.totalorder %s24, 0
    %p364 = por %p362, %p363
    %p365 = scmp.ne.s32.totalorder %s357, %s359
    %p366 = scmp.eq.s32.totalorder %s29, 1
    %p367 = por %p365, %p366
    %p368 = scmp.ne.s32.totalorder %s359, %s360
    %p369 = scmp.eq.s32.totalorder %s29, 0
    %p370 = por %p368, %p369
    %p371 = scmp.ne.s32.totalorder %s359, %s360
    %p372 = scmp.eq.s32.totalorder %s30, 1
    %p373 = por %p371, %p372
    %p375 = scmp.ne.s32.totalorder %s360, %s374
    %p376 = scmp.eq.s32.totalorder %s30, 0
    %p377 = por %p375, %p376
    %s379 = sadd.s32 %s378, 1
    %p382 = scmp.eq.s32.totalorder %s24, 1
    %p383 = scmp.ne.s32.totalorder %s378, %s380
    %p384 = scmp.eq.s32.totalorder %s24, 0
    %p385 = por %p383, %p384
    %p386 = scmp.ne.s32.totalorder %s378, %s380
    %p387 = scmp.eq.s32.totalorder %s29, 1
    %p388 = por %p386, %p387
    %p389 = scmp.ne.s32.totalorder %s380, %s381
    %p390 = scmp.eq.s32.totalorder %s29, 0
    %p391 = por %p389, %p390
    %p392 = scmp.ne.s32.totalorder %s380, %s381
    %p393 = scmp.eq.s32.totalorder %s30, 1
    %p394 = por %p392, %p393
    %p396 = scmp.ne.s32.totalorder %s381, %s395
    %p397 = scmp.eq.s32.totalorder %s30, 0
    %p398 = por %p396, %p397
    %s400 = sadd.s32 %s399, 1
    %p403 = scmp.eq.s32.totalorder %s24, 1
    %p404 = scmp.ne.s32.totalorder %s399, %s401
    %p405 = scmp.eq.s32.totalorder %s24, 0
    %p406 = por %p404, %p405
    %p407 = scmp.ne.s32.totalorder %s399, %s401
    %p408 = scmp.eq.s32.totalorder %s29, 1
    %p409 = por %p407, %p408
    %p410 = scmp.ne.s32.totalorder %s401, %s402
    %p411 = scmp.eq.s32.totalorder %s29, 0
    %p412 = por %p410, %p411
    %p413 = scmp.ne.s32.totalorder %s401, %s402
    %p414 = scmp.eq.s32.totalorder %s30, 1
    %p415 = por %p413, %p414
    %p417 = scmp.ne.s32.totalorder %s402, %s416
    %p418 = scmp.eq.s32.totalorder %s30, 0
    %p419 = por %p417, %p418
    %s420 = ssub.s32 %s24, %s31
    %p421 = scmp.eq.s32.totalorder %s420, 0
    %s423 = sadd.s32 %s422, 1
    %s424 = scalar_select %p421, %s422, %s423
    %p427 = pneg %p421
    %p428 = scmp.eq.s32.totalorder %s24, 1
    %p429 = por %p427, %p428
    %p430 = scmp.ne.s32.totalorder %s422, %s425
    %p431 = scmp.eq.s32.totalorder %s24, 0
    %p432 = por %p430, %p431
    %p433 = scmp.ne.s32.totalorder %s422, %s425
    %p434 = scmp.eq.s32.totalorder %s29, 1
    %p435 = por %p433, %p434
    %p436 = scmp.ne.s32.totalorder %s425, %s426
    %p437 = scmp.eq.s32.totalorder %s29, 0
    %p438 = por %p436, %p437
    %p439 = scmp.ne.s32.totalorder %s425, %s426
    %p440 = scmp.eq.s32.totalorder %s30, 1
    %p441 = por %p439, %p440
    %p443 = scmp.ne.s32.totalorder %s426, %s442
    %p444 = scmp.eq.s32.totalorder %s30, 0
    %p445 = por %p443, %p444
    %p446 = scmp.le.s32.totalorder 1, %s24
    %p447 = scmp.lt.s32.totalorder %s24, 3
    %p448 = pnand %p446, %p447
    %p449 = pneg %p448
    // Predicated region
    $region9: #{bert_class_forward.5} parent=5 // pred_check
      _
    $region10: #{bert_class_forward.5} parent=5 // pred_check_branch
      %451 = sbr.rel (%p448) target = $region12
    $region11: #{bert_class_forward.5} parent=5 // pred_region
      %s452 = ssub.s32 %s24, 1
      // Predicated region
      $region13: #{bert_class_forward.5} parent=11 // pred_check
        %p453 = pneg %p97
      $region14: #{bert_class_forward.5} parent=11 // pred_check_branch
        %455 = sbr.rel (%p453) target = $region16
      $region15: #{bert_class_forward.5} parent=11 // pred_region
        _
      $region16: #{bert_class_forward.5} parent=11 // pred_fallthru
        _
      // Predicated region
      $region17: #{bert_class_forward.5} parent=11 // pred_check
        %p456 = pneg %p118
      $region18: #{bert_class_forward.5} parent=11 // pred_check_branch
        %458 = sbr.rel (%p456) target = $region20
      $region19: #{bert_class_forward.5} parent=11 // pred_region
        _
      $region20: #{bert_class_forward.5} parent=11 // pred_fallthru
        _
      // Predicated region
      $region21: #{bert_class_forward.5} parent=11 // pred_check
        %p459 = pneg %p139
      $region22: #{bert_class_forward.5} parent=11 // pred_check_branch
        %461 = sbr.rel (%p459) target = $region24
      $region23: #{bert_class_forward.5} parent=11 // pred_region
        _
      $region24: #{bert_class_forward.5} parent=11 // pred_fallthru
        _
      // Predicated region
      $region25: #{bert_class_forward.5} parent=11 // pred_check
        %p462 = pneg %p160
      $region26: #{bert_class_forward.5} parent=11 // pred_check_branch
        %464 = sbr.rel (%p462) target = $region28
      $region27: #{bert_class_forward.5} parent=11 // pred_region
        _
      $region28: #{bert_class_forward.5} parent=11 // pred_fallthru
        _
      // Predicated region
      $region29: #{bert_class_forward.5} parent=11 // pred_check
        %p465 = pneg %p181
      $region30: #{bert_class_forward.5} parent=11 // pred_check_branch
        %467 = sbr.rel (%p465) target = $region32
      $region31: #{bert_class_forward.5} parent=11 // pred_region
        _
      $region32: #{bert_class_forward.5} parent=11 // pred_fallthru
        _
      // Predicated region
      $region33: #{bert_class_forward.5} parent=11 // pred_check
        %p468 = pneg %p202
      $region34: #{bert_class_forward.5} parent=11 // pred_check_branch
        %470 = sbr.rel (%p468) target = $region36
      $region35: #{bert_class_forward.5} parent=11 // pred_region
        _
      $region36: #{bert_class_forward.5} parent=11 // pred_fallthru
        _
      // Predicated region
      $region37: #{bert_class_forward.5} parent=11 // pred_check
        %p471 = pneg %p223
      $region38: #{bert_class_forward.5} parent=11 // pred_check_branch
        %473 = sbr.rel (%p471) target = $region40
      $region39: #{bert_class_forward.5} parent=11 // pred_region
        _
      $region40: #{bert_class_forward.5} parent=11 // pred_fallthru
        _
      // Predicated region
      $region41: #{bert_class_forward.5} parent=11 // pred_check
        %p474 = pneg %p244
      $region42: #{bert_class_forward.5} parent=11 // pred_check_branch
        %476 = sbr.rel (%p474) target = $region44
      $region43: #{bert_class_forward.5} parent=11 // pred_region
        _
      $region44: #{bert_class_forward.5} parent=11 // pred_fallthru
        _
      // Predicated region
      $region45: #{bert_class_forward.5} parent=11 // pred_check
        %p477 = pneg %p265
      $region46: #{bert_class_forward.5} parent=11 // pred_check_branch
        %479 = sbr.rel (%p477) target = $region48
      $region47: #{bert_class_forward.5} parent=11 // pred_region
        _
      $region48: #{bert_class_forward.5} parent=11 // pred_fallthru
        _
      // Predicated region
      $region49: #{bert_class_forward.5} parent=11 // pred_check
        %p480 = pneg %p286
      $region50: #{bert_class_forward.5} parent=11 // pred_check_branch
        %482 = sbr.rel (%p480) target = $region52
      $region51: #{bert_class_forward.5} parent=11 // pred_region
        _
      $region52: #{bert_class_forward.5} parent=11 // pred_fallthru
        _
      // Predicated region
      $region53: #{bert_class_forward.5} parent=11 // pred_check
        %p483 = pneg %p307
      $region54: #{bert_class_forward.5} parent=11 // pred_check_branch
        %485 = sbr.rel (%p483) target = $region56
      $region55: #{bert_class_forward.5} parent=11 // pred_region
        _
      $region56: #{bert_class_forward.5} parent=11 // pred_fallthru
        _
      // Predicated region
      $region57: #{bert_class_forward.5} parent=11 // pred_check
        %p486 = pneg %p328
      $region58: #{bert_class_forward.5} parent=11 // pred_check_branch
        %488 = sbr.rel (%p486) target = $region60
      $region59: #{bert_class_forward.5} parent=11 // pred_region
        _
      $region60: #{bert_class_forward.5} parent=11 // pred_fallthru
        _
      // Predicated region
      $region61: #{bert_class_forward.5} parent=11 // pred_check
        %p489 = pneg %p349
      $region62: #{bert_class_forward.5} parent=11 // pred_check_branch
        %491 = sbr.rel (%p489) target = $region64
      $region63: #{bert_class_forward.5} parent=11 // pred_region
        _
      $region64: #{bert_class_forward.5} parent=11 // pred_fallthru
        _
      // Predicated region
      $region65: #{bert_class_forward.5} parent=11 // pred_check
        %p492 = pneg %p370
      $region66: #{bert_class_forward.5} parent=11 // pred_check_branch
        %494 = sbr.rel (%p492) target = $region68
      $region67: #{bert_class_forward.5} parent=11 // pred_region
        _
      $region68: #{bert_class_forward.5} parent=11 // pred_fallthru
        _
      // Predicated region
      $region69: #{bert_class_forward.5} parent=11 // pred_check
        %p495 = pneg %p391
      $region70: #{bert_class_forward.5} parent=11 // pred_check_branch
        %497 = sbr.rel (%p495) target = $region72
      $region71: #{bert_class_forward.5} parent=11 // pred_region
        _
      $region72: #{bert_class_forward.5} parent=11 // pred_fallthru
        _
      // Predicated region
      $region73: #{bert_class_forward.5} parent=11 // pred_check
        %p498 = pneg %p412
      $region74: #{bert_class_forward.5} parent=11 // pred_check_branch
        %500 = sbr.rel (%p498) target = $region76
      $region75: #{bert_class_forward.5} parent=11 // pred_region
        _
      $region76: #{bert_class_forward.5} parent=11 // pred_fallthru
        _
    $region12: #{bert_class_forward.5} parent=5 // pred_fallthru
      _
    %p501 = scmp.lt.s32.totalorder %s24, 2
    // Predicated region
    $region77: #{bert_class_forward.5} parent=5 // pred_check
      %p502 = pneg %p501
    $region78: #{bert_class_forward.5} parent=5 // pred_check_branch
      %504 = sbr.rel (%p502) target = $region80
    $region79: #{bert_class_forward.5} parent=5 // pred_region
      // Predicated region
      $region81: #{bert_class_forward.5} parent=79 // pred_check
        %p505 = pneg %p44
      $region82: #{bert_class_forward.5} parent=79 // pred_check_branch
        %507 = sbr.rel (%p505) target = $region84
      $region83: #{bert_class_forward.5} parent=79 // pred_region
        %p508 = scmp.lt.s32.totalorder %s24, 1
        %s509 = scalar_select %p508, %s24, 1
        %s510 = smul.addr %s509, 4
        %s511 = scalar_lea.vmem %s0, %s510
      $region84: #{bert_class_forward.5} parent=79 // pred_fallthru
        _
      // Predicated region
      $region85: #{bert_class_forward.5} parent=79 // pred_check
        %p512 = pneg %p70
      $region86: #{bert_class_forward.5} parent=79 // pred_check_branch
        %514 = sbr.rel (%p512) target = $region88
      $region87: #{bert_class_forward.5} parent=79 // pred_region
        %p515 = scmp.lt.s32.totalorder %s24, 1
        %s516 = scalar_select %p515, %s24, 1
        %s517 = scalar_lea.vmem %s1, %s516
      $region88: #{bert_class_forward.5} parent=79 // pred_fallthru
        _
    $region80: #{bert_class_forward.5} parent=5 // pred_fallthru
      _
    %p518 = scmp.le.s32.totalorder 1, %s24
    %p519 = scmp.lt.s32.totalorder %s24, 3
    %p520 = pnand %p518, %p519
    %p521 = pneg %p520
    // Predicated region
    $region89: #{bert_class_forward.5} parent=5 // pred_check
      _
    $region90: #{bert_class_forward.5} parent=5 // pred_check_branch
      %523 = sbr.rel (%p520) target = $region92
    $region91: #{bert_class_forward.5} parent=5 // pred_region
      %s524 = ssub.s32 %s24, 1
      %p525 = scmp.lt.s32.totalorder %s29, 1
      %s526 = scalar_select %p525, %s29, 1
      %s527 = smul.addr %s526, 4
      %s528 = scalar_lea.vmem %s0, %s527
      %p529 = pneg %p50
      %p530 = pneg %p47
      %p531 = scmp.lt.s32.totalorder %s29, 1
      %s532 = scalar_select %p531, %s29, 1
      %s533 = scalar_lea.vmem %s1, %s532
      %p534 = pneg %p76
      %p535 = pneg %p73
      %p536 = pneg %p97
      %p537 = pneg %p94
      %p538 = pneg %p118
      %p539 = pneg %p115
      %p540 = pneg %p139
      %p541 = pneg %p136
      %p542 = pneg %p160
      %p543 = pneg %p157
      %p544 = pneg %p181
      %p545 = pneg %p178
      %p546 = pneg %p202
      %p547 = pneg %p199
      %p548 = pneg %p223
      %p549 = pneg %p220
      %p550 = pneg %p244
      %p551 = pneg %p241
      %p552 = pneg %p265
      %p553 = pneg %p262
      %p554 = pneg %p286
      %p555 = pneg %p283
      %p556 = pneg %p307
      %p557 = pneg %p304
      %p558 = pneg %p328
      %p559 = pneg %p325
      %p560 = pneg %p349
      %p561 = pneg %p346
      %p562 = pneg %p370
      %p563 = pneg %p367
      %p564 = pneg %p391
      %p565 = pneg %p388
      %p566 = pneg %p412
      %p567 = pneg %p409
      %p568 = pneg %p438
      %p569 = pneg %p435
      %p570 = scmp.lt.s32.totalorder %s29, 1
      %s571 = scalar_select %p570, %s29, 1
      %s572 = smul.addr %s571, 4
      %s573 = scalar_lea.vmem %s18, %s572
      %p574 = scmp.lt.s32.totalorder %s29, 1
      %s575 = scalar_select %p574, %s29, 1
      %s576 = smul.addr %s575, 4
      %s577 = scalar_lea.vmem %s0, %s576
      %p578 = scmp.lt.s32.totalorder %s29, 1
      %s579 = scalar_select %p578, %s29, 1
      %s580 = scalar_lea.vmem %s1, %s579
      %p581 = scmp.lt.s32.totalorder %s29, 1
      %s582 = scalar_select %p581, %s29, 1
      %s583 = smul.addr %s582, 4
      %s584 = scalar_lea.vmem %s18, %s583
      %v586 = vld [vmem:[%s577] sm:$0xf]
      %v587 = vunpack.c.l.bf16 %v586
      %v588 = vld [vmem:[%s580] sm:$0x1]
      %v589 = vld [vmem:[%s2] sm:$0xf]
      %v590 = vld [vmem:[%s2 + $0x4] sm:$0xf]
      %v591 = vld [vmem:[%s2 + $0x8] sm:$0xf]
      %v592 = vld [vmem:[%s2 + $0xc] sm:$0xf]
      %v593 = vld [vmem:[%s3] sm:$0x1]
      %v595 = vlaneseq
      %v596 = vshrl.u32 %v595, 7
      %v597 = vsub.s32 0, %v596
      %v598 = vrot.slane %v593, %v597
      %v604 = vunpack.c.l.b16 %v589
      %v605 = vunpack.c.l.b16 %v590
      %v606 = vunpack.c.l.b16 %v591
      %v607 = vunpack.c.l.b16 %v592
      %v608 = vpack.c.b16 %v605, %v604
      %v609 = vpack.c.b16 %v607, %v606
      %vm612 = vcmask 261120
      %v614 = vsel %vm612, %v586, 0
      %616 = vmatprep.subr.bf16.mxu0 0
      %617 = vmatpush1.bf16.msra.mxu0 %v608
      %618 = vmatprep.subr.bf16.mxu0 0
      %619 = vmatpush1.bf16.msra.mxu0 %v609
      %620 = vmatprep.subr.bf16.mxu0 0
      %621 = vmatpush1.bf16.msra.mxu0 0
      %622 = vmatprep.subr.bf16.mxu0 0
      %623 = vmatpush1.bf16.msra.mxu0 0
      %624 = vmatprep.subr.bf16.mxu0 0
      %625 = vmatpush1.bf16.msra.mxu0 0
      %626 = vmatprep.subr.bf16.mxu0 0
      %627 = vmatpush1.bf16.msra.mxu0 0
      %628 = vmatprep.subr.bf16.mxu0 0
      %629 = vmatpush1.bf16.msra.mxu0 0
      %630 = vmatprep.subr.bf16.mxu0 0
      %631 = vmatpush1.bf16.msra.mxu0 0
      %632 = vmatprep.subr.bf16.mxu0 0
      %633 = vmatpush1.bf16.msra.mxu0 0
      %634 = vmatprep.subr.bf16.mxu0 0
      %635 = vmatpush1.bf16.msra.mxu0 0
      %636 = vmatprep.subr.bf16.mxu0 0
      %637 = vmatpush1.bf16.msra.mxu0 0
      %638 = vmatprep.subr.bf16.mxu0 0
      %639 = vmatpush1.bf16.msra.mxu0 0
      %640 = vmatprep.subr.bf16.mxu0 0
      %641 = vmatpush1.bf16.msra.mxu0 0
      %642 = vmatprep.subr.bf16.mxu0 0
      %643 = vmatpush1.bf16.msra.mxu0 0
      %644 = vmatprep.subr.bf16.mxu0 0
      %645 = vmatpush1.bf16.msra.mxu0 0
      %646 = vmatprep.subr.bf16.mxu0 0
      %647 = vmatpush1.bf16.msra.mxu0 0
      %648 = vmatprep.mubr.bf16.mxu0 0
      %649 = vmatmul.mubr.bf16.gmra.mrb[0].mxu0 %v614
      %v650 = vpop.f32.mrb[0].mxu0
      %v651 = vadd.f32 %v598, %v650
      %v652 = vpop.f32.mrb[0].mxu0
      %v653 = vpop.f32.mrb[0].mxu0
      %v654 = vpop.f32.mrb[0].mxu0
      %655 = vdwg.mxu0
      %v656 = vld [vmem:[%s4] sm:$0xf]
      %v657 = vld [vmem:[%s4 + $0x4] sm:$0xf]
      %v658 = vld [vmem:[%s4 + $0x8] sm:$0xf]
      %v659 = vld [vmem:[%s4 + $0xc] sm:$0xf]
      %v660 = vld [vmem:[%s5] sm:$0x1]
      %v662 = vlaneseq
      %v663 = vshrl.u32 %v662, 7
      %v664 = vsub.s32 0, %v663
      %v665 = vrot.slane %v660, %v664
      %v671 = vunpack.c.l.b16 %v656
      %v672 = vunpack.c.l.b16 %v657
      %v673 = vunpack.c.l.b16 %v658
      %v674 = vunpack.c.l.b16 %v659
      %v675 = vpack.c.b16 %v672, %v671
      %v676 = vpack.c.b16 %v674, %v673
      %679 = vmatprep.subr.bf16.mxu0 0
      %680 = vmatpush1.bf16.msra.mxu0 %v675
      %681 = vmatprep.subr.bf16.mxu0 0
      %682 = vmatpush1.bf16.msra.mxu0 %v676
      %683 = vmatprep.subr.bf16.mxu0 0
      %684 = vmatpush1.bf16.msra.mxu0 0
      %685 = vmatprep.subr.bf16.mxu0 0
      %686 = vmatpush1.bf16.msra.mxu0 0
      %687 = vmatprep.subr.bf16.mxu0 0
      %688 = vmatpush1.bf16.msra.mxu0 0
      %689 = vmatprep.subr.bf16.mxu0 0
      %690 = vmatpush1.bf16.msra.mxu0 0
      %691 = vmatprep.subr.bf16.mxu0 0
      %692 = vmatpush1.bf16.msra.mxu0 0
      %693 = vmatprep.subr.bf16.mxu0 0
      %694 = vmatpush1.bf16.msra.mxu0 0
      %695 = vmatprep.subr.bf16.mxu0 0
      %696 = vmatpush1.bf16.msra.mxu0 0
      %697 = vmatprep.subr.bf16.mxu0 0
      %698 = vmatpush1.bf16.msra.mxu0 0
      %699 = vmatprep.subr.bf16.mxu0 0
      %700 = vmatpush1.bf16.msra.mxu0 0
      %701 = vmatprep.subr.bf16.mxu0 0
      %702 = vmatpush1.bf16.msra.mxu0 0
      %703 = vmatprep.subr.bf16.mxu0 0
      %704 = vmatpush1.bf16.msra.mxu0 0
      %705 = vmatprep.subr.bf16.mxu0 0
      %706 = vmatpush1.bf16.msra.mxu0 0
      %707 = vmatprep.subr.bf16.mxu0 0
      %708 = vmatpush1.bf16.msra.mxu0 0
      %709 = vmatprep.subr.bf16.mxu0 0
      %710 = vmatpush1.bf16.msra.mxu0 0
      %711 = vmatprep.mubr.bf16.mxu0 0
      %712 = vmatmul.mubr.bf16.gmra.mrb[0].mxu0 %v614
      %v713 = vpop.f32.mrb[0].mxu0
      %v714 = vadd.f32 %v665, %v713
      %v715 = vpop.f32.mrb[0].mxu0
      %v716 = vpop.f32.mrb[0].mxu0
      %v717 = vpop.f32.mrb[0].mxu0
      %718 = vdwg.mxu0
      %v719 = vld [vmem:[%s6] sm:$0xf]
      %v720 = vld [vmem:[%s6 + $0x4] sm:$0xf]
      %v721 = vld [vmem:[%s6 + $0x8] sm:$0xf]
      %v722 = vld [vmem:[%s6 + $0xc] sm:$0xf]
      %v723 = vld [vmem:[%s7] sm:$0x1]
      %v725 = vlaneseq
      %v726 = vshrl.u32 %v725, 7
      %v727 = vsub.s32 0, %v726
      %v728 = vrot.slane %v723, %v727
      %v734 = vunpack.c.l.b16 %v719
      %v735 = vunpack.c.l.b16 %v720
      %v736 = vunpack.c.l.b16 %v721
      %v737 = vunpack.c.l.b16 %v722
      %v738 = vpack.c.b16 %v735, %v734
      %v739 = vpack.c.b16 %v737, %v736
      %742 = vmatprep.subr.bf16.mxu0 0
      %743 = vmatpush1.bf16.msra.mxu0 %v738
      %744 = vmatprep.subr.bf16.mxu0 0
      %745 = vmatpush1.bf16.msra.mxu0 %v739
      %746 = vmatprep.subr.bf16.mxu0 0
      %747 = vmatpush1.bf16.msra.mxu0 0
      %748 = vmatprep.subr.bf16.mxu0 0
      %749 = vmatpush1.bf16.msra.mxu0 0
      %750 = vmatprep.subr.bf16.mxu0 0
      %751 = vmatpush1.bf16.msra.mxu0 0
      %752 = vmatprep.subr.bf16.mxu0 0
      %753 = vmatpush1.bf16.msra.mxu0 0
      %754 = vmatprep.subr.bf16.mxu0 0
      %755 = vmatpush1.bf16.msra.mxu0 0
      %756 = vmatprep.subr.bf16.mxu0 0
      %757 = vmatpush1.bf16.msra.mxu0 0
      %758 = vmatprep.subr.bf16.mxu0 0
      %759 = vmatpush1.bf16.msra.mxu0 0
      %760 = vmatprep.subr.bf16.mxu0 0
      %761 = vmatpush1.bf16.msra.mxu0 0
      %762 = vmatprep.subr.bf16.mxu0 0
      %763 = vmatpush1.bf16.msra.mxu0 0
      %764 = vmatprep.subr.bf16.mxu0 0
      %765 = vmatpush1.bf16.msra.mxu0 0
      %766 = vmatprep.subr.bf16.mxu0 0
      %767 = vmatpush1.bf16.msra.mxu0 0
      %768 = vmatprep.subr.bf16.mxu0 0
      %769 = vmatpush1.bf16.msra.mxu0 0
      %770 = vmatprep.subr.bf16.mxu0 0
      %771 = vmatpush1.bf16.msra.mxu0 0
      %772 = vmatprep.subr.bf16.mxu0 0
      %773 = vmatpush1.bf16.msra.mxu0 0
      %774 = vmatprep.mubr.bf16.mxu0 0
      %775 = vmatmul.mubr.bf16.gmra.mrb[0].mxu0 %v614
      %v776 = vpop.f32.mrb[0].mxu0
      %v777 = vadd.f32 %v728, %v776
      %v778 = vpop.f32.mrb[0].mxu0
      %v779 = vpop.f32.mrb[0].mxu0
      %v780 = vpop.f32.mrb[0].mxu0
      %781 = vdwg.mxu0
      %v782 = vpack.c.bf16 %v651, %v651
      %v783 = vpack.c.bf16 %v714, %v714
      %v785 = vlaneseq
      %v786 = vshrl.u32 %v785, 7
      %v787 = vsub.s32 0, %v786
      %v788 = vrot.slane %v588, %v787
      %vm790 = vcmask 64512
      %v792 = vsel %vm790, %v782, 0
      %v795 = vsel %vm790, %v783, 0
      %797 = vmatprep.subr.bf16.mxu0 0
      %798 = vmatpush1.bf16.xpose.msra.mxu0 %v795
      %799 = vmatprep.subr.bf16.mxu0 0
      %800 = vmatpush1.bf16.xpose.msra.mxu0 0
      %801 = vmatprep.subr.bf16.mxu0 0
      %802 = vmatpush1.bf16.xpose.msra.mxu0 0
      %803 = vmatprep.subr.bf16.mxu0 0
      %804 = vmatpush1.bf16.xpose.msra.mxu0 0
      %805 = vmatprep.subr.bf16.mxu0 0
      %806 = vmatpush1.bf16.xpose.msra.mxu0 0
      %807 = vmatprep.subr.bf16.mxu0 0
      %808 = vmatpush1.bf16.xpose.msra.mxu0 0
      %809 = vmatprep.subr.bf16.mxu0 0
      %810 = vmatpush1.bf16.xpose.msra.mxu0 0
      %811 = vmatprep.subr.bf16.mxu0 0
      %812 = vmatpush1.bf16.xpose.msra.mxu0 0
      %813 = vmatprep.subr.bf16.mxu0 0
      %814 = vmatpush1.bf16.xpose.msra.mxu0 0
      %815 = vmatprep.subr.bf16.mxu0 0
      %816 = vmatpush1.bf16.xpose.msra.mxu0 0
      %817 = vmatprep.subr.bf16.mxu0 0
      %818 = vmatpush1.bf16.xpose.msra.mxu0 0
      %819 = vmatprep.subr.bf16.mxu0 0
      %820 = vmatpush1.bf16.xpose.msra.mxu0 0
      %821 = vmatprep.subr.bf16.mxu0 0
      %822 = vmatpush1.bf16.xpose.msra.mxu0 0
      %823 = vmatprep.subr.bf16.mxu0 0
      %824 = vmatpush1.bf16.xpose.msra.mxu0 0
      %825 = vmatprep.subr.bf16.mxu0 0
      %826 = vmatpush1.bf16.xpose.msra.mxu0 0
      %827 = vmatprep.subr.bf16.mxu0 0
      %828 = vmatpush1.bf16.xpose.msra.mxu0 0
      %829 = vmatprep.mubr.bf16.mxu0 0
      %830 = vmatmul.mubr.bf16.gmra.mrb[0].mxu0 %v792
      %v831 = vpop.f32.mrb[0].mxu0
      %v832 = vadd.f32 %v788, %v831
      %v833 = vpop.f32.mrb[0].mxu0
      %v834 = vpop.f32.mrb[0].mxu0
      %v835 = vpop.f32.mrb[0].mxu0
      %836 = vdwg.mxu0
      %v837 = vsel %vm790, %v832, -inf
      %838 = vmax.xlane.f32.xlu0 %v837
      %v839 = vpop.xlane.xlu0 %838
      %v840 = vsub.f32 %v832, %v839
      %v841 = vmul.f32 %v840, 1.442695
      %v842 = vpow.pop %v841
      %v843 = vsel %vm790, %v842, 0.0
      %844 = vadd.xlane.f32.xlu0 %v843
      %v845 = vpop.xlane.xlu0 %844
      %v846 = vrcp.pop %v845
      %v847 = vmul.f32 %v842, %v846
      %v848 = vpack.c.bf16 %v847, %v847
      %v849 = vpack.c.bf16 %v777, %v777
      %v851 = vsel %vm790, %v848, 0
      %vm853 = vcmask 1043456
      %v855 = vsel %vm853, %v849, 0
      %857 = vmatprep.subr.bf16.mxu0 0
      %858 = vmatpush1.bf16.msra.mxu0 %v855
      %859 = vmatprep.subr.bf16.mxu0 0
      %860 = vmatpush1.bf16.msra.mxu0 0
      %861 = vmatprep.subr.bf16.mxu0 0
      %862 = vmatpush1.bf16.msra.mxu0 0
      %863 = vmatprep.subr.bf16.mxu0 0
      %864 = vmatpush1.bf16.msra.mxu0 0
      %865 = vmatprep.subr.bf16.mxu0 0
      %866 = vmatpush1.bf16.msra.mxu0 0
      %867 = vmatprep.subr.bf16.mxu0 0
      %868 = vmatpush1.bf16.msra.mxu0 0
      %869 = vmatprep.subr.bf16.mxu0 0
      %870 = vmatpush1.bf16.msra.mxu0 0
      %871 = vmatprep.subr.bf16.mxu0 0
      %872 = vmatpush1.bf16.msra.mxu0 0
      %873 = vmatprep.subr.bf16.mxu0 0
      %874 = vmatpush1.bf16.msra.mxu0 0
      %875 = vmatprep.subr.bf16.mxu0 0
      %876 = vmatpush1.bf16.msra.mxu0 0
      %877 = vmatprep.subr.bf16.mxu0 0
      %878 = vmatpush1.bf16.msra.mxu0 0
      %879 = vmatprep.subr.bf16.mxu0 0
      %880 = vmatpush1.bf16.msra.mxu0 0
      %881 = vmatprep.subr.bf16.mxu0 0
      %882 = vmatpush1.bf16.msra.mxu0 0
      %883 = vmatprep.subr.bf16.mxu0 0
      %884 = vmatpush1.bf16.msra.mxu0 0
      %885 = vmatprep.subr.bf16.mxu0 0
      %886 = vmatpush1.bf16.msra.mxu0 0
      %887 = vmatprep.subr.bf16.mxu0 0
      %888 = vmatpush1.bf16.msra.mxu0 0
      %889 = vmatprep.mubr.bf16.mxu0 0
      %890 = vmatmul.mubr.bf16.gmra.mrb[0].mxu0 %v851
      %v891 = vpop.f32.mrb[0].mxu0
      %v892 = vadd.f32 0.0, %v891
      %v893 = vpop.f32.mrb[0].mxu0
      %v894 = vpop.f32.mrb[0].mxu0
      %v895 = vpop.f32.mrb[0].mxu0
      %896 = vdwg.mxu0
      %v897 = vpack.c.bf16 %v892, %v892
      %v898 = vld [vmem:[%s8] sm:$0xf]
      %s899 = scalar_lea.vmem %s2, 16
      %v900 = vld [vmem:[%s899] sm:$0xf]
      %v901 = vld [vmem:[%s899 + $0x4] sm:$0xf]
      %v902 = vld [vmem:[%s899 + $0x8] sm:$0xf]
      %v903 = vld [vmem:[%s899 + $0xc] sm:$0xf]
      %s904 = scalar_lea.vmem %s3, 1
      %v905 = vld [vmem:[%s904] sm:$0x1]
      %v907 = vlaneseq
      %v908 = vshrl.u32 %v907, 7
      %v909 = vsub.s32 0, %v908
      %v910 = vrot.slane %v905, %v909
      %v916 = vunpack.c.l.b16 %v900
      %v917 = vunpack.c.l.b16 %v901
      %v918 = vunpack.c.l.b16 %v902
      %v919 = vunpack.c.l.b16 %v903
      %v920 = vpack.c.b16 %v917, %v916
      %v921 = vpack.c.b16 %v919, %v918
      %924 = vmatprep.subr.bf16.mxu0 0
      %925 = vmatpush1.bf16.msra.mxu0 %v920
      %926 = vmatprep.subr.bf16.mxu0 0
      %927 = vmatpush1.bf16.msra.mxu0 %v921
      %928 = vmatprep.subr.bf16.mxu0 0
      %929 = vmatpush1.bf16.msra.mxu0 0
      %930 = vmatprep.subr.bf16.mxu0 0
      %931 = vmatpush1.bf16.msra.mxu0 0
      %932 = vmatprep.subr.bf16.mxu0 0
      %933 = vmatpush1.bf16.msra.mxu0 0
      %934 = vmatprep.subr.bf16.mxu0 0
      %935 = vmatpush1.bf16.msra.mxu0 0
      %936 = vmatprep.subr.bf16.mxu0 0
      %937 = vmatpush1.bf16.msra.mxu0 0
      %938 = vmatprep.subr.bf16.mxu0 0
      %939 = vmatpush1.bf16.msra.mxu0 0
      %940 = vmatprep.subr.bf16.mxu0 0
      %941 = vmatpush1.bf16.msra.mxu0 0
      %942 = vmatprep.subr.bf16.mxu0 0
      %943 = vmatpush1.bf16.msra.mxu0 0
      %944 = vmatprep.subr.bf16.mxu0 0
      %945 = vmatpush1.bf16.msra.mxu0 0
      %946 = vmatprep.subr.bf16.mxu0 0
      %947 = vmatpush1.bf16.msra.mxu0 0
      %948 = vmatprep.subr.bf16.mxu0 0
      %949 = vmatpush1.bf16.msra.mxu0 0
      %950 = vmatprep.subr.bf16.mxu0 0
      %951 = vmatpush1.bf16.msra.mxu0 0
      %952 = vmatprep.subr.bf16.mxu0 0
      %953 = vmatpush1.bf16.msra.mxu0 0
      %954 = vmatprep.subr.bf16.mxu0 0
      %955 = vmatpush1.bf16.msra.mxu0 0
      %956 = vmatprep.mubr.bf16.mxu0 0
      %957 = vmatmul.mubr.bf16.gmra.mrb[0].mxu0 %v614
      %v958 = vpop.f32.mrb[0].mxu0
      %v959 = vadd.f32 %v910, %v958
      %v960 = vpop.f32.mrb[0].mxu0
      %v961 = vpop.f32.mrb[0].mxu0
      %v962 = vpop.f32.mrb[0].mxu0
      %963 = vdwg.mxu0
      %s964 = scalar_lea.vmem %s4, 16
      %v965 = vld [vmem:[%s964] sm:$0xf]
      %v966 = vld [vmem:[%s964 + $0x4] sm:$0xf]
      %v967 = vld [vmem:[%s964 + $0x8] sm:$0xf]
      %v968 = vld [vmem:[%s964 + $0xc] sm:$0xf]
      %s969 = scalar_lea.vmem %s5, 1
      %v970 = vld [vmem:[%s969] sm:$0x1]
      %v972 = vlaneseq
      %v973 = vshrl.u32 %v972, 7
      %v974 = vsub.s32 0, %v973
      %v975 = vrot.slane %v970, %v974
      %v981 = vunpack.c.l.b16 %v965
      %v982 = vunpack.c.l.b16 %v966
      %v983 = vunpack.c.l.b16 %v967
      %v984 = vunpack.c.l.b16 %v968
      %v985 = vpack.c.b16 %v982, %v981
      %v986 = vpack.c.b16 %v984, %v983
      %989 = vmatprep.subr.bf16.mxu0 0
      %990 = vmatpush1.bf16.msra.mxu0 %v985
      %991 = vmatprep.subr.bf16.mxu0 0
      %992 = vmatpush1.bf16.msra.mxu0 %v986
      %993 = vmatprep.subr.bf16.mxu0 0
      %994 = vmatpush1.bf16.msra.mxu0 0
      %995 = vmatprep.subr.bf16.mxu0 0
      %996 = vmatpush1.bf16.msra.mxu0 0
      %997 = vmatprep.subr.bf16.mxu0 0
      %998 = vmatpush1.bf16.msra.mxu0 0
      %999 = vmatprep.subr.bf16.mxu0 0
      %1000 = vmatpush1.bf16.msra.mxu0 0
      %1001 = vmatprep.subr.bf16.mxu0 0
      %1002 = vmatpush1.bf16.msra.mxu0 0
      %1003 = vmatprep.subr.bf16.mxu0 0
      %1004 = vmatpush1.bf16.msra.mxu0 0
      %1005 = vmatprep.subr.bf16.mxu0 0
      %1006 = vmatpush1.bf16.msra.mxu0 0
      %1007 = vmatprep.subr.bf16.mxu0 0
      %1008 = vmatpush1.bf16.msra.mxu0 0
      %1009 = vmatprep.subr.bf16.mxu0 0
      %1010 = vmatpush1.bf16.msra.mxu0 0
      %1011 = vmatprep.subr.bf16.mxu0 0
      %1012 = vmatpush1.bf16.msra.mxu0 0
      %1013 = vmatprep.subr.bf16.mxu0 0
      %1014 = vmatpush1.bf16.msra.mxu0 0
      %1015 = vmatprep.subr.bf16.mxu0 0
      %1016 = vmatpush1.bf16.msra.mxu0 0
      %1017 = vmatprep.subr.bf16.mxu0 0
      %1018 = vmatpush1.bf16.msra.mxu0 0
      %1019 = vmatprep.subr.bf16.mxu0 0
      %1020 = vmatpush1.bf16.msra.mxu0 0
      %1021 = vmatprep.mubr.bf16.mxu0 0
      %1022 = vmatmul.mubr.bf16.gmra.mrb[0].mxu0 %v614
      %v1023 = vpop.f32.mrb[0].mxu0
      %v1024 = vadd.f32 %v975, %v1023
      %v1025 = vpop.f32.mrb[0].mxu0
      %v1026 = vpop.f32.mrb[0].mxu0
      %v1027 = vpop.f32.mrb[0].mxu0
      %1028 = vdwg.mxu0
      %s1029 = scalar_lea.vmem %s6, 16
      %v1030 = vld [vmem:[%s1029] sm:$0xf]
      %v1031 = vld [vmem:[%s1029 + $0x4] sm:$0xf]
      %v1032 = vld [vmem:[%s1029 + $0x8] sm:$0xf]
      %v1033 = vld [vmem:[%s1029 + $0xc] sm:$0xf]
      %s1034 = scalar_lea.vmem %s7, 1
      %v1035 = vld [vmem:[%s1034] sm:$0x1]
      %v1037 = vlaneseq
      %v1038 = vshrl.u32 %v1037, 7
      %v1039 = vsub.s32 0, %v1038
      %v1040 = vrot.slane %v1035, %v1039
      %v1046 = vunpack.c.l.b16 %v1030
      %v1047 = vunpack.c.l.b16 %v1031
      %v1048 = vunpack.c.l.b16 %v1032
      %v1049 = vunpack.c.l.b16 %v1033
      %v1050 = vpack.c.b16 %v1047, %v1046
      %v1051 = vpack.c.b16 %v1049, %v1048
      %1054 = vmatprep.subr.bf16.mxu0 0
      %1055 = vmatpush1.bf16.msra.mxu0 %v1050
      %1056 = vmatprep.subr.bf16.mxu0 0
      %1057 = vmatpush1.bf16.msra.mxu0 %v1051
      %1058 = vmatprep.subr.bf16.mxu0 0
      %1059 = vmatpush1.bf16.msra.mxu0 0
      %1060 = vmatprep.subr.bf16.mxu0 0
      %1061 = vmatpush1.bf16.msra.mxu0 0
      %1062 = vmatprep.subr.bf16.mxu0 0
      %1063 = vmatpush1.bf16.msra.mxu0 0
      %1064 = vmatprep.subr.bf16.mxu0 0
      %1065 = vmatpush1.bf16.msra.mxu0 0
      %1066 = vmatprep.subr.bf16.mxu0 0
      %1067 = vmatpush1.bf16.msra.mxu0 0
      %1068 = vmatprep.subr.bf16.mxu0 0
      %1069 = vmatpush1.bf16.msra.mxu0 0
      %1070 = vmatprep.subr.bf16.mxu0 0
      %1071 = vmatpush1.bf16.msra.mxu0 0
      %1072 = vmatprep.subr.bf16.mxu0 0
      %1073 = vmatpush1.bf16.msra.mxu0 0
      %1074 = vmatprep.subr.bf16.mxu0 0
      %1075 = vmatpush1.bf16.msra.mxu0 0
      %1076 = vmatprep.subr.bf16.mxu0 0
      %1077 = vmatpush1.bf16.msra.mxu0 0
      %1078 = vmatprep.subr.bf16.mxu0 0
      %1079 = vmatpush1.bf16.msra.mxu0 0
      %1080 = vmatprep.subr.bf16.mxu0 0
      %1081 = vmatpush1.bf16.msra.mxu0 0
      %1082 = vmatprep.subr.bf16.mxu0 0
      %1083 = vmatpush1.bf16.msra.mxu0 0
      %1084 = vmatprep.subr.bf16.mxu0 0
      %1085 = vmatpush1.bf16.msra.mxu0 0
      %1086 = vmatprep.mubr.bf16.mxu0 0
      %1087 = vmatmul.mubr.bf16.gmra.mrb[0].mxu0 %v614
      %v1088 = vpop.f32.mrb[0].mxu0
      %v1089 = vadd.f32 %v1040, %v1088
      %v1090 = vpop.f32.mrb[0].mxu0
      %v1091 = vpop.f32.mrb[0].mxu0
      %v1092 = vpop.f32.mrb[0].mxu0
      %1093 = vdwg.mxu0
      %v1094 = vpack.c.bf16 %v959, %v959
      %v1095 = vpack.c.bf16 %v1024, %v1024
      %v1097 = vsel %vm790, %v1094, 0
      %v1100 = vsel %vm790, %v1095, 0
      %1102 = vmatprep.subr.bf16.mxu0 0
      %1103 = vmatpush1.bf16.xpose.msra.mxu0 %v1100
      %1104 = vmatprep.subr.bf16.mxu0 0
      %1105 = vmatpush1.bf16.xpose.msra.mxu0 0
      %1106 = vmatprep.subr.bf16.mxu0 0
      %1107 = vmatpush1.bf16.xpose.msra.mxu0 0
      %1108 = vmatprep.subr.bf16.mxu0 0
      %1109 = vmatpush1.bf16.xpose.msra.mxu0 0
      %1110 = vmatprep.subr.bf16.mxu0 0
      %1111 = vmatpush1.bf16.xpose.msra.mxu0 0
      %1112 = vmatprep.subr.bf16.mxu0 0
      %1113 = vmatpush1.bf16.xpose.msra.mxu0 0
      %1114 = vmatprep.subr.bf16.mxu0 0
      %1115 = vmatpush1.bf16.xpose.msra.mxu0 0
      %1116 = vmatprep.subr.bf16.mxu0 0
      %1117 = vmatpush1.bf16.xpose.msra.mxu0 0
      %1118 = vmatprep.subr.bf16.mxu0 0
      %1119 = vmatpush1.bf16.xpose.msra.mxu0 0
      %1120 = vmatprep.subr.bf16.mxu0 0
      %1121 = vmatpush1.bf16.xpose.msra.mxu0 0
      %1122 = vmatprep.subr.bf16.mxu0 0
      %1123 = vmatpush1.bf16.xpose.msra.mxu0 0
      %1124 = vmatprep.subr.bf16.mxu0 0
      %1125 = vmatpush1.bf16.xpose.msra.mxu0 0
      %1126 = vmatprep.subr.bf16.mxu0 0
      %1127 = vmatpush1.bf16.xpose.msra.mxu0 0
      %1128 = vmatprep.subr.bf16.mxu0 0
      %1129 = vmatpush1.bf16.xpose.msra.mxu0 0
      %1130 = vmatprep.subr.bf16.mxu0 0
      %1131 = vmatpush1.bf16.xpose.msra.mxu0 0
      %1132 = vmatprep.subr.bf16.mxu0 0
      %1133 = vmatpush1.bf16.xpose.msra.mxu0 0
      %1134 = vmatprep.mubr.bf16.mxu0 0
      %1135 = vmatmul.mubr.bf16.gmra.mrb[0].mxu0 %v1097
      %v1136 = vpop.f32.mrb[0].mxu0
      %v1137 = vadd.f32 %v788, %v1136
      %v1138 = vpop.f32.mrb[0].mxu0
      %v1139 = vpop.f32.mrb[0].mxu0
      %v1140 = vpop.f32.mrb[0].mxu0
      %1141 = vdwg.mxu0
      %v1142 = vsel %vm790, %v1137, -inf
      %1143 = vmax.xlane.f32.xlu0 %v1142
      %v1144 = vpop.xlane.xlu0 %1143
      %v1145 = vsub.f32 %v1137, %v1144
      %v1146 = vmul.f32 %v1145, 1.442695
      %v1147 = vpow.pop %v1146
      %v1148 = vsel %vm790, %v1147, 0.0
      %1149 = vadd.xlane.f32.xlu0 %v1148
      %v1150 = vpop.xlane.xlu0 %1149
      %v1151 = vrcp.pop %v1150
      %v1152 = vmul.f32 %v1147, %v1151
      %v1153 = vpack.c.bf16 %v1152, %v1152
      %v1154 = vpack.c.bf16 %v1089, %v1089
      %v1156 = vsel %vm790, %v1153, 0
      %v1159 = vsel %vm853, %v1154, 0
      %1161 = vmatprep.subr.bf16.mxu0 0
      %1162 = vmatpush1.bf16.msra.mxu0 %v1159
      %1163 = vmatprep.subr.bf16.mxu0 0
      %1164 = vmatpush1.bf16.msra.mxu0 0
      %1165 = vmatprep.subr.bf16.mxu0 0
      %1166 = vmatpush1.bf16.msra.mxu0 0
      %1167 = vmatprep.subr.bf16.mxu0 0
      %1168 = vmatpush1.bf16.msra.mxu0 0
      %1169 = vmatprep.subr.bf16.mxu0 0
      %1170 = vmatpush1.bf16.msra.mxu0 0
      %1171 = vmatprep.subr.bf16.mxu0 0
      %1172 = vmatpush1.bf16.msra.mxu0 0
      %1173 = vmatprep.subr.bf16.mxu0 0
      %1174 = vmatpush1.bf16.msra.mxu0 0
      %1175 = vmatprep.subr.bf16.mxu0 0
      %1176 = vmatpush1.bf16.msra.mxu0 0
      %1177 = vmatprep.subr.bf16.mxu0 0
      %1178 = vmatpush1.bf16.msra.mxu0 0
      %1179 = vmatprep.subr.bf16.mxu0 0
      %1180 = vmatpush1.bf16.msra.mxu0 0
      %1181 = vmatprep.subr.bf16.mxu0 0
      %1182 = vmatpush1.bf16.msra.mxu0 0
      %1183 = vmatprep.subr.bf16.mxu0 0
      %1184 = vmatpush1.bf16.msra.mxu0 0
      %1185 = vmatprep.subr.bf16.mxu0 0
      %1186 = vmatpush1.bf16.msra.mxu0 0
      %1187 = vmatprep.subr.bf16.mxu0 0
      %1188 = vmatpush1.bf16.msra.mxu0 0
      %1189 = vmatprep.subr.bf16.mxu0 0
      %1190 = vmatpush1.bf16.msra.mxu0 0
      %1191 = vmatprep.subr.bf16.mxu0 0
      %1192 = vmatpush1.bf16.msra.mxu0 0
      %1193 = vmatprep.mubr.bf16.mxu0 0
      %1194 = vmatmul.mubr.bf16.gmra.mrb[0].mxu0 %v1156
      %v1195 = vpop.f32.mrb[0].mxu0
      %v1196 = vadd.f32 0.0, %v1195
      %v1197 = vpop.f32.mrb[0].mxu0
      %v1198 = vpop.f32.mrb[0].mxu0
      %v1199 = vpop.f32.mrb[0].mxu0
      %1200 = vdwg.mxu0
      %v1201 = vpack.c.bf16 %v1196, %v1196
      %s1202 = scalar_lea.vmem %s8, 4
      %v1203 = vld [vmem:[%s1202] sm:$0xf]
      %v1205 = vsel %vm790, %v1201, 0
      %v1208 = vsel %vm853, %v1203, 0
      %1210 = vmatprep.subr.bf16.mxu0 0
      %1211 = vmatpush1.bf16.msra.mxu0 %v1208
      %1212 = vmatprep.subr.bf16.mxu0 0
      %1213 = vmatpush1.bf16.msra.mxu0 0
      %1214 = vmatprep.subr.bf16.mxu0 0
      %1215 = vmatpush1.bf16.msra.mxu0 0
      %1216 = vmatprep.subr.bf16.mxu0 0
      %1217 = vmatpush1.bf16.msra.mxu0 0
      %1218 = vmatprep.subr.bf16.mxu0 0
      %1219 = vmatpush1.bf16.msra.mxu0 0
      %1220 = vmatprep.subr.bf16.mxu0 0
      %1221 = vmatpush1.bf16.msra.mxu0 0
      %1222 = vmatprep.subr.bf16.mxu0 0
      %1223 = vmatpush1.bf16.msra.mxu0 0
      %1224 = vmatprep.subr.bf16.mxu0 0
      %1225 = vmatpush1.bf16.msra.mxu0 0
      %1226 = vmatprep.subr.bf16.mxu0 0
      %1227 = vmatpush1.bf16.msra.mxu0 0
      %1228 = vmatprep.subr.bf16.mxu0 0
      %1229 = vmatpush1.bf16.msra.mxu0 0
      %1230 = vmatprep.subr.bf16.mxu0 0
      %1231 = vmatpush1.bf16.msra.mxu0 0
      %1232 = vmatprep.subr.bf16.mxu0 0
      %1233 = vmatpush1.bf16.msra.mxu0 0
      %1234 = vmatprep.subr.bf16.mxu0 0
      %1235 = vmatpush1.bf16.msra.mxu0 0
      %1236 = vmatprep.subr.bf16.mxu0 0
      %1237 = vmatpush1.bf16.msra.mxu0 0
      %1238 = vmatprep.subr.bf16.mxu0 0
      %1239 = vmatpush1.bf16.msra.mxu0 0
      %1240 = vmatprep.subr.bf16.mxu0 0
      %1241 = vmatpush1.bf16.msra.mxu0 0
      %1242 = vmatprep.mubr.bf16.mxu0 0
      %1243 = vmatmul.mubr.bf16.gmra.mrb[0].mxu0 %v1205
      %v1244 = vpop.f32.mrb[0].mxu0
      %v1245 = vadd.f32 0.0, %v1244
      %v1246 = vpop.f32.mrb[0].mxu0
      %v1247 = vpop.f32.mrb[0].mxu0
      %v1248 = vpop.f32.mrb[0].mxu0
      %1249 = vdwg.mxu0
      %v1251 = vsel %vm790, %v897, 0
      %v1254 = vsel %vm853, %v898, 0
      %1256 = vmatprep.subr.bf16.mxu0 0
      %1257 = vmatpush1.bf16.msra.mxu0 %v1254
      %1258 = vmatprep.subr.bf16.mxu0 0
      %1259 = vmatpush1.bf16.msra.mxu0 0
      %1260 = vmatprep.subr.bf16.mxu0 0
      %1261 = vmatpush1.bf16.msra.mxu0 0
      %1262 = vmatprep.subr.bf16.mxu0 0
      %1263 = vmatpush1.bf16.msra.mxu0 0
      %1264 = vmatprep.subr.bf16.mxu0 0
      %1265 = vmatpush1.bf16.msra.mxu0 0
      %1266 = vmatprep.subr.bf16.mxu0 0
      %1267 = vmatpush1.bf16.msra.mxu0 0
      %1268 = vmatprep.subr.bf16.mxu0 0
      %1269 = vmatpush1.bf16.msra.mxu0 0
      %1270 = vmatprep.subr.bf16.mxu0 0
      %1271 = vmatpush1.bf16.msra.mxu0 0
      %1272 = vmatprep.subr.bf16.mxu0 0
      %1273 = vmatpush1.bf16.msra.mxu0 0
      %1274 = vmatprep.subr.bf16.mxu0 0
      %1275 = vmatpush1.bf16.msra.mxu0 0
      %1276 = vmatprep.subr.bf16.mxu0 0
      %1277 = vmatpush1.bf16.msra.mxu0 0
      %1278 = vmatprep.subr.bf16.mxu0 0
      %1279 = vmatpush1.bf16.msra.mxu0 0
      %1280 = vmatprep.subr.bf16.mxu0 0
      %1281 = vmatpush1.bf16.msra.mxu0 0
      %1282 = vmatprep.subr.bf16.mxu0 0
      %1283 = vmatpush1.bf16.msra.mxu0 0
      %1284 = vmatprep.subr.bf16.mxu0 0
      %1285 = vmatpush1.bf16.msra.mxu0 0
      %1286 = vmatprep.subr.bf16.mxu0 0
      %1287 = vmatpush1.bf16.msra.mxu0 0
      %1288 = vmatprep.mubr.bf16.mxu0 0
      %1289 = vmatmul.mubr.bf16.gmra.mrb[0].mxu0 %v1251
      %v1290 = vpop.f32.mrb[0].mxu0
      %v1291 = vadd.f32 %v1245, %v1290
      %v1292 = vpop.f32.mrb[0].mxu0
      %v1293 = vpop.f32.mrb[0].mxu0
      %v1294 = vpop.f32.mrb[0].mxu0
      %1295 = vdwg.mxu0
      %s1296 = scalar_lea.vmem %s2, 32
      %v1297 = vld [vmem:[%s1296] sm:$0xf]
      %v1298 = vld [vmem:[%s1296 + $0x4] sm:$0xf]
      %v1299 = vld [vmem:[%s1296 + $0x8] sm:$0xf]
      %v1300 = vld [vmem:[%s1296 + $0xc] sm:$0xf]
      %s1301 = scalar_lea.vmem %s3, 2
      %v1302 = vld [vmem:[%s1301] sm:$0x1]
      %v1304 = vlaneseq
      %v1305 = vshrl.u32 %v1304, 7
      %v1306 = vsub.s32 0, %v1305
      %v1307 = vrot.slane %v1302, %v1306
      %v1313 = vunpack.c.l.b16 %v1297
      %v1314 = vunpack.c.l.b16 %v1298
      %v1315 = vunpack.c.l.b16 %v1299
      %v1316 = vunpack.c.l.b16 %v1300
      %v1317 = vpack.c.b16 %v1314, %v1313
      %v1318 = vpack.c.b16 %v1316, %v1315
      %1321 = vmatprep.subr.bf16.mxu0 0
      %1322 = vmatpush1.bf16.msra.mxu0 %v1317
      %1323 = vmatprep.subr.bf16.mxu0 0
      %1324 = vmatpush1.bf16.msra.mxu0 %v1318
      %1325 = vmatprep.subr.bf16.mxu0 0
      %1326 = vmatpush1.bf16.msra.mxu0 0
      %1327 = vmatprep.subr.bf16.mxu0 0
      %1328 = vmatpush1.bf16.msra.mxu0 0
      %1329 = vmatprep.subr.bf16.mxu0 0
      %1330 = vmatpush1.bf16.msra.mxu0 0
      %1331 = vmatprep.subr.bf16.mxu0 0
      %1332 = vmatpush1.bf16.msra.mxu0 0
      %1333 = vmatprep.subr.bf16.mxu0 0
      %1334 = vmatpush1.bf16.msra.mxu0 0
      %1335 = vmatprep.subr.bf16.mxu0 0
      %1336 = vmatpush1.bf16.msra.mxu0 0
      %1337 = vmatprep.subr.bf16.mxu0 0
      %1338 = vmatpush1.bf16.msra.mxu0 0
      %1339 = vmatprep.subr.bf16.mxu0 0
      %1340 = vmatpush1.bf16.msra.mxu0 0
      %1341 = vmatprep.subr.bf16.mxu0 0
      %1342 = vmatpush1.bf16.msra.mxu0 0
      %1343 = vmatprep.subr.bf16.mxu0 0
      %1344 = vmatpush1.bf16.msra.mxu0 0
      %1345 = vmatprep.subr.bf16.mxu0 0
      %1346 = vmatpush1.bf16.msra.mxu0 0
      %1347 = vmatprep.subr.bf16.mxu0 0
      %1348 = vmatpush1.bf16.msra.mxu0 0
      %1349 = vmatprep.subr.bf16.mxu0 0
      %1350 = vmatpush1.bf16.msra.mxu0 0
      %1351 = vmatprep.subr.bf16.mxu0 0
      %1352 = vmatpush1.bf16.msra.mxu0 0
      %1353 = vmatprep.mubr.bf16.mxu0 0
      %1354 = vmatmul.mubr.bf16.gmra.mrb[0].mxu0 %v614
      %v1355 = vpop.f32.mrb[0].mxu0
      %v1356 = vadd.f32 %v1307, %v1355
      %v1357 = vpop.f32.mrb[0].mxu0
      %v1358 = vpop.f32.mrb[0].mxu0
      %v1359 = vpop.f32.mrb[0].mxu0
      %1360 = vdwg.mxu0
      %s1361 = scalar_lea.vmem %s4, 32
      %v1362 = vld [vmem:[%s1361] sm:$0xf]
      %v1363 = vld [vmem:[%s1361 + $0x4] sm:$0xf]
      %v1364 = vld [vmem:[%s1361 + $0x8] sm:$0xf]
      %v1365 = vld [vmem:[%s1361 + $0xc] sm:$0xf]
      %s1366 = scalar_lea.vmem %s5, 2
      %v1367 = vld [vmem:[%s1366] sm:$0x1]
      %v1369 = vlaneseq
      %v1370 = vshrl.u32 %v1369, 7
      %v1371 = vsub.s32 0, %v1370
      %v1372 = vrot.slane %v1367, %v1371
      %v1378 = vunpack.c.l.b16 %v1362
      %v1379 = vunpack.c.l.b16 %v1363
      %v1380 = vunpack.c.l.b16 %v1364
      %v1381 = vunpack.c.l.b16 %v1365
      %v1382 = vpack.c.b16 %v1379, %v1378
      %v1383 = vpack.c.b16 %v1381, %v1380
      %1386 = vmatprep.subr.bf16.mxu0 0
      %1387 = vmatpush1.bf16.msra.mxu0 %v1382
      %1388 = vmatprep.subr.bf16.mxu0 0
      %1389 = vmatpush1.bf16.msra.mxu0 %v1383
      %1390 = vmatprep.subr.bf16.mxu0 0
      %1391 = vmatpush1.bf16.msra.mxu0 0
      %1392 = vmatprep.subr.bf16.mxu0 0
      %1393 = vmatpush1.bf16.msra.mxu0 0
      %1394 = vmatprep.subr.bf16.mxu0 0
      %1395 = vmatpush1.bf16.msra.mxu0 0
      %1396 = vmatprep.subr.bf16.mxu0 0
      %1397 = vmatpush1.bf16.msra.mxu0 0
      %1398 = vmatprep.subr.bf16.mxu0 0
      %1399 = vmatpush1.bf16.msra.mxu0 0
      %1400 = vmatprep.subr.bf16.mxu0 0
      %1401 = vmatpush1.bf16.msra.mxu0 0
      %1402 = vmatprep.subr.bf16.mxu0 0
      %1403 = vmatpush1.bf16.msra.mxu0 0
      %1404 = vmatprep.subr.bf16.mxu0 0
      %1405 = vmatpush1.bf16.msra.mxu0 0
      %1406 = vmatprep.subr.bf16.mxu0 0
      %1407 = vmatpush1.bf16.msra.mxu0 0
      %1408 = vmatprep.subr.bf16.mxu0 0
      %1409 = vmatpush1.bf16.msra.mxu0 0
      %1410 = vmatprep.subr.bf16.mxu0 0
      %1411 = vmatpush1.bf16.msra.mxu0 0
      %1412 = vmatprep.subr.bf16.mxu0 0
      %1413 = vmatpush1.bf16.msra.mxu0 0
      %1414 = vmatprep.subr.bf16.mxu0 0
      %1415 = vmatpush1.bf16.msra.mxu0 0
      %1416 = vmatprep.subr.bf16.mxu0 0
      %1417 = vmatpush1.bf16.msra.mxu0 0
      %1418 = vmatprep.mubr.bf16.mxu0 0
      %1419 = vmatmul.mubr.bf16.gmra.mrb[0].mxu0 %v614
      %v1420 = vpop.f32.mrb[0].mxu0
      %v1421 = vadd.f32 %v1372, %v1420
      %v1422 = vpop.f32.mrb[0].mxu0
      %v1423 = vpop.f32.mrb[0].mxu0
      %v1424 = vpop.f32.mrb[0].mxu0
      %1425 = vdwg.mxu0
      %s1426 = scalar_lea.vmem %s6, 32
      %v1427 = vld [vmem:[%s1426] sm:$0xf]
      %v1428 = vld [vmem:[%s1426 + $0x4] sm:$0xf]
      %v1429 = vld [vmem:[%s1426 + $0x8] sm:$0xf]
      %v1430 = vld [vmem:[%s1426 + $0xc] sm:$0xf]
      %s1431 = scalar_lea.vmem %s7, 2
      %v1432 = vld [vmem:[%s1431] sm:$0x1]
      %v1434 = vlaneseq
      %v1435 = vshrl.u32 %v1434, 7
      %v1436 = vsub.s32 0, %v1435
      %v1437 = vrot.slane %v1432, %v1436
      %v1443 = vunpack.c.l.b16 %v1427
      %v1444 = vunpack.c.l.b16 %v1428
      %v1445 = vunpack.c.l.b16 %v1429
      %v1446 = vunpack.c.l.b16 %v1430
      %v1447 = vpack.c.b16 %v1444, %v1443
      %v1448 = vpack.c.b16 %v1446, %v1445
      %1451 = vmatprep.subr.bf16.mxu0 0
      %1452 = vmatpush1.bf16.msra.mxu0 %v1447
      %1453 = vmatprep.subr.bf16.mxu0 0
      %1454 = vmatpush1.bf16.msra.mxu0 %v1448
      %1455 = vmatprep.subr.bf16.mxu0 0
      %1456 = vmatpush1.bf16.msra.mxu0 0
      %1457 = vmatprep.subr.bf16.mxu0 0
      %1458 = vmatpush1.bf16.msra.mxu0 0
      %1459 = vmatprep.subr.bf16.mxu0 0
      %1460 = vmatpush1.bf16.msra.mxu0 0
      %1461 = vmatprep.subr.bf16.mxu0 0
      %1462 = vmatpush1.bf16.msra.mxu0 0
      %1463 = vmatprep.subr.bf16.mxu0 0
      %1464 = vmatpush1.bf16.msra.mxu0 0
      %1465 = vmatprep.subr.bf16.mxu0 0
      %1466 = vmatpush1.bf16.msra.mxu0 0
      %1467 = vmatprep.subr.bf16.mxu0 0
      %1468 = vmatpush1.bf16.msra.mxu0 0
      %1469 = vmatprep.subr.bf16.mxu0 0
      %1470 = vmatpush1.bf16.msra.mxu0 0
      %1471 = vmatprep.subr.bf16.mxu0 0
      %1472 = vmatpush1.bf16.msra.mxu0 0
      %1473 = vmatprep.subr.bf16.mxu0 0
      %1474 = vmatpush1.bf16.msra.mxu0 0
      %1475 = vmatprep.subr.bf16.mxu0 0
      %1476 = vmatpush1.bf16.msra.mxu0 0
      %1477 = vmatprep.subr.bf16.mxu0 0
      %1478 = vmatpush1.bf16.msra.mxu0 0
      %1479 = vmatprep.subr.bf16.mxu0 0
      %1480 = vmatpush1.bf16.msra.mxu0 0
      %1481 = vmatprep.subr.bf16.mxu0 0
      %1482 = vmatpush1.bf16.msra.mxu0 0
      %1483 = vmatprep.mubr.bf16.mxu0 0
      %1484 = vmatmul.mubr.bf16.gmra.mrb[0].mxu0 %v614
      %v1485 = vpop.f32.mrb[0].mxu0
      %v1486 = vadd.f32 %v1437, %v1485
      %v1487 = vpop.f32.mrb[0].mxu0
      %v1488 = vpop.f32.mrb[0].mxu0
      %v1489 = vpop.f32.mrb[0].mxu0
      %1490 = vdwg.mxu0
      %v1491 = vpack.c.bf16 %v1356, %v1356
      %v1492 = vpack.c.bf16 %v1421, %v1421
      %v1494 = vsel %vm790, %v1491, 0
      %v1497 = vsel %vm790, %v1492, 0
      %1499 = vmatprep.subr.bf16.mxu0 0
      %1500 = vmatpush1.bf16.xpose.msra.mxu0 %v1497
      %1501 = vmatprep.subr.bf16.mxu0 0
      %1502 = vmatpush1.bf16.xpose.msra.mxu0 0
      %1503 = vmatprep.subr.bf16.mxu0 0
      %1504 = vmatpush1.bf16.xpose.msra.mxu0 0
      %1505 = vmatprep.subr.bf16.mxu0 0
      %1506 = vmatpush1.bf16.xpose.msra.mxu0 0
      %1507 = vmatprep.subr.bf16.mxu0 0
      %1508 = vmatpush1.bf16.xpose.msra.mxu0 0
      %1509 = vmatprep.subr.bf16.mxu0 0
      %1510 = vmatpush1.bf16.xpose.msra.mxu0 0
      %1511 = vmatprep.subr.bf16.mxu0 0
      %1512 = vmatpush1.bf16.xpose.msra.mxu0 0
      %1513 = vmatprep.subr.bf16.mxu0 0
      %1514 = vmatpush1.bf16.xpose.msra.mxu0 0
      %1515 = vmatprep.subr.bf16.mxu0 0
      %1516 = vmatpush1.bf16.xpose.msra.mxu0 0
      %1517 = vmatprep.subr.bf16.mxu0 0
      %1518 = vmatpush1.bf16.xpose.msra.mxu0 0
      %1519 = vmatprep.subr.bf16.mxu0 0
      %1520 = vmatpush1.bf16.xpose.msra.mxu0 0
      %1521 = vmatprep.subr.bf16.mxu0 0
      %1522 = vmatpush1.bf16.xpose.msra.mxu0 0
      %1523 = vmatprep.subr.bf16.mxu0 0
      %1524 = vmatpush1.bf16.xpose.msra.mxu0 0
      %1525 = vmatprep.subr.bf16.mxu0 0
      %1526 = vmatpush1.bf16.xpose.msra.mxu0 0
      %1527 = vmatprep.subr.bf16.mxu0 0
      %1528 = vmatpush1.bf16.xpose.msra.mxu0 0
      %1529 = vmatprep.subr.bf16.mxu0 0
      %1530 = vmatpush1.bf16.xpose.msra.mxu0 0
      %1531 = vmatprep.mubr.bf16.mxu0 0
      %1532 = vmatmul.mubr.bf16.gmra.mrb[0].mxu0 %v1494
      %v1533 = vpop.f32.mrb[0].mxu0
      %v1534 = vadd.f32 %v788, %v1533
      %v1535 = vpop.f32.mrb[0].mxu0
      %v1536 = vpop.f32.mrb[0].mxu0
      %v1537 = vpop.f32.mrb[0].mxu0
      %1538 = vdwg.mxu0
      %v1539 = vsel %vm790, %v1534, -inf
      %1540 = vmax.xlane.f32.xlu0 %v1539
      %v1541 = vpop.xlane.xlu0 %1540
      %v1542 = vsub.f32 %v1534, %v1541
      %v1543 = vmul.f32 %v1542, 1.442695
      %v1544 = vpow.pop %v1543
      %v1545 = vsel %vm790, %v1544, 0.0
      %1546 = vadd.xlane.f32.xlu0 %v1545
      %v1547 = vpop.xlane.xlu0 %1546
      %v1548 = vrcp.pop %v1547
      %v1549 = vmul.f32 %v1544, %v1548
      %v1550 = vpack.c.bf16 %v1549, %v1549
      %v1551 = vpack.c.bf16 %v1486, %v1486
      %v1553 = vsel %vm790, %v1550, 0
      %v1556 = vsel %vm853, %v1551, 0
      %1558 = vmatprep.subr.bf16.mxu0 0
      %1559 = vmatpush1.bf16.msra.mxu0 %v1556
      %1560 = vmatprep.subr.bf16.mxu0 0
      %1561 = vmatpush1.bf16.msra.mxu0 0
      %1562 = vmatprep.subr.bf16.mxu0 0
      %1563 = vmatpush1.bf16.msra.mxu0 0
      %1564 = vmatprep.subr.bf16.mxu0 0
      %1565 = vmatpush1.bf16.msra.mxu0 0
      %1566 = vmatprep.subr.bf16.mxu0 0
      %1567 = vmatpush1.bf16.msra.mxu0 0
      %1568 = vmatprep.subr.bf16.mxu0 0
      %1569 = vmatpush1.bf16.msra.mxu0 0
      %1570 = vmatprep.subr.bf16.mxu0 0
      %1571 = vmatpush1.bf16.msra.mxu0 0
      %1572 = vmatprep.subr.bf16.mxu0 0
      %1573 = vmatpush1.bf16.msra.mxu0 0
      %1574 = vmatprep.subr.bf16.mxu0 0
      %1575 = vmatpush1.bf16.msra.mxu0 0
      %1576 = vmatprep.subr.bf16.mxu0 0
      %1577 = vmatpush1.bf16.msra.mxu0 0
      %1578 = vmatprep.subr.bf16.mxu0 0
      %1579 = vmatpush1.bf16.msra.mxu0 0
      %1580 = vmatprep.subr.bf16.mxu0 0
      %1581 = vmatpush1.bf16.msra.mxu0 0
      %1582 = vmatprep.subr.bf16.mxu0 0
      %1583 = vmatpush1.bf16.msra.mxu0 0
      %1584 = vmatprep.subr.bf16.mxu0 0
      %1585 = vmatpush1.bf16.msra.mxu0 0
      %1586 = vmatprep.subr.bf16.mxu0 0
      %1587 = vmatpush1.bf16.msra.mxu0 0
      %1588 = vmatprep.subr.bf16.mxu0 0
      %1589 = vmatpush1.bf16.msra.mxu0 0
      %1590 = vmatprep.mubr.bf16.mxu0 0
      %1591 = vmatmul.mubr.bf16.gmra.mrb[0].mxu0 %v1553
      %v1592 = vpop.f32.mrb[0].mxu0
      %v1593 = vadd.f32 0.0, %v1592
      %v1594 = vpop.f32.mrb[0].mxu0
      %v1595 = vpop.f32.mrb[0].mxu0
      %v1596 = vpop.f32.mrb[0].mxu0
      %1597 = vdwg.mxu0
      %v1598 = vpack.c.bf16 %v1593, %v1593
      %s1599 = scalar_lea.vmem %s8, 8
      %v1600 = vld [vmem:[%s1599] sm:$0xf]
      %v1602 = vsel %vm790, %v1598, 0
      %v1605 = vsel %vm853, %v1600, 0
      %1607 = vmatprep.subr.bf16.mxu0 0
      %1608 = vmatpush1.bf16.msra.mxu0 %v1605
      %1609 = vmatprep.subr.bf16.mxu0 0
      %1610 = vmatpush1.bf16.msra.mxu0 0
      %1611 = vmatprep.subr.bf16.mxu0 0
      %1612 = vmatpush1.bf16.msra.mxu0 0
      %1613 = vmatprep.subr.bf16.mxu0 0
      %1614 = vmatpush1.bf16.msra.mxu0 0
      %1615 = vmatprep.subr.bf16.mxu0 0
      %1616 = vmatpush1.bf16.msra.mxu0 0
      %1617 = vmatprep.subr.bf16.mxu0 0
      %1618 = vmatpush1.bf16.msra.mxu0 0
      %1619 = vmatprep.subr.bf16.mxu0 0
      %1620 = vmatpush1.bf16.msra.mxu0 0
      %1621 = vmatprep.subr.bf16.mxu0 0
      %1622 = vmatpush1.bf16.msra.mxu0 0
      %1623 = vmatprep.subr.bf16.mxu0 0
      %1624 = vmatpush1.bf16.msra.mxu0 0
      %1625 = vmatprep.subr.bf16.mxu0 0
      %1626 = vmatpush1.bf16.msra.mxu0 0
      %1627 = vmatprep.subr.bf16.mxu0 0
      %1628 = vmatpush1.bf16.msra.mxu0 0
      %1629 = vmatprep.subr.bf16.mxu0 0
      %1630 = vmatpush1.bf16.msra.mxu0 0
      %1631 = vmatprep.subr.bf16.mxu0 0
      %1632 = vmatpush1.bf16.msra.mxu0 0
      %1633 = vmatprep.subr.bf16.mxu0 0
      %1634 = vmatpush1.bf16.msra.mxu0 0
      %1635 = vmatprep.subr.bf16.mxu0 0
      %1636 = vmatpush1.bf16.msra.mxu0 0
      %1637 = vmatprep.subr.bf16.mxu0 0
      %1638 = vmatpush1.bf16.msra.mxu0 0
      %1639 = vmatprep.mubr.bf16.mxu0 0
      %1640 = vmatmul.mubr.bf16.gmra.mrb[0].mxu0 %v1602
      %v1641 = vpop.f32.mrb[0].mxu0
      %v1642 = vadd.f32 0.0, %v1641
      %v1643 = vpop.f32.mrb[0].mxu0
      %v1644 = vpop.f32.mrb[0].mxu0
      %v1645 = vpop.f32.mrb[0].mxu0
      %1646 = vdwg.mxu0
      %v1647 = vadd.f32 %v1291, %v1642
      %s1648 = scalar_lea.vmem %s2, 48
      %v1649 = vld [vmem:[%s1648] sm:$0xf]
      %v1650 = vld [vmem:[%s1648 + $0x4] sm:$0xf]
      %v1651 = vld [vmem:[%s1648 + $0x8] sm:$0xf]
      %v1652 = vld [vmem:[%s1648 + $0xc] sm:$0xf]
      %s1653 = scalar_lea.vmem %s3, 3
      %v1654 = vld [vmem:[%s1653] sm:$0x1]
      %v1656 = vlaneseq
      %v1657 = vshrl.u32 %v1656, 7
      %v1658 = vsub.s32 0, %v1657
      %v1659 = vrot.slane %v1654, %v1658
      %v1665 = vunpack.c.l.b16 %v1649
      %v1666 = vunpack.c.l.b16 %v1650
      %v1667 = vunpack.c.l.b16 %v1651
      %v1668 = vunpack.c.l.b16 %v1652
      %v1669 = vpack.c.b16 %v1666, %v1665
      %v1670 = vpack.c.b16 %v1668, %v1667
      %1673 = vmatprep.subr.bf16.mxu0 0
      %1674 = vmatpush1.bf16.msra.mxu0 %v1669
      %1675 = vmatprep.subr.bf16.mxu0 0
      %1676 = vmatpush1.bf16.msra.mxu0 %v1670
      %1677 = vmatprep.subr.bf16.mxu0 0
      %1678 = vmatpush1.bf16.msra.mxu0 0
      %1679 = vmatprep.subr.bf16.mxu0 0
      %1680 = vmatpush1.bf16.msra.mxu0 0
      %1681 = vmatprep.subr.bf16.mxu0 0
      %1682 = vmatpush1.bf16.msra.mxu0 0
      %1683 = vmatprep.subr.bf16.mxu0 0
      %1684 = vmatpush1.bf16.msra.mxu0 0
      %1685 = vmatprep.subr.bf16.mxu0 0
      %1686 = vmatpush1.bf16.msra.mxu0 0
      %1687 = vmatprep.subr.bf16.mxu0 0
      %1688 = vmatpush1.bf16.msra.mxu0 0
      %1689 = vmatprep.subr.bf16.mxu0 0
      %1690 = vmatpush1.bf16.msra.mxu0 0
      %1691 = vmatprep.subr.bf16.mxu0 0
      %1692 = vmatpush1.bf16.msra.mxu0 0
      %1693 = vmatprep.subr.bf16.mxu0 0
      %1694 = vmatpush1.bf16.msra.mxu0 0
      %1695 = vmatprep.subr.bf16.mxu0 0
      %1696 = vmatpush1.bf16.msra.mxu0 0
      %1697 = vmatprep.subr.bf16.mxu0 0
      %1698 = vmatpush1.bf16.msra.mxu0 0
      %1699 = vmatprep.subr.bf16.mxu0 0
      %1700 = vmatpush1.bf16.msra.mxu0 0
      %1701 = vmatprep.subr.bf16.mxu0 0
      %1702 = vmatpush1.bf16.msra.mxu0 0
      %1703 = vmatprep.subr.bf16.mxu0 0
      %1704 = vmatpush1.bf16.msra.mxu0 0
      %1705 = vmatprep.mubr.bf16.mxu0 0
      %1706 = vmatmul.mubr.bf16.gmra.mrb[0].mxu0 %v614
      %v1707 = vpop.f32.mrb[0].mxu0
      %v1708 = vadd.f32 %v1659, %v1707
      %v1709 = vpop.f32.mrb[0].mxu0
      %v1710 = vpop.f32.mrb[0].mxu0
      %v1711 = vpop.f32.mrb[0].mxu0
      %1712 = vdwg.mxu0
      %s1713 = scalar_lea.vmem %s4, 48
      %v1714 = vld [vmem:[%s1713] sm:$0xf]
      %v1715 = vld [vmem:[%s1713 + $0x4] sm:$0xf]
      %v1716 = vld [vmem:[%s1713 + $0x8] sm:$0xf]
      %v1717 = vld [vmem:[%s1713 + $0xc] sm:$0xf]
      %s1718 = scalar_lea.vmem %s5, 3
      %v1719 = vld [vmem:[%s1718] sm:$0x1]
      %v1721 = vlaneseq
      %v1722 = vshrl.u32 %v1721, 7
      %v1723 = vsub.s32 0, %v1722
      %v1724 = vrot.slane %v1719, %v1723
      %v1730 = vunpack.c.l.b16 %v1714
      %v1731 = vunpack.c.l.b16 %v1715
      %v1732 = vunpack.c.l.b16 %v1716
      %v1733 = vunpack.c.l.b16 %v1717
      %v1734 = vpack.c.b16 %v1731, %v1730
      %v1735 = vpack.c.b16 %v1733, %v1732
      %1738 = vmatprep.subr.bf16.mxu0 0
      %1739 = vmatpush1.bf16.msra.mxu0 %v1734
      %1740 = vmatprep.subr.bf16.mxu0 0
      %1741 = vmatpush1.bf16.msra.mxu0 %v1735
      %1742 = vmatprep.subr.bf16.mxu0 0
      %1743 = vmatpush1.bf16.msra.mxu0 0
      %1744 = vmatprep.subr.bf16.mxu0 0
      %1745 = vmatpush1.bf16.msra.mxu0 0
      %1746 = vmatprep.subr.bf16.mxu0 0
      %1747 = vmatpush1.bf16.msra.mxu0 0
      %1748 = vmatprep.subr.bf16.mxu0 0
      %1749 = vmatpush1.bf16.msra.mxu0 0
      %1750 = vmatprep.subr.bf16.mxu0 0
      %1751 = vmatpush1.bf16.msra.mxu0 0
      %1752 = vmatprep.subr.bf16.mxu0 0
      %1753 = vmatpush1.bf16.msra.mxu0 0
      %1754 = vmatprep.subr.bf16.mxu0 0
      %1755 = vmatpush1.bf16.msra.mxu0 0
      %1756 = vmatprep.subr.bf16.mxu0 0
      %1757 = vmatpush1.bf16.msra.mxu0 0
      %1758 = vmatprep.subr.bf16.mxu0 0
      %1759 = vmatpush1.bf16.msra.mxu0 0
      %1760 = vmatprep.subr.bf16.mxu0 0
      %1761 = vmatpush1.bf16.msra.mxu0 0
      %1762 = vmatprep.subr.bf16.mxu0 0
      %1763 = vmatpush1.bf16.msra.mxu0 0
      %1764 = vmatprep.subr.bf16.mxu0 0
      %1765 = vmatpush1.bf16.msra.mxu0 0
      %1766 = vmatprep.subr.bf16.mxu0 0
      %1767 = vmatpush1.bf16.msra.mxu0 0
      %1768 = vmatprep.subr.bf16.mxu0 0
      %1769 = vmatpush1.bf16.msra.mxu0 0
      %1770 = vmatprep.mubr.bf16.mxu0 0
      %1771 = vmatmul.mubr.bf16.gmra.mrb[0].mxu0 %v614
      %v1772 = vpop.f32.mrb[0].mxu0
      %v1773 = vadd.f32 %v1724, %v1772
      %v1774 = vpop.f32.mrb[0].mxu0
      %v1775 = vpop.f32.mrb[0].mxu0
      %v1776 = vpop.f32.mrb[0].mxu0
      %1777 = vdwg.mxu0
      %s1778 = scalar_lea.vmem %s6, 48
      %v1779 = vld [vmem:[%s1778] sm:$0xf]
      %v1780 = vld [vmem:[%s1778 + $0x4] sm:$0xf]
      %v1781 = vld [vmem:[%s1778 + $0x8] sm:$0xf]
      %v1782 = vld [vmem:[%s1778 + $0xc] sm:$0xf]
      %s1783 = scalar_lea.vmem %s7, 3
      %v1784 = vld [vmem:[%s1783] sm:$0x1]
      %v1786 = vlaneseq
      %v1787 = vshrl.u32 %v1786, 7
      %v1788 = vsub.s32 0, %v1787
      %v1789 = vrot.slane %v1784, %v1788
      %v1795 = vunpack.c.l.b16 %v1779
      %v1796 = vunpack.c.l.b16 %v1780
      %v1797 = vunpack.c.l.b16 %v1781
      %v1798 = vunpack.c.l.b16 %v1782
      %v1799 = vpack.c.b16 %v1796, %v1795
      %v1800 = vpack.c.b16 %v1798, %v1797
      %1803 = vmatprep.subr.bf16.mxu0 0
      %1804 = vmatpush1.bf16.msra.mxu0 %v1799
      %1805 = vmatprep.subr.bf16.mxu0 0
      %1806 = vmatpush1.bf16.msra.mxu0 %v1800
      %1807 = vmatprep.subr.bf16.mxu0 0
      %1808 = vmatpush1.bf16.msra.mxu0 0
      %1809 = vmatprep.subr.bf16.mxu0 0
      %1810 = vmatpush1.bf16.msra.mxu0 0
      %1811 = vmatprep.subr.bf16.mxu0 0
      %1812 = vmatpush1.bf16.msra.mxu0 0
      %1813 = vmatprep.subr.bf16.mxu0 0
      %1814 = vmatpush1.bf16.msra.mxu0 0
      %1815 = vmatprep.subr.bf16.mxu0 0
      %1816 = vmatpush1.bf16.msra.mxu0 0
      %1817 = vmatprep.subr.bf16.mxu0 0
      %1818 = vmatpush1.bf16.msra.mxu0 0
      %1819 = vmatprep.subr.bf16.mxu0 0
      %1820 = vmatpush1.bf16.msra.mxu0 0
      %1821 = vmatprep.subr.bf16.mxu0 0
      %1822 = vmatpush1.bf16.msra.mxu0 0
      %1823 = vmatprep.subr.bf16.mxu0 0
      %1824 = vmatpush1.bf16.msra.mxu0 0
      %1825 = vmatprep.subr.bf16.mxu0 0
      %1826 = vmatpush1.bf16.msra.mxu0 0
      %1827 = vmatprep.subr.bf16.mxu0 0
      %1828 = vmatpush1.bf16.msra.mxu0 0
      %1829 = vmatprep.subr.bf16.mxu0 0
      %1830 = vmatpush1.bf16.msra.mxu0 0
      %1831 = vmatprep.subr.bf16.mxu0 0
      %1832 = vmatpush1.bf16.msra.mxu0 0
      %1833 = vmatprep.subr.bf16.mxu0 0
      %1834 = vmatpush1.bf16.msra.mxu0 0
      %1835 = vmatprep.mubr.bf16.mxu0 0
      %1836 = vmatmul.mubr.bf16.gmra.mrb[0].mxu0 %v614
      %v1837 = vpop.f32.mrb[0].mxu0
      %v1838 = vadd.f32 %v1789, %v1837
      %v1839 = vpop.f32.mrb[0].mxu0
      %v1840 = vpop.f32.mrb[0].mxu0
      %v1841 = vpop.f32.mrb[0].mxu0
      %1842 = vdwg.mxu0
      %v1843 = vpack.c.bf16 %v1708, %v1708
      %v1844 = vpack.c.bf16 %v1773, %v1773
      %v1846 = vsel %vm790, %v1843, 0
      %v1849 = vsel %vm790, %v1844, 0
      %1851 = vmatprep.subr.bf16.mxu0 0
      %1852 = vmatpush1.bf16.xpose.msra.mxu0 %v1849
      %1853 = vmatprep.subr.bf16.mxu0 0
      %1854 = vmatpush1.bf16.xpose.msra.mxu0 0
      %1855 = vmatprep.subr.bf16.mxu0 0
      %1856 = vmatpush1.bf16.xpose.msra.mxu0 0
      %1857 = vmatprep.subr.bf16.mxu0 0
      %1858 = vmatpush1.bf16.xpose.msra.mxu0 0
      %1859 = vmatprep.subr.bf16.mxu0 0
      %1860 = vmatpush1.bf16.xpose.msra.mxu0 0
      %1861 = vmatprep.subr.bf16.mxu0 0
      %1862 = vmatpush1.bf16.xpose.msra.mxu0 0
      %1863 = vmatprep.subr.bf16.mxu0 0
      %1864 = vmatpush1.bf16.xpose.msra.mxu0 0
      %1865 = vmatprep.subr.bf16.mxu0 0
      %1866 = vmatpush1.bf16.xpose.msra.mxu0 0
      %1867 = vmatprep.subr.bf16.mxu0 0
      %1868 = vmatpush1.bf16.xpose.msra.mxu0 0
      %1869 = vmatprep.subr.bf16.mxu0 0
      %1870 = vmatpush1.bf16.xpose.msra.mxu0 0
      %1871 = vmatprep.subr.bf16.mxu0 0
      %1872 = vmatpush1.bf16.xpose.msra.mxu0 0
      %1873 = vmatprep.subr.bf16.mxu0 0
      %1874 = vmatpush1.bf16.xpose.msra.mxu0 0
      %1875 = vmatprep.subr.bf16.mxu0 0
      %1876 = vmatpush1.bf16.xpose.msra.mxu0 0
      %1877 = vmatprep.subr.bf16.mxu0 0
      %1878 = vmatpush1.bf16.xpose.msra.mxu0 0
      %1879 = vmatprep.subr.bf16.mxu0 0
      %1880 = vmatpush1.bf16.xpose.msra.mxu0 0
      %1881 = vmatprep.subr.bf16.mxu0 0
      %1882 = vmatpush1.bf16.xpose.msra.mxu0 0
      %1883 = vmatprep.mubr.bf16.mxu0 0
      %1884 = vmatmul.mubr.bf16.gmra.mrb[0].mxu0 %v1846
      %v1885 = vpop.f32.mrb[0].mxu0
      %v1886 = vadd.f32 %v788, %v1885
      %v1887 = vpop.f32.mrb[0].mxu0
      %v1888 = vpop.f32.mrb[0].mxu0
      %v1889 = vpop.f32.mrb[0].mxu0
      %1890 = vdwg.mxu0
      %v1891 = vsel %vm790, %v1886, -inf
      %1892 = vmax.xlane.f32.xlu0 %v1891
      %v1893 = vpop.xlane.xlu0 %1892
      %v1894 = vsub.f32 %v1886, %v1893
      %v1895 = vmul.f32 %v1894, 1.442695
      %v1896 = vpow.pop %v1895
      %v1897 = vsel %vm790, %v1896, 0.0
      %1898 = vadd.xlane.f32.xlu0 %v1897
      %v1899 = vpop.xlane.xlu0 %1898
      %v1900 = vrcp.pop %v1899
      %v1901 = vmul.f32 %v1896, %v1900
      %v1902 = vpack.c.bf16 %v1901, %v1901
      %v1903 = vpack.c.bf16 %v1838, %v1838
      %v1905 = vsel %vm790, %v1902, 0
      %v1908 = vsel %vm853, %v1903, 0
      %1910 = vmatprep.subr.bf16.mxu0 0
      %1911 = vmatpush1.bf16.msra.mxu0 %v1908
      %1912 = vmatprep.subr.bf16.mxu0 0
      %1913 = vmatpush1.bf16.msra.mxu0 0
      %1914 = vmatprep.subr.bf16.mxu0 0
      %1915 = vmatpush1.bf16.msra.mxu0 0
      %1916 = vmatprep.subr.bf16.mxu0 0
      %1917 = vmatpush1.bf16.msra.mxu0 0
      %1918 = vmatprep.subr.bf16.mxu0 0
      %1919 = vmatpush1.bf16.msra.mxu0 0
      %1920 = vmatprep.subr.bf16.mxu0 0
      %1921 = vmatpush1.bf16.msra.mxu0 0
      %1922 = vmatprep.subr.bf16.mxu0 0
      %1923 = vmatpush1.bf16.msra.mxu0 0
      %1924 = vmatprep.subr.bf16.mxu0 0
      %1925 = vmatpush1.bf16.msra.mxu0 0
      %1926 = vmatprep.subr.bf16.mxu0 0
      %1927 = vmatpush1.bf16.msra.mxu0 0
      %1928 = vmatprep.subr.bf16.mxu0 0
      %1929 = vmatpush1.bf16.msra.mxu0 0
      %1930 = vmatprep.subr.bf16.mxu0 0
      %1931 = vmatpush1.bf16.msra.mxu0 0
      %1932 = vmatprep.subr.bf16.mxu0 0
      %1933 = vmatpush1.bf16.msra.mxu0 0
      %1934 = vmatprep.subr.bf16.mxu0 0
      %1935 = vmatpush1.bf16.msra.mxu0 0
      %1936 = vmatprep.subr.bf16.mxu0 0
      %1937 = vmatpush1.bf16.msra.mxu0 0
      %1938 = vmatprep.subr.bf16.mxu0 0
      %1939 = vmatpush1.bf16.msra.mxu0 0
      %1940 = vmatprep.subr.bf16.mxu0 0
      %1941 = vmatpush1.bf16.msra.mxu0 0
      %1942 = vmatprep.mubr.bf16.mxu0 0
      %1943 = vmatmul.mubr.bf16.gmra.mrb[0].mxu0 %v1905
      %v1944 = vpop.f32.mrb[0].mxu0
      %v1945 = vadd.f32 0.0, %v1944
      %v1946 = vpop.f32.mrb[0].mxu0
      %v1947 = vpop.f32.mrb[0].mxu0
      %v1948 = vpop.f32.mrb[0].mxu0
      %1949 = vdwg.mxu0
      %v1950 = vpack.c.bf16 %v1945, %v1945
      %s1951 = scalar_lea.vmem %s8, 12
      %v1952 = vld [vmem:[%s1951] sm:$0xf]
      %v1954 = vsel %vm790, %v1950, 0
      %v1957 = vsel %vm853, %v1952, 0
      %1959 = vmatprep.subr.bf16.mxu0 0
      %1960 = vmatpush1.bf16.msra.mxu0 %v1957
      %1961 = vmatprep.subr.bf16.mxu0 0
      %1962 = vmatpush1.bf16.msra.mxu0 0
      %1963 = vmatprep.subr.bf16.mxu0 0
      %1964 = vmatpush1.bf16.msra.mxu0 0
      %1965 = vmatprep.subr.bf16.mxu0 0
      %1966 = vmatpush1.bf16.msra.mxu0 0
      %1967 = vmatprep.subr.bf16.mxu0 0
      %1968 = vmatpush1.bf16.msra.mxu0 0
      %1969 = vmatprep.subr.bf16.mxu0 0
      %1970 = vmatpush1.bf16.msra.mxu0 0
      %1971 = vmatprep.subr.bf16.mxu0 0
      %1972 = vmatpush1.bf16.msra.mxu0 0
      %1973 = vmatprep.subr.bf16.mxu0 0
      %1974 = vmatpush1.bf16.msra.mxu0 0
      %1975 = vmatprep.subr.bf16.mxu0 0
      %1976 = vmatpush1.bf16.msra.mxu0 0
      %1977 = vmatprep.subr.bf16.mxu0 0
      %1978 = vmatpush1.bf16.msra.mxu0 0
      %1979 = vmatprep.subr.bf16.mxu0 0
      %1980 = vmatpush1.bf16.msra.mxu0 0
      %1981 = vmatprep.subr.bf16.mxu0 0
      %1982 = vmatpush1.bf16.msra.mxu0 0
      %1983 = vmatprep.subr.bf16.mxu0 0
      %1984 = vmatpush1.bf16.msra.mxu0 0
      %1985 = vmatprep.subr.bf16.mxu0 0
      %1986 = vmatpush1.bf16.msra.mxu0 0
      %1987 = vmatprep.subr.bf16.mxu0 0
      %1988 = vmatpush1.bf16.msra.mxu0 0
      %1989 = vmatprep.subr.bf16.mxu0 0
      %1990 = vmatpush1.bf16.msra.mxu0 0
      %1991 = vmatprep.mubr.bf16.mxu0 0
      %1992 = vmatmul.mubr.bf16.gmra.mrb[0].mxu0 %v1954
      %v1993 = vpop.f32.mrb[0].mxu0
      %v1994 = vadd.f32 0.0, %v1993
      %v1995 = vpop.f32.mrb[0].mxu0
      %v1996 = vpop.f32.mrb[0].mxu0
      %v1997 = vpop.f32.mrb[0].mxu0
      %1998 = vdwg.mxu0
      %v1999 = vadd.f32 %v1647, %v1994
      %v2000 = vld [vmem:[%s9] sm:$0x1]
      %v2002 = vlaneseq
      %v2003 = vshrl.u32 %v2002, 7
      %v2004 = vsub.s32 0, %v2003
      %v2005 = vrot.slane %v2000, %v2004
      %v2007 = vadd.f32 %v1999, %v2005
      %v2008 = vadd.f32 %v2007, %v587
      %v2009 = vsel %vm612, %v2008, 0.0
      %2010 = vadd.xlane.f32.xlu0 %v2009
      %v2011 = vpop.xlane.xlu0 %2010
      %v2012 = vrcp.pop 32.0
      %v2013 = vmul.f32 %v2011, %v2012
      %v2014 = vsub.f32 %v2008, %v2013
      %v2015 = vmul.f32 %v2014, %v2014
      %v2016 = vsel %vm612, %v2015, 0.0
      %2017 = vadd.xlane.f32.xlu0 %v2016
      %v2018 = vpop.xlane.xlu0 %2017
      %v2019 = vmul.f32 %v2018, %v2012
      %v2020 = vadd.f32 %v2019, 1e-12
      %v2021 = vrsqrt.pop %v2020
      %v2022 = vmul.f32 %v2014, %v2021
      %v2023 = vld [vmem:[%s10] sm:$0x1]
      %v2025 = vlaneseq
      %v2026 = vshrl.u32 %v2025, 7
      %v2027 = vsub.s32 0, %v2026
      %v2028 = vrot.slane %v2023, %v2027
      %v2030 = vmul.f32 %v2022, %v2028
      %v2031 = vld [vmem:[%s11] sm:$0x1]
      %v2033 = vlaneseq
      %v2034 = vshrl.u32 %v2033, 7
      %v2035 = vsub.s32 0, %v2034
      %v2036 = vrot.slane %v2031, %v2035
      %v2038 = vadd.f32 %v2030, %v2036
      %v2039 = vpack.c.bf16 %v2038, %v2038
      %v2040 = vld [vmem:[%s12] sm:$0xf]
      %v2041 = vld [vmem:[%s12 + $0x4] sm:$0xf]
      %v2042 = vld [vmem:[%s12 + $0x8] sm:$0xf]
      %v2043 = vld [vmem:[%s12 + $0xc] sm:$0xf]
      %v2044 = vld [vmem:[%s13] sm:$0x1]
      %v2046 = vlaneseq
      %v2047 = vshrl.u32 %v2046, 7
      %v2048 = vsub.s32 0, %v2047
      %v2049 = vrot.slane %v2044, %v2048
      %v2055 = vunpack.c.l.b16 %v2040
      %v2056 = vunpack.c.l.b16 %v2041
      %v2057 = vunpack.c.l.b16 %v2042
      %v2058 = vunpack.c.l.b16 %v2043
      %v2059 = vpack.c.b16 %v2056, %v2055
      %v2060 = vpack.c.b16 %v2058, %v2057
      %v2064 = vsel %vm612, %v2039, 0
      %2066 = vmatprep.subr.bf16.mxu0 0
      %2067 = vmatpush1.bf16.msra.mxu0 %v2059
      %2068 = vmatprep.subr.bf16.mxu0 0
      %2069 = vmatpush1.bf16.msra.mxu0 %v2060
      %2070 = vmatprep.subr.bf16.mxu0 0
      %2071 = vmatpush1.bf16.msra.mxu0 0
      %2072 = vmatprep.subr.bf16.mxu0 0
      %2073 = vmatpush1.bf16.msra.mxu0 0
      %2074 = vmatprep.subr.bf16.mxu0 0
      %2075 = vmatpush1.bf16.msra.mxu0 0
      %2076 = vmatprep.subr.bf16.mxu0 0
      %2077 = vmatpush1.bf16.msra.mxu0 0
      %2078 = vmatprep.subr.bf16.mxu0 0
      %2079 = vmatpush1.bf16.msra.mxu0 0
      %2080 = vmatprep.subr.bf16.mxu0 0
      %2081 = vmatpush1.bf16.msra.mxu0 0
      %2082 = vmatprep.subr.bf16.mxu0 0
      %2083 = vmatpush1.bf16.msra.mxu0 0
      %2084 = vmatprep.subr.bf16.mxu0 0
      %2085 = vmatpush1.bf16.msra.mxu0 0
      %2086 = vmatprep.subr.bf16.mxu0 0
      %2087 = vmatpush1.bf16.msra.mxu0 0
      %2088 = vmatprep.subr.bf16.mxu0 0
      %2089 = vmatpush1.bf16.msra.mxu0 0
      %2090 = vmatprep.subr.bf16.mxu0 0
      %2091 = vmatpush1.bf16.msra.mxu0 0
      %2092 = vmatprep.subr.bf16.mxu0 0
      %2093 = vmatpush1.bf16.msra.mxu0 0
      %2094 = vmatprep.subr.bf16.mxu0 0
      %2095 = vmatpush1.bf16.msra.mxu0 0
      %2096 = vmatprep.subr.bf16.mxu0 0
      %2097 = vmatpush1.bf16.msra.mxu0 0
      %2098 = vmatprep.mubr.bf16.mxu0 0
      %2099 = vmatmul.mubr.bf16.gmra.mrb[0].mxu0 %v2064
      %v2100 = vpop.f32.mrb[0].mxu0
      %v2101 = vadd.f32 %v2049, %v2100
      %v2102 = vpop.f32.mrb[0].mxu0
      %v2103 = vpop.f32.mrb[0].mxu0
      %v2104 = vpop.f32.mrb[0].mxu0
      %2105 = vdwg.mxu0
      %v2106 = vmul.f32 %v2101, 0.5
      %v2107 = vmul.f32 %v2101, 0.044715
      %v2108 = vmul.f32 %v2107, %v2101
      %v2109 = vmul.f32 %v2108, %v2101
      %v2110 = vadd.f32 %v2101, %v2109
      %v2111 = vmul.f32 %v2110, 0.7978846
      %v2112 = vtanh.pop %v2111
      %v2113 = vadd.f32 %v2112, 1.0
      %v2114 = vmul.f32 %v2106, %v2113
      %v2115 = vpack.c.bf16 %v2114, %v2114
      %v2116 = vld [vmem:[%s14] sm:$0xf]
      %v2117 = vld [vmem:[%s14 + $0x4] sm:$0xf]
      %v2118 = vld [vmem:[%s14 + $0x8] sm:$0xf]
      %v2119 = vld [vmem:[%s14 + $0xc] sm:$0xf]
      %v2120 = vld [vmem:[%s14 + $0x10] sm:$0xf]
      %v2121 = vld [vmem:[%s14 + $0x14] sm:$0xf]
      %v2122 = vld [vmem:[%s14 + $0x18] sm:$0xf]
      %v2123 = vld [vmem:[%s14 + $0x1c] sm:$0xf]
      %v2124 = vld [vmem:[%s15] sm:$0x1]
      %v2126 = vlaneseq
      %v2127 = vshrl.u32 %v2126, 7
      %v2128 = vsub.s32 0, %v2127
      %v2129 = vrot.slane %v2124, %v2128
      %v2139 = vunpack.c.l.b16 %v2116
      %v2140 = vunpack.c.l.b16 %v2117
      %v2141 = vunpack.c.l.b16 %v2118
      %v2142 = vunpack.c.l.b16 %v2119
      %v2143 = vunpack.c.l.b16 %v2120
      %v2144 = vunpack.c.l.b16 %v2121
      %v2145 = vunpack.c.l.b16 %v2122
      %v2146 = vunpack.c.l.b16 %v2123
      %v2147 = vpack.c.b16 %v2140, %v2139
      %v2148 = vpack.c.b16 %v2142, %v2141
      %v2149 = vpack.c.b16 %v2144, %v2143
      %v2150 = vpack.c.b16 %v2146, %v2145
      %vm2155 = vcmask 523264
      %v2157 = vsel %vm2155, %v2115, 0
      %2159 = vmatprep.subr.bf16.mxu0 0
      %2160 = vmatpush1.bf16.msra.mxu0 %v2147
      %2161 = vmatprep.subr.bf16.mxu0 0
      %2162 = vmatpush1.bf16.msra.mxu0 %v2148
      %2163 = vmatprep.subr.bf16.mxu0 0
      %2164 = vmatpush1.bf16.msra.mxu0 %v2149
      %2165 = vmatprep.subr.bf16.mxu0 0
      %2166 = vmatpush1.bf16.msra.mxu0 %v2150
      %2167 = vmatprep.subr.bf16.mxu0 0
      %2168 = vmatpush1.bf16.msra.mxu0 0
      %2169 = vmatprep.subr.bf16.mxu0 0
      %2170 = vmatpush1.bf16.msra.mxu0 0
      %2171 = vmatprep.subr.bf16.mxu0 0
      %2172 = vmatpush1.bf16.msra.mxu0 0
      %2173 = vmatprep.subr.bf16.mxu0 0
      %2174 = vmatpush1.bf16.msra.mxu0 0
      %2175 = vmatprep.subr.bf16.mxu0 0
      %2176 = vmatpush1.bf16.msra.mxu0 0
      %2177 = vmatprep.subr.bf16.mxu0 0
      %2178 = vmatpush1.bf16.msra.mxu0 0
      %2179 = vmatprep.subr.bf16.mxu0 0
      %2180 = vmatpush1.bf16.msra.mxu0 0
      %2181 = vmatprep.subr.bf16.mxu0 0
      %2182 = vmatpush1.bf16.msra.mxu0 0
      %2183 = vmatprep.subr.bf16.mxu0 0
      %2184 = vmatpush1.bf16.msra.mxu0 0
      %2185 = vmatprep.subr.bf16.mxu0 0
      %2186 = vmatpush1.bf16.msra.mxu0 0
      %2187 = vmatprep.subr.bf16.mxu0 0
      %2188 = vmatpush1.bf16.msra.mxu0 0
      %2189 = vmatprep.subr.bf16.mxu0 0
      %2190 = vmatpush1.bf16.msra.mxu0 0
      %2191 = vmatprep.mubr.bf16.mxu0 0
      %2192 = vmatmul.mubr.bf16.gmra.mrb[0].mxu0 %v2157
      %v2193 = vpop.f32.mrb[0].mxu0
      %v2194 = vadd.f32 %v2129, %v2193
      %v2195 = vpop.f32.mrb[0].mxu0
      %v2196 = vpop.f32.mrb[0].mxu0
      %v2197 = vpop.f32.mrb[0].mxu0
      %2198 = vdwg.mxu0
      %v2199 = vadd.f32 %v2194, %v2038
      %v2200 = vsel %vm612, %v2199, 0.0
      %2201 = vadd.xlane.f32.xlu0 %v2200
      %v2202 = vpop.xlane.xlu0 %2201
      %v2203 = vmul.f32 %v2202, %v2012
      %v2204 = vsub.f32 %v2199, %v2203
      %v2205 = vmul.f32 %v2204, %v2204
      %v2206 = vsel %vm612, %v2205, 0.0
      %2207 = vadd.xlane.f32.xlu0 %v2206
      %v2208 = vpop.xlane.xlu0 %2207
      %v2209 = vmul.f32 %v2208, %v2012
      %v2210 = vadd.f32 %v2209, 1e-12
      %v2211 = vrsqrt.pop %v2210
      %v2212 = vmul.f32 %v2204, %v2211
      %v2213 = vld [vmem:[%s16] sm:$0x1]
      %v2215 = vlaneseq
      %v2216 = vshrl.u32 %v2215, 7
      %v2217 = vsub.s32 0, %v2216
      %v2218 = vrot.slane %v2213, %v2217
      %v2220 = vmul.f32 %v2212, %v2218
      %v2221 = vld [vmem:[%s17] sm:$0x1]
      %v2223 = vlaneseq
      %v2224 = vshrl.u32 %v2223, 7
      %v2225 = vsub.s32 0, %v2224
      %v2226 = vrot.slane %v2221, %v2225
      %v2228 = vadd.f32 %v2220, %v2226
      %v2229 = vpack.c.bf16 %v2228, %v2228
      %vm2230 = vcmask 257024
      %2231 = vst.msk [vmem:[%s584] sm:$0xf] %vm2230, %v2229
      %p2232 = scmp.lt.s32.totalorder %s29, 1
      %s2233 = scalar_select %p2232, %s29, 1
      %s2234 = smul.addr %s2233, 4
      %s2235 = scalar_lea.vmem %s18, %s2234
      // Predicated region
      $region93: #{bert_class_forward.5} parent=91 // pred_check
        %p2236 = pneg %p435
      $region94: #{bert_class_forward.5} parent=91 // pred_check_branch
        %2238 = sbr.rel (%p2236) target = $region96
      $region95: #{bert_class_forward.5} parent=91 // pred_region
        _
      $region96: #{bert_class_forward.5} parent=91 // pred_fallthru
        _
    $region92: #{bert_class_forward.5} parent=5 // pred_fallthru
      _
    %p2239 = scmp.le.s32.totalorder 2, %s24
    // Predicated region
    $region97: #{bert_class_forward.5} parent=5 // pred_check
      %p2240 = pneg %p2239
    $region98: #{bert_class_forward.5} parent=5 // pred_check_branch
      %2242 = sbr.rel (%p2240) target = $region100
    $region99: #{bert_class_forward.5} parent=5 // pred_region
      %s2243 = ssub.s32 %s24, 2
      // Predicated region
      $region101: #{bert_class_forward.5} parent=99 // pred_check
        %p2244 = pneg %p441
      $region102: #{bert_class_forward.5} parent=99 // pred_check_branch
        %2246 = sbr.rel (%p2244) target = $region104
      $region103: #{bert_class_forward.5} parent=99 // pred_region
        %p2247 = scmp.lt.s32.totalorder %s30, 1
        %s2248 = scalar_select %p2247, %s30, 1
        %s2249 = smul.addr %s2248, 4
        %s2250 = scalar_lea.vmem %s18, %s2249
      $region104: #{bert_class_forward.5} parent=99 // pred_fallthru
        _
    $region100: #{bert_class_forward.5} parent=5 // pred_fallthru
      _
  $region6: #{bert_class_forward.5} parent=0 // loop_footer
    %s28 = sadd.s32 1, %s24
  $region7: #{bert_class_forward.5} parent=0 // loop_footer_branch
    %23 = sbr.rel target = $region3
  $region8: #{bert_class_forward.5} parent=0 // loop_exit
    _

</llo_original>
